<compile_context>
chip_gen: v7x
topology: tpu7x:2x2x1
jax: 0.10.0
libtpu: 0.0.40
codegen_flags: <defaults>
</compile_context>

<pallas_src>
import math

import jax
import jax.numpy as jnp
from jax.experimental import pallas as pl
from jax.experimental.pallas import tpu as pltpu

HIDDEN = 1024   # fixed by the module definition
LANE = 128
SUBLANE = 8


def _round_up(x, m):
    return -(-x // m) * m


def qnet_kernel(x_ref, w1_ref, b1_ref, w2_ref, b2_ref, w3_ref, b3_ref, o_ref):
    """Fused 3-layer MLP forward for one batch tile; weights VMEM-resident."""
    x = x_ref[...]                                   # (tb, total_input_dim) bf16

    # Layer 1
    h1 = jnp.dot(x, w1_ref[...], preferred_element_type=jnp.float32) + b1_ref[...]
    h1 = jnp.maximum(h1, 0.0).astype(jnp.bfloat16)

    # Layer 2
    h2 = jnp.dot(h1, w2_ref[...], preferred_element_type=jnp.float32) + b2_ref[...]
    h2 = jnp.maximum(h2, 0.0).astype(jnp.bfloat16)

    # Output layer (lane-padded to a multiple of 128 columns, stored bf16)
    q = jnp.dot(h2, w3_ref[...], preferred_element_type=jnp.float32) + b3_ref[...]
    o_ref[...] = q.astype(o_ref.dtype)


def qnetwork_forward(input_features, history_features, params, num_actions,
                     *, max_batch_tile=512, vmem_limit_bytes=None):
    """Wrapper: concat/pad/cast in JAX, hot path in Pallas, slice+upcast out."""
    w1, b1, w2, b2, w3p, b3p = params
    B = input_features.shape[0]
    total_input_dim = w1.shape[0]
    n_pad = w3p.shape[1]

    # Tiny concat (~32 columns) done once in the wrapper; bf16 halves DMA bytes.
    x = jnp.concatenate([input_features, history_features], axis=1)
    x = x.astype(jnp.bfloat16)
    assert x.shape[1] == total_input_dim

    # Batch tile: multiple of 8 sublanes; 512 default fits v5e's 16 MiB scoped
    # VMEM with single-buffered weights. Raise + pass vmem_limit_bytes on
    # v6e/v7x for very large batches.
    tb = max_batch_tile if B >= max_batch_tile else _round_up(max(B, 1), SUBLANE)
    b_pad = _round_up(B, tb)
    num_tiles = b_pad // tb
    if b_pad != B:
        x = jnp.pad(x, ((0, b_pad - B), (0, 0)))

    batch_row = lambda i: (i, 0)   # activation / output tiles walk the batch

    def resident_spec(shape):
        # Constant index_map -> fetched once, kept VMEM-resident; single buffer
        # (no point double-buffering something that never changes).
        return pl.BlockSpec(shape, lambda i: (0, 0), pipeline_mode=pl.Buffered(1))

    flops = 2 * b_pad * (total_input_dim * HIDDEN + HIDDEN * HIDDEN + HIDDEN * n_pad)
    bytes_accessed = (
        x.size * x.dtype.itemsize
        + sum(int(p.size) * p.dtype.itemsize for p in params)
        + b_pad * n_pad * 2   # bf16 padded output
    )

    out_padded = pl.pallas_call(
        qnet_kernel,
        out_shape=jax.ShapeDtypeStruct((b_pad, n_pad), jnp.bfloat16),
        grid=(num_tiles,),
        in_specs=[
            pl.BlockSpec((tb, total_input_dim), batch_row),
            resident_spec((total_input_dim, HIDDEN)),
            resident_spec((1, HIDDEN)),
            resident_spec((HIDDEN, HIDDEN)),
            resident_spec((1, HIDDEN)),
            resident_spec((HIDDEN, n_pad)),
            resident_spec((1, n_pad)),
        ],
        out_specs=pl.BlockSpec((tb, n_pad), batch_row),
        compiler_params=pltpu.CompilerParams(
            dimension_semantics=("parallel",),
            vmem_limit_bytes=vmem_limit_bytes),
        cost_estimate=pl.CostEstimate(
            flops=flops, transcendentals=0, bytes_accessed=bytes_accessed),
    )(x, w1, b1, w2, b2, w3p, b3p)

    return out_padded[:B, :num_actions].astype(jnp.float32)


def xavier_uniform(key, fan_in, fan_out, dtype=jnp.float32):
    """Matches torch.nn.init.xavier_uniform_ (gain=1); returned as (in, out)."""
    bound = math.sqrt(6.0 / (fan_in + fan_out))
    return jax.random.uniform(key, (fan_in, fan_out), dtype=dtype,
                              minval=-bound, maxval=bound)


def init_params(key, input_dim, history_dim, num_actions, weight_dtype=jnp.bfloat16):
    """Xavier-uniform weights, zero biases. Weights stored bf16; output layer
    lane-padded to a multiple of 128 columns."""
    total_input_dim = input_dim + history_dim
    k1, k2, k3 = jax.random.split(key, 3)

    w1 = xavier_uniform(k1, total_input_dim, HIDDEN)
    w2 = xavier_uniform(k2, HIDDEN, HIDDEN)
    w3 = xavier_uniform(k3, HIDDEN, num_actions)

    n_pad = _round_up(max(num_actions, LANE), LANE)
    w3p = jnp.zeros((HIDDEN, n_pad), jnp.float32).at[:, :num_actions].set(w3)

    params = (
        w1.astype(weight_dtype),                 # w1   (total_input_dim, H)
        jnp.zeros((1, HIDDEN), jnp.float32),     # b1
        w2.astype(weight_dtype),                 # w2   (H, H)
        jnp.zeros((1, HIDDEN), jnp.float32),     # b2
        w3p.astype(weight_dtype),                # w3   (H, n_pad)
        jnp.zeros((1, n_pad), jnp.float32),      # b3   (1, n_pad)
    )
    return params


def reference_forward(input_features, history_features, params, num_actions):
    """Pure-JAX reference using the same bf16-stored params / bf16 inputs in f32 math."""
    w1, b1, w2, b2, w3p, b3p = params
    x = jnp.concatenate([input_features, history_features], axis=1)
    x = x.astype(jnp.bfloat16).astype(jnp.float32)
    h1 = jnp.maximum(x @ w1.astype(jnp.float32) + b1, 0.0)
    h2 = jnp.maximum(h1 @ w2.astype(jnp.float32) + b2, 0.0)
    q = h2 @ w3p.astype(jnp.float32) + b3p
    return q[:, :num_actions]


if __name__ == "__main__":
    # Small shapes consistent with forward(): (B, input_dim), (B, history_dim)
    batch = 2
    input_dim = 16
    history_dim = 16
    num_actions = 8

    key = jax.random.PRNGKey(0)
    k_in, k_hist, k_params = jax.random.split(key, 3)

    input_features = jax.random.normal(k_in, (batch, input_dim), jnp.float32)
    history_features = jax.random.normal(k_hist, (batch, history_dim), jnp.float32)
    params = init_params(k_params, input_dim, history_dim, num_actions)

    q_values = qnetwork_forward(input_features, history_features, params, num_actions)
    q_values = jax.block_until_ready(q_values)

    # sanity check against a pure-JAX reference (bf16 weights/activations ->
    # loose tolerance; MXU accumulates in f32 so the error stays small)
    ref = reference_forward(input_features, history_features, params, num_actions)
    assert q_values.shape == (batch, num_actions)
    assert jnp.allclose(q_values, ref, atol=3e-2, rtol=3e-2)

    print("KERNEL_OK")
</pallas_src>

<mosaic_0001>
module attributes {stable_mosaic.version = 11 : i64} {
  func.func @qnet_kernel(%arg0: i32, %arg1: memref<8x32xbf16, #tpu.memory_space<vmem>>, %arg2: memref<32x1024xbf16, #tpu.memory_space<vmem>>, %arg3: memref<1x1024xf32, #tpu.memory_space<vmem>>, %arg4: memref<1024x1024xbf16, #tpu.memory_space<vmem>>, %arg5: memref<1x1024xf32, #tpu.memory_space<vmem>>, %arg6: memref<1024x128xbf16, #tpu.memory_space<vmem>>, %arg7: memref<1x128xf32, #tpu.memory_space<vmem>>, %arg8: memref<8x128xbf16, #tpu.memory_space<vmem>>) attributes {dimension_semantics = [#tpu.dimension_semantics<parallel>], iteration_bounds = array<i64: 1>, scalar_prefetch = 0 : i64, scratch_operands = 0 : i64, tpu.core_type = #tpu.core_type<tc>, window_params = [{transform_indices = @transform_0, window_bounds = array<i64: 8, 32>}, {pipeline_mode = #tpu.pipeline_mode<synchronous>, transform_indices = @transform_1, window_bounds = array<i64: 32, 1024>}, {pipeline_mode = #tpu.pipeline_mode<synchronous>, transform_indices = @transform_2, window_bounds = array<i64: 1, 1024>}, {pipeline_mode = #tpu.pipeline_mode<synchronous>, transform_indices = @transform_3, window_bounds = array<i64: 1024, 1024>}, {pipeline_mode = #tpu.pipeline_mode<synchronous>, transform_indices = @transform_4, window_bounds = array<i64: 1, 1024>}, {pipeline_mode = #tpu.pipeline_mode<synchronous>, transform_indices = @transform_5, window_bounds = array<i64: 1024, 128>}, {pipeline_mode = #tpu.pipeline_mode<synchronous>, transform_indices = @transform_6, window_bounds = array<i64: 1, 128>}, {transform_indices = @transform_7, window_bounds = array<i64: 8, 128>}]} {
    %c0 = arith.constant 0 : index
    %c0_0 = arith.constant 0 : index
    %0 = vector.load %arg1[%c0, %c0_0] : memref<8x32xbf16, #tpu.memory_space<vmem>>, vector<8x32xbf16>
    %c0_1 = arith.constant 0 : index
    %c0_2 = arith.constant 0 : index
    %1 = vector.load %arg2[%c0_1, %c0_2] : memref<32x1024xbf16, #tpu.memory_space<vmem>>, vector<32x1024xbf16>
    %cst = arith.constant dense<0.000000e+00> : vector<8x1024xf32>
    %2 = tpu.matmul %0, %1, %cst {dimension_numbers = #tpu.dot_dimension_numbers<[1], [0], [0], [1], [0, 0, 1, 1], [], []>} : vector<8x32xbf16>, vector<32x1024xbf16>, vector<8x1024xf32> -> vector<8x1024xf32>
    %c0_3 = arith.constant 0 : index
    %c0_4 = arith.constant 0 : index
    %3 = vector.load %arg3[%c0_3, %c0_4] : memref<1x1024xf32, #tpu.memory_space<vmem>>, vector<1x1024xf32>
    %4 = vector.broadcast %3 : vector<1x1024xf32> to vector<8x1024xf32>
    %5 = arith.addf %2, %4 : vector<8x1024xf32>
    %cst_5 = arith.constant 0.000000e+00 : f32
    %6 = vector.broadcast %cst_5 : f32 to vector<8x1024xf32>
    %7 = arith.maximumf %5, %6 : vector<8x1024xf32>
    %8 = arith.truncf %7 : vector<8x1024xf32> to vector<8x1024xbf16>
    %c0_6 = arith.constant 0 : index
    %c0_7 = arith.constant 0 : index
    %9 = vector.load %arg4[%c0_6, %c0_7] : memref<1024x1024xbf16, #tpu.memory_space<vmem>>, vector<1024x1024xbf16>
    %cst_8 = arith.constant dense<0.000000e+00> : vector<8x1024xf32>
    %10 = tpu.matmul %8, %9, %cst_8 {dimension_numbers = #tpu.dot_dimension_numbers<[1], [0], [0], [1], [0, 0, 1, 1], [], []>} : vector<8x1024xbf16>, vector<1024x1024xbf16>, vector<8x1024xf32> -> vector<8x1024xf32>
    %c0_9 = arith.constant 0 : index
    %c0_10 = arith.constant 0 : index
    %11 = vector.load %arg5[%c0_9, %c0_10] : memref<1x1024xf32, #tpu.memory_space<vmem>>, vector<1x1024xf32>
    %12 = vector.broadcast %11 : vector<1x1024xf32> to vector<8x1024xf32>
    %13 = arith.addf %10, %12 : vector<8x1024xf32>
    %cst_11 = arith.constant 0.000000e+00 : f32
    %14 = vector.broadcast %cst_11 : f32 to vector<8x1024xf32>
    %15 = arith.maximumf %13, %14 : vector<8x1024xf32>
    %16 = arith.truncf %15 : vector<8x1024xf32> to vector<8x1024xbf16>
    %c0_12 = arith.constant 0 : index
    %c0_13 = arith.constant 0 : index
    %17 = vector.load %arg6[%c0_12, %c0_13] : memref<1024x128xbf16, #tpu.memory_space<vmem>>, vector<1024x128xbf16>
    %cst_14 = arith.constant dense<0.000000e+00> : vector<8x128xf32>
    %18 = tpu.matmul %16, %17, %cst_14 {dimension_numbers = #tpu.dot_dimension_numbers<[1], [0], [0], [1], [0, 0, 1, 1], [], []>} : vector<8x1024xbf16>, vector<1024x128xbf16>, vector<8x128xf32> -> vector<8x128xf32>
    %c0_15 = arith.constant 0 : index
    %c0_16 = arith.constant 0 : index
    %19 = vector.load %arg7[%c0_15, %c0_16] : memref<1x128xf32, #tpu.memory_space<vmem>>, vector<1x128xf32>
    %20 = vector.broadcast %19 : vector<1x128xf32> to vector<8x128xf32>
    %21 = arith.addf %18, %20 : vector<8x128xf32>
    %22 = arith.truncf %21 : vector<8x128xf32> to vector<8x128xbf16>
    %c0_17 = arith.constant 0 : index
    %c0_18 = arith.constant 0 : index
    %23 = vector.load %arg8[%c0_17, %c0_18] : memref<8x128xbf16, #tpu.memory_space<vmem>>, vector<8x128xbf16>
    tpu.vector_store %arg8[%c0_17, %c0_18], %22 {strides = array<i32>} : memref<8x128xbf16, #tpu.memory_space<vmem>>, vector<8x128xbf16>,
    return
  }
  func.func @transform_0(%arg0: i32) -> (i32, i32) {
    %c0_i32 = arith.constant 0 : i32
    %c0_i32_0 = arith.constant 0 : i32
    return %arg0, %c0_i32 : i32, i32
  }
  func.func @transform_1(%arg0: i32) -> (i32, i32) {
    %c0_i32 = arith.constant 0 : i32
    %c0_i32_0 = arith.constant 0 : i32
    %c0_i32_1 = arith.constant 0 : i32
    return %c0_i32, %c0_i32_0 : i32, i32
  }
  func.func @transform_2(%arg0: i32) -> (i32, i32) {
    %c0_i32 = arith.constant 0 : i32
    %c0_i32_0 = arith.constant 0 : i32
    %c0_i32_1 = arith.constant 0 : i32
    return %c0_i32, %c0_i32_0 : i32, i32
  }
  func.func @transform_3(%arg0: i32) -> (i32, i32) {
    %c0_i32 = arith.constant 0 : i32
    %c0_i32_0 = arith.constant 0 : i32
    %c0_i32_1 = arith.constant 0 : i32
    return %c0_i32, %c0_i32_0 : i32, i32
  }
  func.func @transform_4(%arg0: i32) -> (i32, i32) {
    %c0_i32 = arith.constant 0 : i32
    %c0_i32_0 = arith.constant 0 : i32
    %c0_i32_1 = arith.constant 0 : i32
    return %c0_i32, %c0_i32_0 : i32, i32
  }
  func.func @transform_5(%arg0: i32) -> (i32, i32) {
    %c0_i32 = arith.constant 0 : i32
    %c0_i32_0 = arith.constant 0 : i32
    %c0_i32_1 = arith.constant 0 : i32
    return %c0_i32, %c0_i32_0 : i32, i32
  }
  func.func @transform_6(%arg0: i32) -> (i32, i32) {
    %c0_i32 = arith.constant 0 : i32
    %c0_i32_0 = arith.constant 0 : i32
    %c0_i32_1 = arith.constant 0 : i32
    return %c0_i32, %c0_i32_0 : i32, i32
  }
  func.func @transform_7(%arg0: i32) -> (i32, i32) {
    %c0_i32 = arith.constant 0 : i32
    %c0_i32_0 = arith.constant 0 : i32
    return %arg0, %c0_i32 : i32, i32
  }
}

</mosaic_0001>

<llo_original>
// kernel: tpu_custom_call.1
$region0: #{tpu_custom_call.1}
  #allocation0 [shape = 'u32[]', space=smem, size = 0x4, offset = 0x4, fixed_abs, tag = 'smem constant byte address 0x4 - core index']
  #allocation1 [shape = 'u32[144,128]{1,0:T(1,128)}', space=vmem, size = 0x12000, scoped, tag = 'internal scratch']
  %s0 = inlined_call_operand.hbm [shape: bf16[8,32], index: 0, kind: input, shape index: {}]
  %s1 = inlined_call_operand.hbm [shape: bf16[32,1024], index: 1, kind: input, shape index: {}]
  %s2 = inlined_call_operand.hbm [shape: f32[1,1024], index: 2, kind: input, shape index: {}]
  %s3 = inlined_call_operand.hbm [shape: bf16[1024,1024], index: 3, kind: input, shape index: {}]
  %s4 = inlined_call_operand.hbm [shape: f32[1,1024], index: 4, kind: input, shape index: {}]
  %s5 = inlined_call_operand.hbm [shape: bf16[1024,128], index: 5, kind: input, shape index: {}]
  %s6 = inlined_call_operand.hbm [shape: f32[1,128], index: 6, kind: input, shape index: {}]
  %s7 = inlined_call_operand.hbm [shape: bf16[8,128], index: 7, kind: output, shape index: {}]
  %s8 = sld [smem:[#allocation0]]
  $region66: #{tpu_custom_call.1} parent=0
    _
  %s10 = ssub.s32 1, %s8
  %s11 = scalar_select 0, %s10, %s8
  $region1: #{tpu_custom_call.1} parent=0
    #allocation2 [shape = 'u8[2048]{0}', space=vmem, size = 0x800, scoped, tag = 'input window, operand 0, single buffered']
    #allocation3 [shape = 's32[1]{0}', space=sflag, size = 0x4, scoped, tag = 'scoped memory for tpu_custom_call.1']
    #allocation4 [shape = 's32[1]{0}', space=sflag, size = 0x4, scoped, tag = 'scoped memory for tpu_custom_call.1']
    #allocation5 [shape = 'u8[65536]{0}', space=vmem, size = 0x10000, scoped, tag = 'input window, operand 1, single buffered']
    #allocation6 [shape = 's32[1]{0}', space=sflag, size = 0x4, scoped, tag = 'scoped memory for tpu_custom_call.1']
    #allocation7 [shape = 'u8[4096]{0}', space=vmem, size = 0x1000, scoped, tag = 'input window, operand 2, single buffered']
    #allocation8 [shape = 'u8[2097152]{0}', space=vmem, size = 0x200000, scoped, tag = 'input window, operand 3, single buffered']
    #allocation9 [shape = 's32[1]{0}', space=sflag, size = 0x4, scoped, tag = 'scoped memory for tpu_custom_call.1']
    #allocation10 [shape = 'u8[4096]{0}', space=vmem, size = 0x1000, scoped, tag = 'input window, operand 4, single buffered']
    #allocation11 [shape = 'u8[262144]{0}', space=vmem, size = 0x40000, scoped, tag = 'input window, operand 5, single buffered']
    #allocation12 [shape = 's32[1]{0}', space=sflag, size = 0x4, scoped, tag = 'scoped memory for tpu_custom_call.1']
    #allocation13 [shape = 'u8[512]{0}', space=vmem, size = 0x400, scoped, tag = 'input window, operand 6, single buffered']
    #allocation14 [shape = 'u8[2048]{0}', space=vmem, size = 0x800, scoped, tag = 'output window, operand 0, single buffered']
    %12 = vsyncpa [#allocation3], 0
    %13 = vsyncpa [#allocation6], 0
    %14 = vsyncpa [#allocation9], 0
    %15 = vsyncpa [#allocation12], 0
    %16 = vsyncpa [#allocation4], 0
    // Predicated region
    $region2: #{tpu_custom_call.1} parent=1 // pred_check
      _
    $region3: #{tpu_custom_call.1} parent=1 // pred_check_branch
      %18 = sbr.rel (0) target = $region5
    $region4: #{tpu_custom_call.1} parent=1 // pred_region
      %s20 = ssub.s32 64, 64
      %21 = vsyncadd [#allocation3], %s20
      %s23 = sshll.u32 [#allocation2], 4
      %s24 = int_to_ptr.vmem [resolvable:$true] %s23
      %26 = dma.hbm_to_vmem [thread:$0]  %s0, 64, %s24, [#allocation3]
    $region5: #{tpu_custom_call.1} parent=1 // pred_fallthru
      _
    // Predicated region
    $region6: #{tpu_custom_call.1} parent=1 // pred_check
      _
    $region7: #{tpu_custom_call.1} parent=1 // pred_check_branch
      %28 = sbr.rel (0) target = $region9
    $region8: #{tpu_custom_call.1} parent=1 // pred_region
      %s30 = ssub.s32 2048, 2048
      %31 = vsyncadd [#allocation6], %s30
      %s32 = sshll.u32 [#allocation5], 4
      %s33 = int_to_ptr.vmem [resolvable:$true] %s32
      %38 = dma.hbm_to_vmem [thread:$0]  %s1, 2048, %s33, [#allocation6], 512, 512, 32
    $region9: #{tpu_custom_call.1} parent=1 // pred_fallthru
      _
    // Predicated region
    $region10: #{tpu_custom_call.1} parent=1 // pred_check
      _
    $region11: #{tpu_custom_call.1} parent=1 // pred_check_branch
      %40 = sbr.rel (0) target = $region13
    $region12: #{tpu_custom_call.1} parent=1 // pred_region
      %s42 = ssub.s32 128, 128
      %43 = vsyncadd [#allocation6], %s42
      %s45 = sshll.u32 [#allocation7], 4
      %s46 = int_to_ptr.vmem [resolvable:$true] %s45
      %48 = dma.hbm_to_vmem [thread:$0]  %s2, 128, %s46, [#allocation6]
    $region13: #{tpu_custom_call.1} parent=1 // pred_fallthru
      _
    // Predicated region
    $region14: #{tpu_custom_call.1} parent=1 // pred_check
      _
    $region15: #{tpu_custom_call.1} parent=1 // pred_check_branch
      %50 = sbr.rel (0) target = $region17
    $region16: #{tpu_custom_call.1} parent=1 // pred_region
      %s52 = ssub.s32 65536, 65536
      %53 = vsyncadd [#allocation9], %s52
      %s54 = sshll.u32 [#allocation8], 4
      %s55 = int_to_ptr.vmem [resolvable:$true] %s54
      %60 = dma.hbm_to_vmem [thread:$0]  %s3, 65536, %s55, [#allocation9], 512, 512, 32
    $region17: #{tpu_custom_call.1} parent=1 // pred_fallthru
      _
    // Predicated region
    $region18: #{tpu_custom_call.1} parent=1 // pred_check
      _
    $region19: #{tpu_custom_call.1} parent=1 // pred_check_branch
      %62 = sbr.rel (0) target = $region21
    $region20: #{tpu_custom_call.1} parent=1 // pred_region
      %s64 = ssub.s32 128, 128
      %65 = vsyncadd [#allocation9], %s64
      %s67 = sshll.u32 [#allocation10], 4
      %s68 = int_to_ptr.vmem [resolvable:$true] %s67
      %70 = dma.hbm_to_vmem [thread:$0]  %s4, 128, %s68, [#allocation9]
    $region21: #{tpu_custom_call.1} parent=1 // pred_fallthru
      _
    // Predicated region
    $region22: #{tpu_custom_call.1} parent=1 // pred_check
      _
    $region23: #{tpu_custom_call.1} parent=1 // pred_check_branch
      %72 = sbr.rel (0) target = $region25
    $region24: #{tpu_custom_call.1} parent=1 // pred_region
      %s74 = ssub.s32 8192, 8192
      %75 = vsyncadd [#allocation12], %s74
      %s76 = sshll.u32 [#allocation11], 4
      %s77 = int_to_ptr.vmem [resolvable:$true] %s76
      %82 = dma.hbm_to_vmem [thread:$0]  %s5, 8192, %s77, [#allocation12], 64, 64, 4
    $region25: #{tpu_custom_call.1} parent=1 // pred_fallthru
      _
    // Predicated region
    $region26: #{tpu_custom_call.1} parent=1 // pred_check
      _
    $region27: #{tpu_custom_call.1} parent=1 // pred_check_branch
      %84 = sbr.rel (0) target = $region29
    $region28: #{tpu_custom_call.1} parent=1 // pred_region
      %s86 = ssub.s32 16, 16
      %87 = vsyncadd [#allocation12], %s86
      %s89 = sshll.u32 [#allocation13], 4
      %s90 = int_to_ptr.vmem [resolvable:$true] %s89
      %92 = dma.hbm_to_vmem [thread:$0]  %s6, 16, %s90, [#allocation12]
    $region29: #{tpu_custom_call.1} parent=1 // pred_fallthru
      _
    // Predicated region
    $region30: #{tpu_custom_call.1} parent=1 // pred_check
      _
    $region31: #{tpu_custom_call.1} parent=1 // pred_check_branch
      %94 = sbr.rel (0) target = $region33
    $region32: #{tpu_custom_call.1} parent=1 // pred_region
      %95 = dma.done [#allocation3], 64
    $region33: #{tpu_custom_call.1} parent=1 // pred_fallthru
      _
    // Predicated region
    $region34: #{tpu_custom_call.1} parent=1 // pred_check
      _
    $region35: #{tpu_custom_call.1} parent=1 // pred_check_branch
      %97 = sbr.rel (0) target = $region37
    $region36: #{tpu_custom_call.1} parent=1 // pred_region
      %98 = dma.done [#allocation6], 2048
    $region37: #{tpu_custom_call.1} parent=1 // pred_fallthru
      _
    // Predicated region
    $region38: #{tpu_custom_call.1} parent=1 // pred_check
      _
    $region39: #{tpu_custom_call.1} parent=1 // pred_check_branch
      %100 = sbr.rel (0) target = $region41
    $region40: #{tpu_custom_call.1} parent=1 // pred_region
      %101 = dma.done [#allocation6], 128
    $region41: #{tpu_custom_call.1} parent=1 // pred_fallthru
      _
    // Predicated region
    $region42: #{tpu_custom_call.1} parent=1 // pred_check
      _
    $region43: #{tpu_custom_call.1} parent=1 // pred_check_branch
      %103 = sbr.rel (0) target = $region45
    $region44: #{tpu_custom_call.1} parent=1 // pred_region
      %104 = dma.done [#allocation9], 65536
    $region45: #{tpu_custom_call.1} parent=1 // pred_fallthru
      _
    // Predicated region
    $region46: #{tpu_custom_call.1} parent=1 // pred_check
      _
    $region47: #{tpu_custom_call.1} parent=1 // pred_check_branch
      %106 = sbr.rel (0) target = $region49
    $region48: #{tpu_custom_call.1} parent=1 // pred_region
      %107 = dma.done [#allocation9], 128
    $region49: #{tpu_custom_call.1} parent=1 // pred_fallthru
      _
    // Predicated region
    $region50: #{tpu_custom_call.1} parent=1 // pred_check
      _
    $region51: #{tpu_custom_call.1} parent=1 // pred_check_branch
      %109 = sbr.rel (0) target = $region53
    $region52: #{tpu_custom_call.1} parent=1 // pred_region
      %110 = dma.done [#allocation12], 8192
    $region53: #{tpu_custom_call.1} parent=1 // pred_fallthru
      _
    // Predicated region
    $region54: #{tpu_custom_call.1} parent=1 // pred_check
      _
    $region55: #{tpu_custom_call.1} parent=1 // pred_check_branch
      %112 = sbr.rel (0) target = $region57
    $region56: #{tpu_custom_call.1} parent=1 // pred_region
      %113 = dma.done [#allocation12], 16
    $region57: #{tpu_custom_call.1} parent=1 // pred_fallthru
      _
    %v115 = vld [vmem:[#allocation2] sm:$0xf]
    %v116 = vld [vmem:[#allocation5] sm:$0xff]
    %v117 = vld [vmem:[#allocation5 + $0x8] sm:$0xff]
    %v118 = vld [vmem:[#allocation5 + $0x10] sm:$0xff]
    %v119 = vld [vmem:[#allocation5 + $0x18] sm:$0xff]
    %v120 = vld [vmem:[#allocation5 + $0x20] sm:$0xff]
    %v121 = vld [vmem:[#allocation5 + $0x28] sm:$0xff]
    %v122 = vld [vmem:[#allocation5 + $0x30] sm:$0xff]
    %v123 = vld [vmem:[#allocation5 + $0x38] sm:$0xff]
    %v124 = vld [vmem:[#allocation5 + $0x40] sm:$0xff]
    %v125 = vld [vmem:[#allocation5 + $0x48] sm:$0xff]
    %v126 = vld [vmem:[#allocation5 + $0x50] sm:$0xff]
    %v127 = vld [vmem:[#allocation5 + $0x58] sm:$0xff]
    %v128 = vld [vmem:[#allocation5 + $0x60] sm:$0xff]
    %v129 = vld [vmem:[#allocation5 + $0x68] sm:$0xff]
    %v130 = vld [vmem:[#allocation5 + $0x70] sm:$0xff]
    %v131 = vld [vmem:[#allocation5 + $0x78] sm:$0xff]
    %v132 = vld [vmem:[#allocation7] sm:$0xff]
    %v134 = vlaneseq
    %v135 = vshrl.u32 %v134, 7
    %v136 = vsub.s32 0, %v135
    %v137 = vrot.slane %v132, %v136
    %v138 = vlaneseq
    %v139 = vshrl.u32 %v138, 7
    %v140 = vsub.s32 1, %v139
    %v141 = vrot.slane %v132, %v140
    %v142 = vlaneseq
    %v143 = vshrl.u32 %v142, 7
    %v144 = vsub.s32 2, %v143
    %v145 = vrot.slane %v132, %v144
    %v146 = vlaneseq
    %v147 = vshrl.u32 %v146, 7
    %v148 = vsub.s32 3, %v147
    %v149 = vrot.slane %v132, %v148
    %v150 = vlaneseq
    %v151 = vshrl.u32 %v150, 7
    %v152 = vsub.s32 4, %v151
    %v153 = vrot.slane %v132, %v152
    %v154 = vlaneseq
    %v155 = vshrl.u32 %v154, 7
    %v156 = vsub.s32 5, %v155
    %v157 = vrot.slane %v132, %v156
    %v158 = vlaneseq
    %v159 = vshrl.u32 %v158, 7
    %v160 = vsub.s32 6, %v159
    %v161 = vrot.slane %v132, %v160
    %v162 = vlaneseq
    %v163 = vshrl.u32 %v162, 7
    %v164 = vsub.s32 7, %v163
    %v165 = vrot.slane %v132, %v164
    %v190 = vunpack.c.l.b16 %v116
    %v191 = vunpack.c.h.b16 %v116
    %v192 = vunpack.c.l.b16 %v117
    %v193 = vunpack.c.h.b16 %v117
    %v194 = vunpack.c.l.b16 %v118
    %v195 = vunpack.c.h.b16 %v118
    %v196 = vunpack.c.l.b16 %v119
    %v197 = vunpack.c.h.b16 %v119
    %v198 = vunpack.c.l.b16 %v120
    %v199 = vunpack.c.h.b16 %v120
    %v200 = vunpack.c.l.b16 %v121
    %v201 = vunpack.c.h.b16 %v121
    %v202 = vunpack.c.l.b16 %v122
    %v203 = vunpack.c.h.b16 %v122
    %v204 = vunpack.c.l.b16 %v123
    %v205 = vunpack.c.h.b16 %v123
    %v206 = vunpack.c.l.b16 %v124
    %v207 = vunpack.c.h.b16 %v124
    %v208 = vunpack.c.l.b16 %v125
    %v209 = vunpack.c.h.b16 %v125
    %v210 = vunpack.c.l.b16 %v126
    %v211 = vunpack.c.h.b16 %v126
    %v212 = vunpack.c.l.b16 %v127
    %v213 = vunpack.c.h.b16 %v127
    %v214 = vunpack.c.l.b16 %v128
    %v215 = vunpack.c.h.b16 %v128
    %v216 = vunpack.c.l.b16 %v129
    %v217 = vunpack.c.h.b16 %v129
    %v218 = vunpack.c.l.b16 %v130
    %v219 = vunpack.c.h.b16 %v130
    %v220 = vunpack.c.l.b16 %v131
    %v221 = vunpack.c.h.b16 %v131
    %v222 = vpack.c.b16 %v198, %v190
    %v223 = vpack.c.b16 %v199, %v191
    %v224 = vpack.c.b16 %v200, %v192
    %v225 = vpack.c.b16 %v201, %v193
    %v226 = vpack.c.b16 %v202, %v194
    %v227 = vpack.c.b16 %v203, %v195
    %v228 = vpack.c.b16 %v204, %v196
    %v229 = vpack.c.b16 %v205, %v197
    %v230 = vpack.c.b16 %v214, %v206
    %v231 = vpack.c.b16 %v215, %v207
    %v232 = vpack.c.b16 %v216, %v208
    %v233 = vpack.c.b16 %v217, %v209
    %v234 = vpack.c.b16 %v218, %v210
    %v235 = vpack.c.b16 %v219, %v211
    %v236 = vpack.c.b16 %v220, %v212
    %v237 = vpack.c.b16 %v221, %v213
    %vm254 = vcmask 261120
    %v256 = vsel %vm254, %v115, 0
    %258 = vmatprep.subr.bf16.mxu0 %v223
    %259 = vmatpush1.bf16.msra.mxu0 %v222
    %260 = vmatprep.subr.bf16.mxu0 %v231
    %261 = vmatpush1.bf16.msra.mxu0 %v230
    %262 = vmatprep.subr.bf16.mxu0 0
    %263 = vmatpush1.bf16.msra.mxu0 0
    %264 = vmatprep.subr.bf16.mxu0 0
    %265 = vmatpush1.bf16.msra.mxu0 0
    %266 = vmatprep.subr.bf16.mxu0 0
    %267 = vmatpush1.bf16.msra.mxu0 0
    %268 = vmatprep.subr.bf16.mxu0 0
    %269 = vmatpush1.bf16.msra.mxu0 0
    %270 = vmatprep.subr.bf16.mxu0 0
    %271 = vmatpush1.bf16.msra.mxu0 0
    %272 = vmatprep.subr.bf16.mxu0 0
    %273 = vmatpush1.bf16.msra.mxu0 0
    %274 = vmatprep.subr.bf16.mxu0 0
    %275 = vmatpush1.bf16.msra.mxu0 0
    %276 = vmatprep.subr.bf16.mxu0 0
    %277 = vmatpush1.bf16.msra.mxu0 0
    %278 = vmatprep.subr.bf16.mxu0 0
    %279 = vmatpush1.bf16.msra.mxu0 0
    %280 = vmatprep.subr.bf16.mxu0 0
    %281 = vmatpush1.bf16.msra.mxu0 0
    %282 = vmatprep.subr.bf16.mxu0 0
    %283 = vmatpush1.bf16.msra.mxu0 0
    %284 = vmatprep.subr.bf16.mxu0 0
    %285 = vmatpush1.bf16.msra.mxu0 0
    %286 = vmatprep.subr.bf16.mxu0 0
    %287 = vmatpush1.bf16.msra.mxu0 0
    %288 = vmatprep.subr.bf16.mxu0 0
    %289 = vmatpush1.bf16.msra.mxu0 0
    %290 = vmatprep.mubr.bf16.mxu0 0
    %291 = vmatmul.mubr.bf16.gmra.mrb[0].mxu0 %v256
    %v292 = vpop.f32.mrb[0].mxu0
    %v293 = vadd.f32 %v137, %v292
    %v294 = vpop.f32.mrb[0].mxu0
    %v295 = vadd.f32 %v141, %v294
    %v296 = vpop.f32.mrb[0].mxu0
    %v297 = vpop.f32.mrb[0].mxu0
    %298 = vdwg.mxu0
    %299 = vmatprep.subr.bf16.mxu0 %v225
    %300 = vmatpush1.bf16.msra.mxu0 %v224
    %301 = vmatprep.subr.bf16.mxu0 %v233
    %302 = vmatpush1.bf16.msra.mxu0 %v232
    %303 = vmatprep.subr.bf16.mxu0 0
    %304 = vmatpush1.bf16.msra.mxu0 0
    %305 = vmatprep.subr.bf16.mxu0 0
    %306 = vmatpush1.bf16.msra.mxu0 0
    %307 = vmatprep.subr.bf16.mxu0 0
    %308 = vmatpush1.bf16.msra.mxu0 0
    %309 = vmatprep.subr.bf16.mxu0 0
    %310 = vmatpush1.bf16.msra.mxu0 0
    %311 = vmatprep.subr.bf16.mxu0 0
    %312 = vmatpush1.bf16.msra.mxu0 0
    %313 = vmatprep.subr.bf16.mxu0 0
    %314 = vmatpush1.bf16.msra.mxu0 0
    %315 = vmatprep.subr.bf16.mxu0 0
    %316 = vmatpush1.bf16.msra.mxu0 0
    %317 = vmatprep.subr.bf16.mxu0 0
    %318 = vmatpush1.bf16.msra.mxu0 0
    %319 = vmatprep.subr.bf16.mxu0 0
    %320 = vmatpush1.bf16.msra.mxu0 0
    %321 = vmatprep.subr.bf16.mxu0 0
    %322 = vmatpush1.bf16.msra.mxu0 0
    %323 = vmatprep.subr.bf16.mxu0 0
    %324 = vmatpush1.bf16.msra.mxu0 0
    %325 = vmatprep.subr.bf16.mxu0 0
    %326 = vmatpush1.bf16.msra.mxu0 0
    %327 = vmatprep.subr.bf16.mxu0 0
    %328 = vmatpush1.bf16.msra.mxu0 0
    %329 = vmatprep.subr.bf16.mxu0 0
    %330 = vmatpush1.bf16.msra.mxu0 0
    %331 = vmatprep.mubr.bf16.mxu0 0
    %332 = vmatmul.mubr.bf16.gmra.mrb[0].mxu0 %v256
    %v333 = vpop.f32.mrb[0].mxu0
    %v334 = vadd.f32 %v145, %v333
    %v335 = vpop.f32.mrb[0].mxu0
    %v336 = vadd.f32 %v149, %v335
    %v337 = vpop.f32.mrb[0].mxu0
    %v338 = vpop.f32.mrb[0].mxu0
    %339 = vdwg.mxu0
    %340 = vmatprep.subr.bf16.mxu0 %v227
    %341 = vmatpush1.bf16.msra.mxu0 %v226
    %342 = vmatprep.subr.bf16.mxu0 %v235
    %343 = vmatpush1.bf16.msra.mxu0 %v234
    %344 = vmatprep.subr.bf16.mxu0 0
    %345 = vmatpush1.bf16.msra.mxu0 0
    %346 = vmatprep.subr.bf16.mxu0 0
    %347 = vmatpush1.bf16.msra.mxu0 0
    %348 = vmatprep.subr.bf16.mxu0 0
    %349 = vmatpush1.bf16.msra.mxu0 0
    %350 = vmatprep.subr.bf16.mxu0 0
    %351 = vmatpush1.bf16.msra.mxu0 0
    %352 = vmatprep.subr.bf16.mxu0 0
    %353 = vmatpush1.bf16.msra.mxu0 0
    %354 = vmatprep.subr.bf16.mxu0 0
    %355 = vmatpush1.bf16.msra.mxu0 0
    %356 = vmatprep.subr.bf16.mxu0 0
    %357 = vmatpush1.bf16.msra.mxu0 0
    %358 = vmatprep.subr.bf16.mxu0 0
    %359 = vmatpush1.bf16.msra.mxu0 0
    %360 = vmatprep.subr.bf16.mxu0 0
    %361 = vmatpush1.bf16.msra.mxu0 0
    %362 = vmatprep.subr.bf16.mxu0 0
    %363 = vmatpush1.bf16.msra.mxu0 0
    %364 = vmatprep.subr.bf16.mxu0 0
    %365 = vmatpush1.bf16.msra.mxu0 0
    %366 = vmatprep.subr.bf16.mxu0 0
    %367 = vmatpush1.bf16.msra.mxu0 0
    %368 = vmatprep.subr.bf16.mxu0 0
    %369 = vmatpush1.bf16.msra.mxu0 0
    %370 = vmatprep.subr.bf16.mxu0 0
    %371 = vmatpush1.bf16.msra.mxu0 0
    %372 = vmatprep.mubr.bf16.mxu0 0
    %373 = vmatmul.mubr.bf16.gmra.mrb[0].mxu0 %v256
    %v374 = vpop.f32.mrb[0].mxu0
    %v375 = vadd.f32 %v153, %v374
    %v376 = vpop.f32.mrb[0].mxu0
    %v377 = vadd.f32 %v157, %v376
    %v378 = vpop.f32.mrb[0].mxu0
    %v379 = vpop.f32.mrb[0].mxu0
    %380 = vdwg.mxu0
    %381 = vmatprep.subr.bf16.mxu0 %v229
    %382 = vmatpush1.bf16.msra.mxu0 %v228
    %383 = vmatprep.subr.bf16.mxu0 %v237
    %384 = vmatpush1.bf16.msra.mxu0 %v236
    %385 = vmatprep.subr.bf16.mxu0 0
    %386 = vmatpush1.bf16.msra.mxu0 0
    %387 = vmatprep.subr.bf16.mxu0 0
    %388 = vmatpush1.bf16.msra.mxu0 0
    %389 = vmatprep.subr.bf16.mxu0 0
    %390 = vmatpush1.bf16.msra.mxu0 0
    %391 = vmatprep.subr.bf16.mxu0 0
    %392 = vmatpush1.bf16.msra.mxu0 0
    %393 = vmatprep.subr.bf16.mxu0 0
    %394 = vmatpush1.bf16.msra.mxu0 0
    %395 = vmatprep.subr.bf16.mxu0 0
    %396 = vmatpush1.bf16.msra.mxu0 0
    %397 = vmatprep.subr.bf16.mxu0 0
    %398 = vmatpush1.bf16.msra.mxu0 0
    %399 = vmatprep.subr.bf16.mxu0 0
    %400 = vmatpush1.bf16.msra.mxu0 0
    %401 = vmatprep.subr.bf16.mxu0 0
    %402 = vmatpush1.bf16.msra.mxu0 0
    %403 = vmatprep.subr.bf16.mxu0 0
    %404 = vmatpush1.bf16.msra.mxu0 0
    %405 = vmatprep.subr.bf16.mxu0 0
    %406 = vmatpush1.bf16.msra.mxu0 0
    %407 = vmatprep.subr.bf16.mxu0 0
    %408 = vmatpush1.bf16.msra.mxu0 0
    %409 = vmatprep.subr.bf16.mxu0 0
    %410 = vmatpush1.bf16.msra.mxu0 0
    %411 = vmatprep.subr.bf16.mxu0 0
    %412 = vmatpush1.bf16.msra.mxu0 0
    %413 = vmatprep.mubr.bf16.mxu0 0
    %414 = vmatmul.mubr.bf16.gmra.mrb[0].mxu0 %v256
    %v415 = vpop.f32.mrb[0].mxu0
    %v416 = vadd.f32 %v161, %v415
    %v417 = vpop.f32.mrb[0].mxu0
    %v418 = vadd.f32 %v165, %v417
    %v419 = vpop.f32.mrb[0].mxu0
    %v420 = vpop.f32.mrb[0].mxu0
    %421 = vdwg.mxu0
    %v422 = vmax.f32 %v293, 0.0
    %v423 = vmax.f32 %v295, 0.0
    %v424 = vmax.f32 %v334, 0.0
    %v425 = vmax.f32 %v336, 0.0
    %v426 = vmax.f32 %v375, 0.0
    %v427 = vmax.f32 %v377, 0.0
    %v428 = vmax.f32 %v416, 0.0
    %v429 = vmax.f32 %v418, 0.0
    %v430 = vpack.c.bf16 %v422, %v422
    %v431 = vpack.c.bf16 %v423, %v423
    %v432 = vpack.c.bf16 %v424, %v424
    %v433 = vpack.c.bf16 %v425, %v425
    %v434 = vpack.c.bf16 %v426, %v426
    %v435 = vpack.c.bf16 %v427, %v427
    %v436 = vpack.c.bf16 %v428, %v428
    %v437 = vpack.c.bf16 %v429, %v429
    %v438 = vld [vmem:[#allocation8] sm:$0xff]
    %v439 = vld [vmem:[#allocation8 + $0x8] sm:$0xff]
    %v440 = vld [vmem:[#allocation8 + $0x10] sm:$0xff]
    %v441 = vld [vmem:[#allocation8 + $0x18] sm:$0xff]
    %v442 = vld [vmem:[#allocation8 + $0x20] sm:$0xff]
    %v443 = vld [vmem:[#allocation8 + $0x28] sm:$0xff]
    %v444 = vld [vmem:[#allocation8 + $0x30] sm:$0xff]
    %v445 = vld [vmem:[#allocation8 + $0x38] sm:$0xff]
    %v446 = vld [vmem:[#allocation8 + $0x40] sm:$0xff]
    %v447 = vld [vmem:[#allocation8 + $0x48] sm:$0xff]
    %v448 = vld [vmem:[#allocation8 + $0x50] sm:$0xff]
    %v449 = vld [vmem:[#allocation8 + $0x58] sm:$0xff]
    %v450 = vld [vmem:[#allocation8 + $0x60] sm:$0xff]
    %v451 = vld [vmem:[#allocation8 + $0x68] sm:$0xff]
    %v452 = vld [vmem:[#allocation8 + $0x70] sm:$0xff]
    %v453 = vld [vmem:[#allocation8 + $0x78] sm:$0xff]
    %v454 = vld [vmem:[#allocation8 + $0x80] sm:$0xff]
    %v455 = vld [vmem:[#allocation8 + $0x88] sm:$0xff]
    %v456 = vld [vmem:[#allocation8 + $0x90] sm:$0xff]
    %v457 = vld [vmem:[#allocation8 + $0x98] sm:$0xff]
    %v458 = vld [vmem:[#allocation8 + $0xa0] sm:$0xff]
    %v459 = vld [vmem:[#allocation8 + $0xa8] sm:$0xff]
    %v460 = vld [vmem:[#allocation8 + $0xb0] sm:$0xff]
    %v461 = vld [vmem:[#allocation8 + $0xb8] sm:$0xff]
    %v462 = vld [vmem:[#allocation8 + $0xc0] sm:$0xff]
    %v463 = vld [vmem:[#allocation8 + $0xc8] sm:$0xff]
    %v464 = vld [vmem:[#allocation8 + $0xd0] sm:$0xff]
    %v465 = vld [vmem:[#allocation8 + $0xd8] sm:$0xff]
    %v466 = vld [vmem:[#allocation8 + $0xe0] sm:$0xff]
    %v467 = vld [vmem:[#allocation8 + $0xe8] sm:$0xff]
    %v468 = vld [vmem:[#allocation8 + $0xf0] sm:$0xff]
    %v469 = vld [vmem:[#allocation8 + $0xf8] sm:$0xff]
    %v470 = vld [vmem:[#allocation8 + $0x100] sm:$0xff]
    %v471 = vld [vmem:[#allocation8 + $0x108] sm:$0xff]
    %v472 = vld [vmem:[#allocation8 + $0x110] sm:$0xff]
    %v473 = vld [vmem:[#allocation8 + $0x118] sm:$0xff]
    %v474 = vld [vmem:[#allocation8 + $0x120] sm:$0xff]
    %v475 = vld [vmem:[#allocation8 + $0x128] sm:$0xff]
    %v476 = vld [vmem:[#allocation8 + $0x130] sm:$0xff]
    %v477 = vld [vmem:[#allocation8 + $0x138] sm:$0xff]
    %v478 = vld [vmem:[#allocation8 + $0x140] sm:$0xff]
    %v479 = vld [vmem:[#allocation8 + $0x148] sm:$0xff]
    %v480 = vld [vmem:[#allocation8 + $0x150] sm:$0xff]
    %v481 = vld [vmem:[#allocation8 + $0x158] sm:$0xff]
    %v482 = vld [vmem:[#allocation8 + $0x160] sm:$0xff]
    %v483 = vld [vmem:[#allocation8 + $0x168] sm:$0xff]
    %v484 = vld [vmem:[#allocation8 + $0x170] sm:$0xff]
    %v485 = vld [vmem:[#allocation8 + $0x178] sm:$0xff]
    %v486 = vld [vmem:[#allocation8 + $0x180] sm:$0xff]
    %v487 = vld [vmem:[#allocation8 + $0x188] sm:$0xff]
    %v488 = vld [vmem:[#allocation8 + $0x190] sm:$0xff]
    %v489 = vld [vmem:[#allocation8 + $0x198] sm:$0xff]
    %v490 = vld [vmem:[#allocation8 + $0x1a0] sm:$0xff]
    %v491 = vld [vmem:[#allocation8 + $0x1a8] sm:$0xff]
    %v492 = vld [vmem:[#allocation8 + $0x1b0] sm:$0xff]
    %v493 = vld [vmem:[#allocation8 + $0x1b8] sm:$0xff]
    %v494 = vld [vmem:[#allocation8 + $0x1c0] sm:$0xff]
    %v495 = vld [vmem:[#allocation8 + $0x1c8] sm:$0xff]
    %v496 = vld [vmem:[#allocation8 + $0x1d0] sm:$0xff]
    %v497 = vld [vmem:[#allocation8 + $0x1d8] sm:$0xff]
    %v498 = vld [vmem:[#allocation8 + $0x1e0] sm:$0xff]
    %v499 = vld [vmem:[#allocation8 + $0x1e8] sm:$0xff]
    %v500 = vld [vmem:[#allocation8 + $0x1f0] sm:$0xff]
    %v501 = vld [vmem:[#allocation8 + $0x1f8] sm:$0xff]
    %v502 = vld [vmem:[#allocation8 + $0x200] sm:$0xff]
    %v503 = vld [vmem:[#allocation8 + $0x208] sm:$0xff]
    %v504 = vld [vmem:[#allocation8 + $0x210] sm:$0xff]
    %v505 = vld [vmem:[#allocation8 + $0x218] sm:$0xff]
    %v506 = vld [vmem:[#allocation8 + $0x220] sm:$0xff]
    %v507 = vld [vmem:[#allocation8 + $0x228] sm:$0xff]
    %v508 = vld [vmem:[#allocation8 + $0x230] sm:$0xff]
    %v509 = vld [vmem:[#allocation8 + $0x238] sm:$0xff]
    %v510 = vld [vmem:[#allocation8 + $0x240] sm:$0xff]
    %v511 = vld [vmem:[#allocation8 + $0x248] sm:$0xff]
    %v512 = vld [vmem:[#allocation8 + $0x250] sm:$0xff]
    %v513 = vld [vmem:[#allocation8 + $0x258] sm:$0xff]
    %v514 = vld [vmem:[#allocation8 + $0x260] sm:$0xff]
    %v515 = vld [vmem:[#allocation8 + $0x268] sm:$0xff]
    %v516 = vld [vmem:[#allocation8 + $0x270] sm:$0xff]
    %v517 = vld [vmem:[#allocation8 + $0x278] sm:$0xff]
    %v518 = vld [vmem:[#allocation8 + $0x280] sm:$0xff]
    %v519 = vld [vmem:[#allocation8 + $0x288] sm:$0xff]
    %v520 = vld [vmem:[#allocation8 + $0x290] sm:$0xff]
    %v521 = vld [vmem:[#allocation8 + $0x298] sm:$0xff]
    %v522 = vld [vmem:[#allocation8 + $0x2a0] sm:$0xff]
    %v523 = vld [vmem:[#allocation8 + $0x2a8] sm:$0xff]
    %v524 = vld [vmem:[#allocation8 + $0x2b0] sm:$0xff]
    %v525 = vld [vmem:[#allocation8 + $0x2b8] sm:$0xff]
    %v526 = vld [vmem:[#allocation8 + $0x2c0] sm:$0xff]
    %v527 = vld [vmem:[#allocation8 + $0x2c8] sm:$0xff]
    %v528 = vld [vmem:[#allocation8 + $0x2d0] sm:$0xff]
    %v529 = vld [vmem:[#allocation8 + $0x2d8] sm:$0xff]
    %v530 = vld [vmem:[#allocation8 + $0x2e0] sm:$0xff]
    %v531 = vld [vmem:[#allocation8 + $0x2e8] sm:$0xff]
    %v532 = vld [vmem:[#allocation8 + $0x2f0] sm:$0xff]
    %v533 = vld [vmem:[#allocation8 + $0x2f8] sm:$0xff]
    %v534 = vld [vmem:[#allocation8 + $0x300] sm:$0xff]
    %v535 = vld [vmem:[#allocation8 + $0x308] sm:$0xff]
    %v536 = vld [vmem:[#allocation8 + $0x310] sm:$0xff]
    %v537 = vld [vmem:[#allocation8 + $0x318] sm:$0xff]
    %v538 = vld [vmem:[#allocation8 + $0x320] sm:$0xff]
    %v539 = vld [vmem:[#allocation8 + $0x328] sm:$0xff]
    %v540 = vld [vmem:[#allocation8 + $0x330] sm:$0xff]
    %v541 = vld [vmem:[#allocation8 + $0x338] sm:$0xff]
    %v542 = vld [vmem:[#allocation8 + $0x340] sm:$0xff]
    %v543 = vld [vmem:[#allocation8 + $0x348] sm:$0xff]
    %v544 = vld [vmem:[#allocation8 + $0x350] sm:$0xff]
    %v545 = vld [vmem:[#allocation8 + $0x358] sm:$0xff]
    %v546 = vld [vmem:[#allocation8 + $0x360] sm:$0xff]
    %v547 = vld [vmem:[#allocation8 + $0x368] sm:$0xff]
    %v548 = vld [vmem:[#allocation8 + $0x370] sm:$0xff]
    %v549 = vld [vmem:[#allocation8 + $0x378] sm:$0xff]
    %v550 = vld [vmem:[#allocation8 + $0x380] sm:$0xff]
    %v551 = vld [vmem:[#allocation8 + $0x388] sm:$0xff]
    %v552 = vld [vmem:[#allocation8 + $0x390] sm:$0xff]
    %v553 = vld [vmem:[#allocation8 + $0x398] sm:$0xff]
    %v554 = vld [vmem:[#allocation8 + $0x3a0] sm:$0xff]
    %v555 = vld [vmem:[#allocation8 + $0x3a8] sm:$0xff]
    %v556 = vld [vmem:[#allocation8 + $0x3b0] sm:$0xff]
    %v557 = vld [vmem:[#allocation8 + $0x3b8] sm:$0xff]
    %v558 = vld [vmem:[#allocation8 + $0x3c0] sm:$0xff]
    %v559 = vld [vmem:[#allocation8 + $0x3c8] sm:$0xff]
    %v560 = vld [vmem:[#allocation8 + $0x3d0] sm:$0xff]
    %v561 = vld [vmem:[#allocation8 + $0x3d8] sm:$0xff]
    %v562 = vld [vmem:[#allocation8 + $0x3e0] sm:$0xff]
    %v563 = vld [vmem:[#allocation8 + $0x3e8] sm:$0xff]
    %v564 = vld [vmem:[#allocation8 + $0x3f0] sm:$0xff]
    %v565 = vld [vmem:[#allocation8 + $0x3f8] sm:$0xff]
    %v566 = vld [vmem:[#allocation8 + $0x400] sm:$0xff]
    %v567 = vld [vmem:[#allocation8 + $0x408] sm:$0xff]
    %v568 = vld [vmem:[#allocation8 + $0x410] sm:$0xff]
    %v569 = vld [vmem:[#allocation8 + $0x418] sm:$0xff]
    %v570 = vld [vmem:[#allocation8 + $0x420] sm:$0xff]
    %v571 = vld [vmem:[#allocation8 + $0x428] sm:$0xff]
    %v572 = vld [vmem:[#allocation8 + $0x430] sm:$0xff]
    %v573 = vld [vmem:[#allocation8 + $0x438] sm:$0xff]
    %v574 = vld [vmem:[#allocation8 + $0x440] sm:$0xff]
    %v575 = vld [vmem:[#allocation8 + $0x448] sm:$0xff]
    %v576 = vld [vmem:[#allocation8 + $0x450] sm:$0xff]
    %v577 = vld [vmem:[#allocation8 + $0x458] sm:$0xff]
    %v578 = vld [vmem:[#allocation8 + $0x460] sm:$0xff]
    %v579 = vld [vmem:[#allocation8 + $0x468] sm:$0xff]
    %v580 = vld [vmem:[#allocation8 + $0x470] sm:$0xff]
    %v581 = vld [vmem:[#allocation8 + $0x478] sm:$0xff]
    %v582 = vld [vmem:[#allocation8 + $0x480] sm:$0xff]
    %v583 = vld [vmem:[#allocation8 + $0x488] sm:$0xff]
    %v584 = vld [vmem:[#allocation8 + $0x490] sm:$0xff]
    %v585 = vld [vmem:[#allocation8 + $0x498] sm:$0xff]
    %v586 = vld [vmem:[#allocation8 + $0x4a0] sm:$0xff]
    %v587 = vld [vmem:[#allocation8 + $0x4a8] sm:$0xff]
    %v588 = vld [vmem:[#allocation8 + $0x4b0] sm:$0xff]
    %v589 = vld [vmem:[#allocation8 + $0x4b8] sm:$0xff]
    %v590 = vld [vmem:[#allocation8 + $0x4c0] sm:$0xff]
    %v591 = vld [vmem:[#allocation8 + $0x4c8] sm:$0xff]
    %v592 = vld [vmem:[#allocation8 + $0x4d0] sm:$0xff]
    %v593 = vld [vmem:[#allocation8 + $0x4d8] sm:$0xff]
    %v594 = vld [vmem:[#allocation8 + $0x4e0] sm:$0xff]
    %v595 = vld [vmem:[#allocation8 + $0x4e8] sm:$0xff]
    %v596 = vld [vmem:[#allocation8 + $0x4f0] sm:$0xff]
    %v597 = vld [vmem:[#allocation8 + $0x4f8] sm:$0xff]
    %v598 = vld [vmem:[#allocation8 + $0x500] sm:$0xff]
    %v599 = vld [vmem:[#allocation8 + $0x508] sm:$0xff]
    %v600 = vld [vmem:[#allocation8 + $0x510] sm:$0xff]
    %v601 = vld [vmem:[#allocation8 + $0x518] sm:$0xff]
    %v602 = vld [vmem:[#allocation8 + $0x520] sm:$0xff]
    %v603 = vld [vmem:[#allocation8 + $0x528] sm:$0xff]
    %v604 = vld [vmem:[#allocation8 + $0x530] sm:$0xff]
    %v605 = vld [vmem:[#allocation8 + $0x538] sm:$0xff]
    %v606 = vld [vmem:[#allocation8 + $0x540] sm:$0xff]
    %v607 = vld [vmem:[#allocation8 + $0x548] sm:$0xff]
    %v608 = vld [vmem:[#allocation8 + $0x550] sm:$0xff]
    %v609 = vld [vmem:[#allocation8 + $0x558] sm:$0xff]
    %v610 = vld [vmem:[#allocation8 + $0x560] sm:$0xff]
    %v611 = vld [vmem:[#allocation8 + $0x568] sm:$0xff]
    %v612 = vld [vmem:[#allocation8 + $0x570] sm:$0xff]
    %v613 = vld [vmem:[#allocation8 + $0x578] sm:$0xff]
    %v614 = vld [vmem:[#allocation8 + $0x580] sm:$0xff]
    %v615 = vld [vmem:[#allocation8 + $0x588] sm:$0xff]
    %v616 = vld [vmem:[#allocation8 + $0x590] sm:$0xff]
    %v617 = vld [vmem:[#allocation8 + $0x598] sm:$0xff]
    %v618 = vld [vmem:[#allocation8 + $0x5a0] sm:$0xff]
    %v619 = vld [vmem:[#allocation8 + $0x5a8] sm:$0xff]
    %v620 = vld [vmem:[#allocation8 + $0x5b0] sm:$0xff]
    %v621 = vld [vmem:[#allocation8 + $0x5b8] sm:$0xff]
    %v622 = vld [vmem:[#allocation8 + $0x5c0] sm:$0xff]
    %v623 = vld [vmem:[#allocation8 + $0x5c8] sm:$0xff]
    %v624 = vld [vmem:[#allocation8 + $0x5d0] sm:$0xff]
    %v625 = vld [vmem:[#allocation8 + $0x5d8] sm:$0xff]
    %v626 = vld [vmem:[#allocation8 + $0x5e0] sm:$0xff]
    %v627 = vld [vmem:[#allocation8 + $0x5e8] sm:$0xff]
    %v628 = vld [vmem:[#allocation8 + $0x5f0] sm:$0xff]
    %v629 = vld [vmem:[#allocation8 + $0x5f8] sm:$0xff]
    %v630 = vld [vmem:[#allocation8 + $0x600] sm:$0xff]
    %v631 = vld [vmem:[#allocation8 + $0x608] sm:$0xff]
    %v632 = vld [vmem:[#allocation8 + $0x610] sm:$0xff]
    %v633 = vld [vmem:[#allocation8 + $0x618] sm:$0xff]
    %v634 = vld [vmem:[#allocation8 + $0x620] sm:$0xff]
    %v635 = vld [vmem:[#allocation8 + $0x628] sm:$0xff]
    %v636 = vld [vmem:[#allocation8 + $0x630] sm:$0xff]
    %v637 = vld [vmem:[#allocation8 + $0x638] sm:$0xff]
    %v638 = vld [vmem:[#allocation8 + $0x640] sm:$0xff]
    %v639 = vld [vmem:[#allocation8 + $0x648] sm:$0xff]
    %v640 = vld [vmem:[#allocation8 + $0x650] sm:$0xff]
    %v641 = vld [vmem:[#allocation8 + $0x658] sm:$0xff]
    %v642 = vld [vmem:[#allocation8 + $0x660] sm:$0xff]
    %v643 = vld [vmem:[#allocation8 + $0x668] sm:$0xff]
    %v644 = vld [vmem:[#allocation8 + $0x670] sm:$0xff]
    %v645 = vld [vmem:[#allocation8 + $0x678] sm:$0xff]
    %v646 = vld [vmem:[#allocation8 + $0x680] sm:$0xff]
    %v647 = vld [vmem:[#allocation8 + $0x688] sm:$0xff]
    %v648 = vld [vmem:[#allocation8 + $0x690] sm:$0xff]
    %v649 = vld [vmem:[#allocation8 + $0x698] sm:$0xff]
    %v650 = vld [vmem:[#allocation8 + $0x6a0] sm:$0xff]
    %v651 = vld [vmem:[#allocation8 + $0x6a8] sm:$0xff]
    %v652 = vld [vmem:[#allocation8 + $0x6b0] sm:$0xff]
    %v653 = vld [vmem:[#allocation8 + $0x6b8] sm:$0xff]
    %v654 = vld [vmem:[#allocation8 + $0x6c0] sm:$0xff]
    %v655 = vld [vmem:[#allocation8 + $0x6c8] sm:$0xff]
    %v656 = vld [vmem:[#allocation8 + $0x6d0] sm:$0xff]
    %v657 = vld [vmem:[#allocation8 + $0x6d8] sm:$0xff]
    %v658 = vld [vmem:[#allocation8 + $0x6e0] sm:$0xff]
    %v659 = vld [vmem:[#allocation8 + $0x6e8] sm:$0xff]
    %v660 = vld [vmem:[#allocation8 + $0x6f0] sm:$0xff]
    %v661 = vld [vmem:[#allocation8 + $0x6f8] sm:$0xff]
    %v662 = vld [vmem:[#allocation8 + $0x700] sm:$0xff]
    %v663 = vld [vmem:[#allocation8 + $0x708] sm:$0xff]
    %v664 = vld [vmem:[#allocation8 + $0x710] sm:$0xff]
    %v665 = vld [vmem:[#allocation8 + $0x718] sm:$0xff]
    %v666 = vld [vmem:[#allocation8 + $0x720] sm:$0xff]
    %v667 = vld [vmem:[#allocation8 + $0x728] sm:$0xff]
    %v668 = vld [vmem:[#allocation8 + $0x730] sm:$0xff]
    %v669 = vld [vmem:[#allocation8 + $0x738] sm:$0xff]
    %v670 = vld [vmem:[#allocation8 + $0x740] sm:$0xff]
    %v671 = vld [vmem:[#allocation8 + $0x748] sm:$0xff]
    %v672 = vld [vmem:[#allocation8 + $0x750] sm:$0xff]
    %v673 = vld [vmem:[#allocation8 + $0x758] sm:$0xff]
    %v674 = vld [vmem:[#allocation8 + $0x760] sm:$0xff]
    %v675 = vld [vmem:[#allocation8 + $0x768] sm:$0xff]
    %v676 = vld [vmem:[#allocation8 + $0x770] sm:$0xff]
    %v677 = vld [vmem:[#allocation8 + $0x778] sm:$0xff]
    %v678 = vld [vmem:[#allocation8 + $0x780] sm:$0xff]
    %v679 = vld [vmem:[#allocation8 + $0x788] sm:$0xff]
    %v680 = vld [vmem:[#allocation8 + $0x790] sm:$0xff]
    %v681 = vld [vmem:[#allocation8 + $0x798] sm:$0xff]
    %v682 = vld [vmem:[#allocation8 + $0x7a0] sm:$0xff]
    %v683 = vld [vmem:[#allocation8 + $0x7a8] sm:$0xff]
    %v684 = vld [vmem:[#allocation8 + $0x7b0] sm:$0xff]
    %v685 = vld [vmem:[#allocation8 + $0x7b8] sm:$0xff]
    %v686 = vld [vmem:[#allocation8 + $0x7c0] sm:$0xff]
    %v687 = vld [vmem:[#allocation8 + $0x7c8] sm:$0xff]
    %v688 = vld [vmem:[#allocation8 + $0x7d0] sm:$0xff]
    %v689 = vld [vmem:[#allocation8 + $0x7d8] sm:$0xff]
    %v690 = vld [vmem:[#allocation8 + $0x7e0] sm:$0xff]
    %v691 = vld [vmem:[#allocation8 + $0x7e8] sm:$0xff]
    %v692 = vld [vmem:[#allocation8 + $0x7f0] sm:$0xff]
    %v693 = vld [vmem:[#allocation8 + $0x7f8] sm:$0xff]
    %v694 = vld [vmem:[#allocation8 + $0x800] sm:$0xff]
    %v695 = vld [vmem:[#allocation8 + $0x808] sm:$0xff]
    %v696 = vld [vmem:[#allocation8 + $0x810] sm:$0xff]
    %v697 = vld [vmem:[#allocation8 + $0x818] sm:$0xff]
    %v698 = vld [vmem:[#allocation8 + $0x820] sm:$0xff]
    %v699 = vld [vmem:[#allocation8 + $0x828] sm:$0xff]
    %v700 = vld [vmem:[#allocation8 + $0x830] sm:$0xff]
    %v701 = vld [vmem:[#allocation8 + $0x838] sm:$0xff]
    %v702 = vld [vmem:[#allocation8 + $0x840] sm:$0xff]
    %v703 = vld [vmem:[#allocation8 + $0x848] sm:$0xff]
    %v704 = vld [vmem:[#allocation8 + $0x850] sm:$0xff]
    %v705 = vld [vmem:[#allocation8 + $0x858] sm:$0xff]
    %v706 = vld [vmem:[#allocation8 + $0x860] sm:$0xff]
    %v707 = vld [vmem:[#allocation8 + $0x868] sm:$0xff]
    %v708 = vld [vmem:[#allocation8 + $0x870] sm:$0xff]
    %v709 = vld [vmem:[#allocation8 + $0x878] sm:$0xff]
    %v710 = vld [vmem:[#allocation8 + $0x880] sm:$0xff]
    %v711 = vld [vmem:[#allocation8 + $0x888] sm:$0xff]
    %v712 = vld [vmem:[#allocation8 + $0x890] sm:$0xff]
    %v713 = vld [vmem:[#allocation8 + $0x898] sm:$0xff]
    %v714 = vld [vmem:[#allocation8 + $0x8a0] sm:$0xff]
    %v715 = vld [vmem:[#allocation8 + $0x8a8] sm:$0xff]
    %v716 = vld [vmem:[#allocation8 + $0x8b0] sm:$0xff]
    %v717 = vld [vmem:[#allocation8 + $0x8b8] sm:$0xff]
    %v718 = vld [vmem:[#allocation8 + $0x8c0] sm:$0xff]
    %v719 = vld [vmem:[#allocation8 + $0x8c8] sm:$0xff]
    %v720 = vld [vmem:[#allocation8 + $0x8d0] sm:$0xff]
    %v721 = vld [vmem:[#allocation8 + $0x8d8] sm:$0xff]
    %v722 = vld [vmem:[#allocation8 + $0x8e0] sm:$0xff]
    %v723 = vld [vmem:[#allocation8 + $0x8e8] sm:$0xff]
    %v724 = vld [vmem:[#allocation8 + $0x8f0] sm:$0xff]
    %v725 = vld [vmem:[#allocation8 + $0x8f8] sm:$0xff]
    %v726 = vld [vmem:[#allocation8 + $0x900] sm:$0xff]
    %v727 = vld [vmem:[#allocation8 + $0x908] sm:$0xff]
    %v728 = vld [vmem:[#allocation8 + $0x910] sm:$0xff]
    %v729 = vld [vmem:[#allocation8 + $0x918] sm:$0xff]
    %v730 = vld [vmem:[#allocation8 + $0x920] sm:$0xff]
    %v731 = vld [vmem:[#allocation8 + $0x928] sm:$0xff]
    %v732 = vld [vmem:[#allocation8 + $0x930] sm:$0xff]
    %v733 = vld [vmem:[#allocation8 + $0x938] sm:$0xff]
    %v734 = vld [vmem:[#allocation8 + $0x940] sm:$0xff]
    %v735 = vld [vmem:[#allocation8 + $0x948] sm:$0xff]
    %v736 = vld [vmem:[#allocation8 + $0x950] sm:$0xff]
    %v737 = vld [vmem:[#allocation8 + $0x958] sm:$0xff]
    %v738 = vld [vmem:[#allocation8 + $0x960] sm:$0xff]
    %v739 = vld [vmem:[#allocation8 + $0x968] sm:$0xff]
    %v740 = vld [vmem:[#allocation8 + $0x970] sm:$0xff]
    %v741 = vld [vmem:[#allocation8 + $0x978] sm:$0xff]
    %v742 = vld [vmem:[#allocation8 + $0x980] sm:$0xff]
    %v743 = vld [vmem:[#allocation8 + $0x988] sm:$0xff]
    %v744 = vld [vmem:[#allocation8 + $0x990] sm:$0xff]
    %v745 = vld [vmem:[#allocation8 + $0x998] sm:$0xff]
    %v746 = vld [vmem:[#allocation8 + $0x9a0] sm:$0xff]
    %v747 = vld [vmem:[#allocation8 + $0x9a8] sm:$0xff]
    %v748 = vld [vmem:[#allocation8 + $0x9b0] sm:$0xff]
    %v749 = vld [vmem:[#allocation8 + $0x9b8] sm:$0xff]
    %v750 = vld [vmem:[#allocation8 + $0x9c0] sm:$0xff]
    %v751 = vld [vmem:[#allocation8 + $0x9c8] sm:$0xff]
    %v752 = vld [vmem:[#allocation8 + $0x9d0] sm:$0xff]
    %v753 = vld [vmem:[#allocation8 + $0x9d8] sm:$0xff]
    %v754 = vld [vmem:[#allocation8 + $0x9e0] sm:$0xff]
    %v755 = vld [vmem:[#allocation8 + $0x9e8] sm:$0xff]
    %v756 = vld [vmem:[#allocation8 + $0x9f0] sm:$0xff]
    %v757 = vld [vmem:[#allocation8 + $0x9f8] sm:$0xff]
    %v758 = vld [vmem:[#allocation8 + $0xa00] sm:$0xff]
    %v759 = vld [vmem:[#allocation8 + $0xa08] sm:$0xff]
    %v760 = vld [vmem:[#allocation8 + $0xa10] sm:$0xff]
    %v761 = vld [vmem:[#allocation8 + $0xa18] sm:$0xff]
    %v762 = vld [vmem:[#allocation8 + $0xa20] sm:$0xff]
    %v763 = vld [vmem:[#allocation8 + $0xa28] sm:$0xff]
    %v764 = vld [vmem:[#allocation8 + $0xa30] sm:$0xff]
    %v765 = vld [vmem:[#allocation8 + $0xa38] sm:$0xff]
    %v766 = vld [vmem:[#allocation8 + $0xa40] sm:$0xff]
    %v767 = vld [vmem:[#allocation8 + $0xa48] sm:$0xff]
    %v768 = vld [vmem:[#allocation8 + $0xa50] sm:$0xff]
    %v769 = vld [vmem:[#allocation8 + $0xa58] sm:$0xff]
    %v770 = vld [vmem:[#allocation8 + $0xa60] sm:$0xff]
    %v771 = vld [vmem:[#allocation8 + $0xa68] sm:$0xff]
    %v772 = vld [vmem:[#allocation8 + $0xa70] sm:$0xff]
    %v773 = vld [vmem:[#allocation8 + $0xa78] sm:$0xff]
    %v774 = vld [vmem:[#allocation8 + $0xa80] sm:$0xff]
    %v775 = vld [vmem:[#allocation8 + $0xa88] sm:$0xff]
    %v776 = vld [vmem:[#allocation8 + $0xa90] sm:$0xff]
    %v777 = vld [vmem:[#allocation8 + $0xa98] sm:$0xff]
    %v778 = vld [vmem:[#allocation8 + $0xaa0] sm:$0xff]
    %v779 = vld [vmem:[#allocation8 + $0xaa8] sm:$0xff]
    %v780 = vld [vmem:[#allocation8 + $0xab0] sm:$0xff]
    %v781 = vld [vmem:[#allocation8 + $0xab8] sm:$0xff]
    %v782 = vld [vmem:[#allocation8 + $0xac0] sm:$0xff]
    %v783 = vld [vmem:[#allocation8 + $0xac8] sm:$0xff]
    %v784 = vld [vmem:[#allocation8 + $0xad0] sm:$0xff]
    %v785 = vld [vmem:[#allocation8 + $0xad8] sm:$0xff]
    %v786 = vld [vmem:[#allocation8 + $0xae0] sm:$0xff]
    %v787 = vld [vmem:[#allocation8 + $0xae8] sm:$0xff]
    %v788 = vld [vmem:[#allocation8 + $0xaf0] sm:$0xff]
    %v789 = vld [vmem:[#allocation8 + $0xaf8] sm:$0xff]
    %v790 = vld [vmem:[#allocation8 + $0xb00] sm:$0xff]
    %v791 = vld [vmem:[#allocation8 + $0xb08] sm:$0xff]
    %v792 = vld [vmem:[#allocation8 + $0xb10] sm:$0xff]
    %v793 = vld [vmem:[#allocation8 + $0xb18] sm:$0xff]
    %v794 = vld [vmem:[#allocation8 + $0xb20] sm:$0xff]
    %v795 = vld [vmem:[#allocation8 + $0xb28] sm:$0xff]
    %v796 = vld [vmem:[#allocation8 + $0xb30] sm:$0xff]
    %v797 = vld [vmem:[#allocation8 + $0xb38] sm:$0xff]
    %v798 = vld [vmem:[#allocation8 + $0xb40] sm:$0xff]
    %v799 = vld [vmem:[#allocation8 + $0xb48] sm:$0xff]
    %v800 = vld [vmem:[#allocation8 + $0xb50] sm:$0xff]
    %v801 = vld [vmem:[#allocation8 + $0xb58] sm:$0xff]
    %v802 = vld [vmem:[#allocation8 + $0xb60] sm:$0xff]
    %v803 = vld [vmem:[#allocation8 + $0xb68] sm:$0xff]
    %v804 = vld [vmem:[#allocation8 + $0xb70] sm:$0xff]
    %v805 = vld [vmem:[#allocation8 + $0xb78] sm:$0xff]
    %v806 = vld [vmem:[#allocation8 + $0xb80] sm:$0xff]
    %v807 = vld [vmem:[#allocation8 + $0xb88] sm:$0xff]
    %v808 = vld [vmem:[#allocation8 + $0xb90] sm:$0xff]
    %v809 = vld [vmem:[#allocation8 + $0xb98] sm:$0xff]
    %v810 = vld [vmem:[#allocation8 + $0xba0] sm:$0xff]
    %v811 = vld [vmem:[#allocation8 + $0xba8] sm:$0xff]
    %v812 = vld [vmem:[#allocation8 + $0xbb0] sm:$0xff]
    %v813 = vld [vmem:[#allocation8 + $0xbb8] sm:$0xff]
    %v814 = vld [vmem:[#allocation8 + $0xbc0] sm:$0xff]
    %v815 = vld [vmem:[#allocation8 + $0xbc8] sm:$0xff]
    %v816 = vld [vmem:[#allocation8 + $0xbd0] sm:$0xff]
    %v817 = vld [vmem:[#allocation8 + $0xbd8] sm:$0xff]
    %v818 = vld [vmem:[#allocation8 + $0xbe0] sm:$0xff]
    %v819 = vld [vmem:[#allocation8 + $0xbe8] sm:$0xff]
    %v820 = vld [vmem:[#allocation8 + $0xbf0] sm:$0xff]
    %v821 = vld [vmem:[#allocation8 + $0xbf8] sm:$0xff]
    %v822 = vld [vmem:[#allocation8 + $0xc00] sm:$0xff]
    %v823 = vld [vmem:[#allocation8 + $0xc08] sm:$0xff]
    %v824 = vld [vmem:[#allocation8 + $0xc10] sm:$0xff]
    %v825 = vld [vmem:[#allocation8 + $0xc18] sm:$0xff]
    %v826 = vld [vmem:[#allocation8 + $0xc20] sm:$0xff]
    %v827 = vld [vmem:[#allocation8 + $0xc28] sm:$0xff]
    %v828 = vld [vmem:[#allocation8 + $0xc30] sm:$0xff]
    %v829 = vld [vmem:[#allocation8 + $0xc38] sm:$0xff]
    %v830 = vld [vmem:[#allocation8 + $0xc40] sm:$0xff]
    %v831 = vld [vmem:[#allocation8 + $0xc48] sm:$0xff]
    %v832 = vld [vmem:[#allocation8 + $0xc50] sm:$0xff]
    %v833 = vld [vmem:[#allocation8 + $0xc58] sm:$0xff]
    %v834 = vld [vmem:[#allocation8 + $0xc60] sm:$0xff]
    %v835 = vld [vmem:[#allocation8 + $0xc68] sm:$0xff]
    %v836 = vld [vmem:[#allocation8 + $0xc70] sm:$0xff]
    %v837 = vld [vmem:[#allocation8 + $0xc78] sm:$0xff]
    %v838 = vld [vmem:[#allocation8 + $0xc80] sm:$0xff]
    %v839 = vld [vmem:[#allocation8 + $0xc88] sm:$0xff]
    %v840 = vld [vmem:[#allocation8 + $0xc90] sm:$0xff]
    %v841 = vld [vmem:[#allocation8 + $0xc98] sm:$0xff]
    %v842 = vld [vmem:[#allocation8 + $0xca0] sm:$0xff]
    %v843 = vld [vmem:[#allocation8 + $0xca8] sm:$0xff]
    %v844 = vld [vmem:[#allocation8 + $0xcb0] sm:$0xff]
    %v845 = vld [vmem:[#allocation8 + $0xcb8] sm:$0xff]
    %v846 = vld [vmem:[#allocation8 + $0xcc0] sm:$0xff]
    %v847 = vld [vmem:[#allocation8 + $0xcc8] sm:$0xff]
    %v848 = vld [vmem:[#allocation8 + $0xcd0] sm:$0xff]
    %v849 = vld [vmem:[#allocation8 + $0xcd8] sm:$0xff]
    %v850 = vld [vmem:[#allocation8 + $0xce0] sm:$0xff]
    %v851 = vld [vmem:[#allocation8 + $0xce8] sm:$0xff]
    %v852 = vld [vmem:[#allocation8 + $0xcf0] sm:$0xff]
    %v853 = vld [vmem:[#allocation8 + $0xcf8] sm:$0xff]
    %v854 = vld [vmem:[#allocation8 + $0xd00] sm:$0xff]
    %v855 = vld [vmem:[#allocation8 + $0xd08] sm:$0xff]
    %v856 = vld [vmem:[#allocation8 + $0xd10] sm:$0xff]
    %v857 = vld [vmem:[#allocation8 + $0xd18] sm:$0xff]
    %v858 = vld [vmem:[#allocation8 + $0xd20] sm:$0xff]
    %v859 = vld [vmem:[#allocation8 + $0xd28] sm:$0xff]
    %v860 = vld [vmem:[#allocation8 + $0xd30] sm:$0xff]
    %v861 = vld [vmem:[#allocation8 + $0xd38] sm:$0xff]
    %v862 = vld [vmem:[#allocation8 + $0xd40] sm:$0xff]
    %v863 = vld [vmem:[#allocation8 + $0xd48] sm:$0xff]
    %v864 = vld [vmem:[#allocation8 + $0xd50] sm:$0xff]
    %v865 = vld [vmem:[#allocation8 + $0xd58] sm:$0xff]
    %v866 = vld [vmem:[#allocation8 + $0xd60] sm:$0xff]
    %v867 = vld [vmem:[#allocation8 + $0xd68] sm:$0xff]
    %v868 = vld [vmem:[#allocation8 + $0xd70] sm:$0xff]
    %v869 = vld [vmem:[#allocation8 + $0xd78] sm:$0xff]
    %v870 = vld [vmem:[#allocation8 + $0xd80] sm:$0xff]
    %v871 = vld [vmem:[#allocation8 + $0xd88] sm:$0xff]
    %v872 = vld [vmem:[#allocation8 + $0xd90] sm:$0xff]
    %v873 = vld [vmem:[#allocation8 + $0xd98] sm:$0xff]
    %v874 = vld [vmem:[#allocation8 + $0xda0] sm:$0xff]
    %v875 = vld [vmem:[#allocation8 + $0xda8] sm:$0xff]
    %v876 = vld [vmem:[#allocation8 + $0xdb0] sm:$0xff]
    %v877 = vld [vmem:[#allocation8 + $0xdb8] sm:$0xff]
    %v878 = vld [vmem:[#allocation8 + $0xdc0] sm:$0xff]
    %v879 = vld [vmem:[#allocation8 + $0xdc8] sm:$0xff]
    %v880 = vld [vmem:[#allocation8 + $0xdd0] sm:$0xff]
    %v881 = vld [vmem:[#allocation8 + $0xdd8] sm:$0xff]
    %v882 = vld [vmem:[#allocation8 + $0xde0] sm:$0xff]
    %v883 = vld [vmem:[#allocation8 + $0xde8] sm:$0xff]
    %v884 = vld [vmem:[#allocation8 + $0xdf0] sm:$0xff]
    %v885 = vld [vmem:[#allocation8 + $0xdf8] sm:$0xff]
    %v886 = vld [vmem:[#allocation8 + $0xe00] sm:$0xff]
    %v887 = vld [vmem:[#allocation8 + $0xe08] sm:$0xff]
    %v888 = vld [vmem:[#allocation8 + $0xe10] sm:$0xff]
    %v889 = vld [vmem:[#allocation8 + $0xe18] sm:$0xff]
    %v890 = vld [vmem:[#allocation8 + $0xe20] sm:$0xff]
    %v891 = vld [vmem:[#allocation8 + $0xe28] sm:$0xff]
    %v892 = vld [vmem:[#allocation8 + $0xe30] sm:$0xff]
    %v893 = vld [vmem:[#allocation8 + $0xe38] sm:$0xff]
    %v894 = vld [vmem:[#allocation8 + $0xe40] sm:$0xff]
    %v895 = vld [vmem:[#allocation8 + $0xe48] sm:$0xff]
    %v896 = vld [vmem:[#allocation8 + $0xe50] sm:$0xff]
    %v897 = vld [vmem:[#allocation8 + $0xe58] sm:$0xff]
    %v898 = vld [vmem:[#allocation8 + $0xe60] sm:$0xff]
    %v899 = vld [vmem:[#allocation8 + $0xe68] sm:$0xff]
    %v900 = vld [vmem:[#allocation8 + $0xe70] sm:$0xff]
    %v901 = vld [vmem:[#allocation8 + $0xe78] sm:$0xff]
    %v902 = vld [vmem:[#allocation8 + $0xe80] sm:$0xff]
    %v903 = vld [vmem:[#allocation8 + $0xe88] sm:$0xff]
    %v904 = vld [vmem:[#allocation8 + $0xe90] sm:$0xff]
    %v905 = vld [vmem:[#allocation8 + $0xe98] sm:$0xff]
    %v906 = vld [vmem:[#allocation8 + $0xea0] sm:$0xff]
    %v907 = vld [vmem:[#allocation8 + $0xea8] sm:$0xff]
    %v908 = vld [vmem:[#allocation8 + $0xeb0] sm:$0xff]
    %v909 = vld [vmem:[#allocation8 + $0xeb8] sm:$0xff]
    %v910 = vld [vmem:[#allocation8 + $0xec0] sm:$0xff]
    %v911 = vld [vmem:[#allocation8 + $0xec8] sm:$0xff]
    %v912 = vld [vmem:[#allocation8 + $0xed0] sm:$0xff]
    %v913 = vld [vmem:[#allocation8 + $0xed8] sm:$0xff]
    %v914 = vld [vmem:[#allocation8 + $0xee0] sm:$0xff]
    %v915 = vld [vmem:[#allocation8 + $0xee8] sm:$0xff]
    %v916 = vld [vmem:[#allocation8 + $0xef0] sm:$0xff]
    %v917 = vld [vmem:[#allocation8 + $0xef8] sm:$0xff]
    %v918 = vld [vmem:[#allocation8 + $0xf00] sm:$0xff]
    %v919 = vld [vmem:[#allocation8 + $0xf08] sm:$0xff]
    %v920 = vld [vmem:[#allocation8 + $0xf10] sm:$0xff]
    %v921 = vld [vmem:[#allocation8 + $0xf18] sm:$0xff]
    %v922 = vld [vmem:[#allocation8 + $0xf20] sm:$0xff]
    %v923 = vld [vmem:[#allocation8 + $0xf28] sm:$0xff]
    %v924 = vld [vmem:[#allocation8 + $0xf30] sm:$0xff]
    %v925 = vld [vmem:[#allocation8 + $0xf38] sm:$0xff]
    %v926 = vld [vmem:[#allocation8 + $0xf40] sm:$0xff]
    %v927 = vld [vmem:[#allocation8 + $0xf48] sm:$0xff]
    %v928 = vld [vmem:[#allocation8 + $0xf50] sm:$0xff]
    %v929 = vld [vmem:[#allocation8 + $0xf58] sm:$0xff]
    %v930 = vld [vmem:[#allocation8 + $0xf60] sm:$0xff]
    %v931 = vld [vmem:[#allocation8 + $0xf68] sm:$0xff]
    %v932 = vld [vmem:[#allocation8 + $0xf70] sm:$0xff]
    %v933 = vld [vmem:[#allocation8 + $0xf78] sm:$0xff]
    %v934 = vld [vmem:[#allocation8 + $0xf80] sm:$0xff]
    %v935 = vld [vmem:[#allocation8 + $0xf88] sm:$0xff]
    %v936 = vld [vmem:[#allocation8 + $0xf90] sm:$0xff]
    %v937 = vld [vmem:[#allocation8 + $0xf98] sm:$0xff]
    %v938 = vld [vmem:[#allocation8 + $0xfa0] sm:$0xff]
    %v939 = vld [vmem:[#allocation8 + $0xfa8] sm:$0xff]
    %v940 = vld [vmem:[#allocation8 + $0xfb0] sm:$0xff]
    %v941 = vld [vmem:[#allocation8 + $0xfb8] sm:$0xff]
    %v942 = vld [vmem:[#allocation8 + $0xfc0] sm:$0xff]
    %v943 = vld [vmem:[#allocation8 + $0xfc8] sm:$0xff]
    %v944 = vld [vmem:[#allocation8 + $0xfd0] sm:$0xff]
    %v945 = vld [vmem:[#allocation8 + $0xfd8] sm:$0xff]
    %v946 = vld [vmem:[#allocation8 + $0xfe0] sm:$0xff]
    %v947 = vld [vmem:[#allocation8 + $0xfe8] sm:$0xff]
    %v948 = vld [vmem:[#allocation8 + $0xff0] sm:$0xff]
    %v949 = vld [vmem:[#allocation8 + $0xff8] sm:$0xff]
    %v950 = vld [vmem:[#allocation10] sm:$0xff]
    %v952 = vlaneseq
    %v953 = vshrl.u32 %v952, 7
    %v954 = vsub.s32 0, %v953
    %v955 = vrot.slane %v950, %v954
    %v956 = vlaneseq
    %v957 = vshrl.u32 %v956, 7
    %v958 = vsub.s32 1, %v957
    %v959 = vrot.slane %v950, %v958
    %v960 = vlaneseq
    %v961 = vshrl.u32 %v960, 7
    %v962 = vsub.s32 2, %v961
    %v963 = vrot.slane %v950, %v962
    %v964 = vlaneseq
    %v965 = vshrl.u32 %v964, 7
    %v966 = vsub.s32 3, %v965
    %v967 = vrot.slane %v950, %v966
    %v968 = vlaneseq
    %v969 = vshrl.u32 %v968, 7
    %v970 = vsub.s32 4, %v969
    %v971 = vrot.slane %v950, %v970
    %v972 = vlaneseq
    %v973 = vshrl.u32 %v972, 7
    %v974 = vsub.s32 5, %v973
    %v975 = vrot.slane %v950, %v974
    %v976 = vlaneseq
    %v977 = vshrl.u32 %v976, 7
    %v978 = vsub.s32 6, %v977
    %v979 = vrot.slane %v950, %v978
    %v980 = vlaneseq
    %v981 = vshrl.u32 %v980, 7
    %v982 = vsub.s32 7, %v981
    %v983 = vrot.slane %v950, %v982
    %v1504 = vunpack.c.l.b16 %v438
    %v1505 = vunpack.c.h.b16 %v438
    %v1506 = vunpack.c.l.b16 %v439
    %v1507 = vunpack.c.h.b16 %v439
    %v1508 = vunpack.c.l.b16 %v440
    %v1509 = vunpack.c.h.b16 %v440
    %v1510 = vunpack.c.l.b16 %v441
    %v1511 = vunpack.c.h.b16 %v441
    %v1512 = vunpack.c.l.b16 %v442
    %v1513 = vunpack.c.h.b16 %v442
    %v1514 = vunpack.c.l.b16 %v443
    %v1515 = vunpack.c.h.b16 %v443
    %v1516 = vunpack.c.l.b16 %v444
    %v1517 = vunpack.c.h.b16 %v444
    %v1518 = vunpack.c.l.b16 %v445
    %v1519 = vunpack.c.h.b16 %v445
    %v1520 = vunpack.c.l.b16 %v446
    %v1521 = vunpack.c.h.b16 %v446
    %v1522 = vunpack.c.l.b16 %v447
    %v1523 = vunpack.c.h.b16 %v447
    %v1524 = vunpack.c.l.b16 %v448
    %v1525 = vunpack.c.h.b16 %v448
    %v1526 = vunpack.c.l.b16 %v449
    %v1527 = vunpack.c.h.b16 %v449
    %v1528 = vunpack.c.l.b16 %v450
    %v1529 = vunpack.c.h.b16 %v450
    %v1530 = vunpack.c.l.b16 %v451
    %v1531 = vunpack.c.h.b16 %v451
    %v1532 = vunpack.c.l.b16 %v452
    %v1533 = vunpack.c.h.b16 %v452
    %v1534 = vunpack.c.l.b16 %v453
    %v1535 = vunpack.c.h.b16 %v453
    %v1536 = vunpack.c.l.b16 %v454
    %v1537 = vunpack.c.h.b16 %v454
    %v1538 = vunpack.c.l.b16 %v455
    %v1539 = vunpack.c.h.b16 %v455
    %v1540 = vunpack.c.l.b16 %v456
    %v1541 = vunpack.c.h.b16 %v456
    %v1542 = vunpack.c.l.b16 %v457
    %v1543 = vunpack.c.h.b16 %v457
    %v1544 = vunpack.c.l.b16 %v458
    %v1545 = vunpack.c.h.b16 %v458
    %v1546 = vunpack.c.l.b16 %v459
    %v1547 = vunpack.c.h.b16 %v459
    %v1548 = vunpack.c.l.b16 %v460
    %v1549 = vunpack.c.h.b16 %v460
    %v1550 = vunpack.c.l.b16 %v461
    %v1551 = vunpack.c.h.b16 %v461
    %v1552 = vunpack.c.l.b16 %v462
    %v1553 = vunpack.c.h.b16 %v462
    %v1554 = vunpack.c.l.b16 %v463
    %v1555 = vunpack.c.h.b16 %v463
    %v1556 = vunpack.c.l.b16 %v464
    %v1557 = vunpack.c.h.b16 %v464
    %v1558 = vunpack.c.l.b16 %v465
    %v1559 = vunpack.c.h.b16 %v465
    %v1560 = vunpack.c.l.b16 %v466
    %v1561 = vunpack.c.h.b16 %v466
    %v1562 = vunpack.c.l.b16 %v467
    %v1563 = vunpack.c.h.b16 %v467
    %v1564 = vunpack.c.l.b16 %v468
    %v1565 = vunpack.c.h.b16 %v468
    %v1566 = vunpack.c.l.b16 %v469
    %v1567 = vunpack.c.h.b16 %v469
    %v1568 = vunpack.c.l.b16 %v470
    %v1569 = vunpack.c.h.b16 %v470
    %v1570 = vunpack.c.l.b16 %v471
    %v1571 = vunpack.c.h.b16 %v471
    %v1572 = vunpack.c.l.b16 %v472
    %v1573 = vunpack.c.h.b16 %v472
    %v1574 = vunpack.c.l.b16 %v473
    %v1575 = vunpack.c.h.b16 %v473
    %v1576 = vunpack.c.l.b16 %v474
    %v1577 = vunpack.c.h.b16 %v474
    %v1578 = vunpack.c.l.b16 %v475
    %v1579 = vunpack.c.h.b16 %v475
    %v1580 = vunpack.c.l.b16 %v476
    %v1581 = vunpack.c.h.b16 %v476
    %v1582 = vunpack.c.l.b16 %v477
    %v1583 = vunpack.c.h.b16 %v477
    %v1584 = vunpack.c.l.b16 %v478
    %v1585 = vunpack.c.h.b16 %v478
    %v1586 = vunpack.c.l.b16 %v479
    %v1587 = vunpack.c.h.b16 %v479
    %v1588 = vunpack.c.l.b16 %v480
    %v1589 = vunpack.c.h.b16 %v480
    %v1590 = vunpack.c.l.b16 %v481
    %v1591 = vunpack.c.h.b16 %v481
    %v1592 = vunpack.c.l.b16 %v482
    %v1593 = vunpack.c.h.b16 %v482
    %v1594 = vunpack.c.l.b16 %v483
    %v1595 = vunpack.c.h.b16 %v483
    %v1596 = vunpack.c.l.b16 %v484
    %v1597 = vunpack.c.h.b16 %v484
    %v1598 = vunpack.c.l.b16 %v485
    %v1599 = vunpack.c.h.b16 %v485
    %v1600 = vunpack.c.l.b16 %v486
    %v1601 = vunpack.c.h.b16 %v486
    %v1602 = vunpack.c.l.b16 %v487
    %v1603 = vunpack.c.h.b16 %v487
    %v1604 = vunpack.c.l.b16 %v488
    %v1605 = vunpack.c.h.b16 %v488
    %v1606 = vunpack.c.l.b16 %v489
    %v1607 = vunpack.c.h.b16 %v489
    %v1608 = vunpack.c.l.b16 %v490
    %v1609 = vunpack.c.h.b16 %v490
    %v1610 = vunpack.c.l.b16 %v491
    %v1611 = vunpack.c.h.b16 %v491
    %v1612 = vunpack.c.l.b16 %v492
    %v1613 = vunpack.c.h.b16 %v492
    %v1614 = vunpack.c.l.b16 %v493
    %v1615 = vunpack.c.h.b16 %v493
    %v1616 = vunpack.c.l.b16 %v494
    %v1617 = vunpack.c.h.b16 %v494
    %v1618 = vunpack.c.l.b16 %v495
    %v1619 = vunpack.c.h.b16 %v495
    %v1620 = vunpack.c.l.b16 %v496
    %v1621 = vunpack.c.h.b16 %v496
    %v1622 = vunpack.c.l.b16 %v497
    %v1623 = vunpack.c.h.b16 %v497
    %v1624 = vunpack.c.l.b16 %v498
    %v1625 = vunpack.c.h.b16 %v498
    %v1626 = vunpack.c.l.b16 %v499
    %v1627 = vunpack.c.h.b16 %v499
    %v1628 = vunpack.c.l.b16 %v500
    %v1629 = vunpack.c.h.b16 %v500
    %v1630 = vunpack.c.l.b16 %v501
    %v1631 = vunpack.c.h.b16 %v501
    %v1632 = vunpack.c.l.b16 %v502
    %v1633 = vunpack.c.h.b16 %v502
    %v1634 = vunpack.c.l.b16 %v503
    %v1635 = vunpack.c.h.b16 %v503
    %v1636 = vunpack.c.l.b16 %v504
    %v1637 = vunpack.c.h.b16 %v504
    %v1638 = vunpack.c.l.b16 %v505
    %v1639 = vunpack.c.h.b16 %v505
    %v1640 = vunpack.c.l.b16 %v506
    %v1641 = vunpack.c.h.b16 %v506
    %v1642 = vunpack.c.l.b16 %v507
    %v1643 = vunpack.c.h.b16 %v507
    %v1644 = vunpack.c.l.b16 %v508
    %v1645 = vunpack.c.h.b16 %v508
    %v1646 = vunpack.c.l.b16 %v509
    %v1647 = vunpack.c.h.b16 %v509
    %v1648 = vunpack.c.l.b16 %v510
    %v1649 = vunpack.c.h.b16 %v510
    %v1650 = vunpack.c.l.b16 %v511
    %v1651 = vunpack.c.h.b16 %v511
    %v1652 = vunpack.c.l.b16 %v512
    %v1653 = vunpack.c.h.b16 %v512
    %v1654 = vunpack.c.l.b16 %v513
    %v1655 = vunpack.c.h.b16 %v513
    %v1656 = vunpack.c.l.b16 %v514
    %v1657 = vunpack.c.h.b16 %v514
    %v1658 = vunpack.c.l.b16 %v515
    %v1659 = vunpack.c.h.b16 %v515
    %v1660 = vunpack.c.l.b16 %v516
    %v1661 = vunpack.c.h.b16 %v516
    %v1662 = vunpack.c.l.b16 %v517
    %v1663 = vunpack.c.h.b16 %v517
    %v1664 = vunpack.c.l.b16 %v518
    %v1665 = vunpack.c.h.b16 %v518
    %v1666 = vunpack.c.l.b16 %v519
    %v1667 = vunpack.c.h.b16 %v519
    %v1668 = vunpack.c.l.b16 %v520
    %v1669 = vunpack.c.h.b16 %v520
    %v1670 = vunpack.c.l.b16 %v521
    %v1671 = vunpack.c.h.b16 %v521
    %v1672 = vunpack.c.l.b16 %v522
    %v1673 = vunpack.c.h.b16 %v522
    %v1674 = vunpack.c.l.b16 %v523
    %v1675 = vunpack.c.h.b16 %v523
    %v1676 = vunpack.c.l.b16 %v524
    %v1677 = vunpack.c.h.b16 %v524
    %v1678 = vunpack.c.l.b16 %v525
    %v1679 = vunpack.c.h.b16 %v525
    %v1680 = vunpack.c.l.b16 %v526
    %v1681 = vunpack.c.h.b16 %v526
    %v1682 = vunpack.c.l.b16 %v527
    %v1683 = vunpack.c.h.b16 %v527
    %v1684 = vunpack.c.l.b16 %v528
    %v1685 = vunpack.c.h.b16 %v528
    %v1686 = vunpack.c.l.b16 %v529
    %v1687 = vunpack.c.h.b16 %v529
    %v1688 = vunpack.c.l.b16 %v530
    %v1689 = vunpack.c.h.b16 %v530
    %v1690 = vunpack.c.l.b16 %v531
    %v1691 = vunpack.c.h.b16 %v531
    %v1692 = vunpack.c.l.b16 %v532
    %v1693 = vunpack.c.h.b16 %v532
    %v1694 = vunpack.c.l.b16 %v533
    %v1695 = vunpack.c.h.b16 %v533
    %v1696 = vunpack.c.l.b16 %v534
    %v1697 = vunpack.c.h.b16 %v534
    %v1698 = vunpack.c.l.b16 %v535
    %v1699 = vunpack.c.h.b16 %v535
    %v1700 = vunpack.c.l.b16 %v536
    %v1701 = vunpack.c.h.b16 %v536
    %v1702 = vunpack.c.l.b16 %v537
    %v1703 = vunpack.c.h.b16 %v537
    %v1704 = vunpack.c.l.b16 %v538
    %v1705 = vunpack.c.h.b16 %v538
    %v1706 = vunpack.c.l.b16 %v539
    %v1707 = vunpack.c.h.b16 %v539
    %v1708 = vunpack.c.l.b16 %v540
    %v1709 = vunpack.c.h.b16 %v540
    %v1710 = vunpack.c.l.b16 %v541
    %v1711 = vunpack.c.h.b16 %v541
    %v1712 = vunpack.c.l.b16 %v542
    %v1713 = vunpack.c.h.b16 %v542
    %v1714 = vunpack.c.l.b16 %v543
    %v1715 = vunpack.c.h.b16 %v543
    %v1716 = vunpack.c.l.b16 %v544
    %v1717 = vunpack.c.h.b16 %v544
    %v1718 = vunpack.c.l.b16 %v545
    %v1719 = vunpack.c.h.b16 %v545
    %v1720 = vunpack.c.l.b16 %v546
    %v1721 = vunpack.c.h.b16 %v546
    %v1722 = vunpack.c.l.b16 %v547
    %v1723 = vunpack.c.h.b16 %v547
    %v1724 = vunpack.c.l.b16 %v548
    %v1725 = vunpack.c.h.b16 %v548
    %v1726 = vunpack.c.l.b16 %v549
    %v1727 = vunpack.c.h.b16 %v549
    %v1728 = vunpack.c.l.b16 %v550
    %v1729 = vunpack.c.h.b16 %v550
    %v1730 = vunpack.c.l.b16 %v551
    %v1731 = vunpack.c.h.b16 %v551
    %v1732 = vunpack.c.l.b16 %v552
    %v1733 = vunpack.c.h.b16 %v552
    %v1734 = vunpack.c.l.b16 %v553
    %v1735 = vunpack.c.h.b16 %v553
    %v1736 = vunpack.c.l.b16 %v554
    %v1737 = vunpack.c.h.b16 %v554
    %v1738 = vunpack.c.l.b16 %v555
    %v1739 = vunpack.c.h.b16 %v555
    %v1740 = vunpack.c.l.b16 %v556
    %v1741 = vunpack.c.h.b16 %v556
    %v1742 = vunpack.c.l.b16 %v557
    %v1743 = vunpack.c.h.b16 %v557
    %v1744 = vunpack.c.l.b16 %v558
    %v1745 = vunpack.c.h.b16 %v558
    %v1746 = vunpack.c.l.b16 %v559
    %v1747 = vunpack.c.h.b16 %v559
    %v1748 = vunpack.c.l.b16 %v560
    %v1749 = vunpack.c.h.b16 %v560
    %v1750 = vunpack.c.l.b16 %v561
    %v1751 = vunpack.c.h.b16 %v561
    %v1752 = vunpack.c.l.b16 %v562
    %v1753 = vunpack.c.h.b16 %v562
    %v1754 = vunpack.c.l.b16 %v563
    %v1755 = vunpack.c.h.b16 %v563
    %v1756 = vunpack.c.l.b16 %v564
    %v1757 = vunpack.c.h.b16 %v564
    %v1758 = vunpack.c.l.b16 %v565
    %v1759 = vunpack.c.h.b16 %v565
    %v1760 = vunpack.c.l.b16 %v566
    %v1761 = vunpack.c.h.b16 %v566
    %v1762 = vunpack.c.l.b16 %v567
    %v1763 = vunpack.c.h.b16 %v567
    %v1764 = vunpack.c.l.b16 %v568
    %v1765 = vunpack.c.h.b16 %v568
    %v1766 = vunpack.c.l.b16 %v569
    %v1767 = vunpack.c.h.b16 %v569
    %v1768 = vunpack.c.l.b16 %v570
    %v1769 = vunpack.c.h.b16 %v570
    %v1770 = vunpack.c.l.b16 %v571
    %v1771 = vunpack.c.h.b16 %v571
    %v1772 = vunpack.c.l.b16 %v572
    %v1773 = vunpack.c.h.b16 %v572
    %v1774 = vunpack.c.l.b16 %v573
    %v1775 = vunpack.c.h.b16 %v573
    %v1776 = vunpack.c.l.b16 %v574
    %v1777 = vunpack.c.h.b16 %v574
    %v1778 = vunpack.c.l.b16 %v575
    %v1779 = vunpack.c.h.b16 %v575
    %v1780 = vunpack.c.l.b16 %v576
    %v1781 = vunpack.c.h.b16 %v576
    %v1782 = vunpack.c.l.b16 %v577
    %v1783 = vunpack.c.h.b16 %v577
    %v1784 = vunpack.c.l.b16 %v578
    %v1785 = vunpack.c.h.b16 %v578
    %v1786 = vunpack.c.l.b16 %v579
    %v1787 = vunpack.c.h.b16 %v579
    %v1788 = vunpack.c.l.b16 %v580
    %v1789 = vunpack.c.h.b16 %v580
    %v1790 = vunpack.c.l.b16 %v581
    %v1791 = vunpack.c.h.b16 %v581
    %v1792 = vunpack.c.l.b16 %v582
    %v1793 = vunpack.c.h.b16 %v582
    %v1794 = vunpack.c.l.b16 %v583
    %v1795 = vunpack.c.h.b16 %v583
    %v1796 = vunpack.c.l.b16 %v584
    %v1797 = vunpack.c.h.b16 %v584
    %v1798 = vunpack.c.l.b16 %v585
    %v1799 = vunpack.c.h.b16 %v585
    %v1800 = vunpack.c.l.b16 %v586
    %v1801 = vunpack.c.h.b16 %v586
    %v1802 = vunpack.c.l.b16 %v587
    %v1803 = vunpack.c.h.b16 %v587
    %v1804 = vunpack.c.l.b16 %v588
    %v1805 = vunpack.c.h.b16 %v588
    %v1806 = vunpack.c.l.b16 %v589
    %v1807 = vunpack.c.h.b16 %v589
    %v1808 = vunpack.c.l.b16 %v590
    %v1809 = vunpack.c.h.b16 %v590
    %v1810 = vunpack.c.l.b16 %v591
    %v1811 = vunpack.c.h.b16 %v591
    %v1812 = vunpack.c.l.b16 %v592
    %v1813 = vunpack.c.h.b16 %v592
    %v1814 = vunpack.c.l.b16 %v593
    %v1815 = vunpack.c.h.b16 %v593
    %v1816 = vunpack.c.l.b16 %v594
    %v1817 = vunpack.c.h.b16 %v594
    %v1818 = vunpack.c.l.b16 %v595
    %v1819 = vunpack.c.h.b16 %v595
    %v1820 = vunpack.c.l.b16 %v596
    %v1821 = vunpack.c.h.b16 %v596
    %v1822 = vunpack.c.l.b16 %v597
    %v1823 = vunpack.c.h.b16 %v597
    %v1824 = vunpack.c.l.b16 %v598
    %v1825 = vunpack.c.h.b16 %v598
    %v1826 = vunpack.c.l.b16 %v599
    %v1827 = vunpack.c.h.b16 %v599
    %v1828 = vunpack.c.l.b16 %v600
    %v1829 = vunpack.c.h.b16 %v600
    %v1830 = vunpack.c.l.b16 %v601
    %v1831 = vunpack.c.h.b16 %v601
    %v1832 = vunpack.c.l.b16 %v602
    %v1833 = vunpack.c.h.b16 %v602
    %v1834 = vunpack.c.l.b16 %v603
    %v1835 = vunpack.c.h.b16 %v603
    %v1836 = vunpack.c.l.b16 %v604
    %v1837 = vunpack.c.h.b16 %v604
    %v1838 = vunpack.c.l.b16 %v605
    %v1839 = vunpack.c.h.b16 %v605
    %v1840 = vunpack.c.l.b16 %v606
    %v1841 = vunpack.c.h.b16 %v606
    %v1842 = vunpack.c.l.b16 %v607
    %v1843 = vunpack.c.h.b16 %v607
    %v1844 = vunpack.c.l.b16 %v608
    %v1845 = vunpack.c.h.b16 %v608
    %v1846 = vunpack.c.l.b16 %v609
    %v1847 = vunpack.c.h.b16 %v609
    %v1848 = vunpack.c.l.b16 %v610
    %v1849 = vunpack.c.h.b16 %v610
    %v1850 = vunpack.c.l.b16 %v611
    %v1851 = vunpack.c.h.b16 %v611
    %v1852 = vunpack.c.l.b16 %v612
    %v1853 = vunpack.c.h.b16 %v612
    %v1854 = vunpack.c.l.b16 %v613
    %v1855 = vunpack.c.h.b16 %v613
    %v1856 = vunpack.c.l.b16 %v614
    %v1857 = vunpack.c.h.b16 %v614
    %v1858 = vunpack.c.l.b16 %v615
    %v1859 = vunpack.c.h.b16 %v615
    %v1860 = vunpack.c.l.b16 %v616
    %v1861 = vunpack.c.h.b16 %v616
    %v1862 = vunpack.c.l.b16 %v617
    %v1863 = vunpack.c.h.b16 %v617
    %v1864 = vunpack.c.l.b16 %v618
    %v1865 = vunpack.c.h.b16 %v618
    %v1866 = vunpack.c.l.b16 %v619
    %v1867 = vunpack.c.h.b16 %v619
    %v1868 = vunpack.c.l.b16 %v620
    %v1869 = vunpack.c.h.b16 %v620
    %v1870 = vunpack.c.l.b16 %v621
    %v1871 = vunpack.c.h.b16 %v621
    %v1872 = vunpack.c.l.b16 %v622
    %v1873 = vunpack.c.h.b16 %v622
    %v1874 = vunpack.c.l.b16 %v623
    %v1875 = vunpack.c.h.b16 %v623
    %v1876 = vunpack.c.l.b16 %v624
    %v1877 = vunpack.c.h.b16 %v624
    %v1878 = vunpack.c.l.b16 %v625
    %v1879 = vunpack.c.h.b16 %v625
    %v1880 = vunpack.c.l.b16 %v626
    %v1881 = vunpack.c.h.b16 %v626
    %v1882 = vunpack.c.l.b16 %v627
    %v1883 = vunpack.c.h.b16 %v627
    %v1884 = vunpack.c.l.b16 %v628
    %v1885 = vunpack.c.h.b16 %v628
    %v1886 = vunpack.c.l.b16 %v629
    %v1887 = vunpack.c.h.b16 %v629
    %v1888 = vunpack.c.l.b16 %v630
    %v1889 = vunpack.c.h.b16 %v630
    %v1890 = vunpack.c.l.b16 %v631
    %v1891 = vunpack.c.h.b16 %v631
    %v1892 = vunpack.c.l.b16 %v632
    %v1893 = vunpack.c.h.b16 %v632
    %v1894 = vunpack.c.l.b16 %v633
    %v1895 = vunpack.c.h.b16 %v633
    %v1896 = vunpack.c.l.b16 %v634
    %v1897 = vunpack.c.h.b16 %v634
    %v1898 = vunpack.c.l.b16 %v635
    %v1899 = vunpack.c.h.b16 %v635
    %v1900 = vunpack.c.l.b16 %v636
    %v1901 = vunpack.c.h.b16 %v636
    %v1902 = vunpack.c.l.b16 %v637
    %v1903 = vunpack.c.h.b16 %v637
    %v1904 = vunpack.c.l.b16 %v638
    %v1905 = vunpack.c.h.b16 %v638
    %v1906 = vunpack.c.l.b16 %v639
    %v1907 = vunpack.c.h.b16 %v639
    %v1908 = vunpack.c.l.b16 %v640
    %v1909 = vunpack.c.h.b16 %v640
    %v1910 = vunpack.c.l.b16 %v641
    %v1911 = vunpack.c.h.b16 %v641
    %v1912 = vunpack.c.l.b16 %v642
    %v1913 = vunpack.c.h.b16 %v642
    %v1914 = vunpack.c.l.b16 %v643
    %v1915 = vunpack.c.h.b16 %v643
    %v1916 = vunpack.c.l.b16 %v644
    %v1917 = vunpack.c.h.b16 %v644
    %v1918 = vunpack.c.l.b16 %v645
    %v1919 = vunpack.c.h.b16 %v645
    %v1920 = vunpack.c.l.b16 %v646
    %v1921 = vunpack.c.h.b16 %v646
    %v1922 = vunpack.c.l.b16 %v647
    %v1923 = vunpack.c.h.b16 %v647
    %v1924 = vunpack.c.l.b16 %v648
    %v1925 = vunpack.c.h.b16 %v648
    %v1926 = vunpack.c.l.b16 %v649
    %v1927 = vunpack.c.h.b16 %v649
    %v1928 = vunpack.c.l.b16 %v650
    %v1929 = vunpack.c.h.b16 %v650
    %v1930 = vunpack.c.l.b16 %v651
    %v1931 = vunpack.c.h.b16 %v651
    %v1932 = vunpack.c.l.b16 %v652
    %v1933 = vunpack.c.h.b16 %v652
    %v1934 = vunpack.c.l.b16 %v653
    %v1935 = vunpack.c.h.b16 %v653
    %v1936 = vunpack.c.l.b16 %v654
    %v1937 = vunpack.c.h.b16 %v654
    %v1938 = vunpack.c.l.b16 %v655
    %v1939 = vunpack.c.h.b16 %v655
    %v1940 = vunpack.c.l.b16 %v656
    %v1941 = vunpack.c.h.b16 %v656
    %v1942 = vunpack.c.l.b16 %v657
    %v1943 = vunpack.c.h.b16 %v657
    %v1944 = vunpack.c.l.b16 %v658
    %v1945 = vunpack.c.h.b16 %v658
    %v1946 = vunpack.c.l.b16 %v659
    %v1947 = vunpack.c.h.b16 %v659
    %v1948 = vunpack.c.l.b16 %v660
    %v1949 = vunpack.c.h.b16 %v660
    %v1950 = vunpack.c.l.b16 %v661
    %v1951 = vunpack.c.h.b16 %v661
    %v1952 = vunpack.c.l.b16 %v662
    %v1953 = vunpack.c.h.b16 %v662
    %v1954 = vunpack.c.l.b16 %v663
    %v1955 = vunpack.c.h.b16 %v663
    %v1956 = vunpack.c.l.b16 %v664
    %v1957 = vunpack.c.h.b16 %v664
    %v1958 = vunpack.c.l.b16 %v665
    %v1959 = vunpack.c.h.b16 %v665
    %v1960 = vunpack.c.l.b16 %v666
    %v1961 = vunpack.c.h.b16 %v666
    %v1962 = vunpack.c.l.b16 %v667
    %v1963 = vunpack.c.h.b16 %v667
    %v1964 = vunpack.c.l.b16 %v668
    %v1965 = vunpack.c.h.b16 %v668
    %v1966 = vunpack.c.l.b16 %v669
    %v1967 = vunpack.c.h.b16 %v669
    %v1968 = vunpack.c.l.b16 %v670
    %v1969 = vunpack.c.h.b16 %v670
    %v1970 = vunpack.c.l.b16 %v671
    %v1971 = vunpack.c.h.b16 %v671
    %v1972 = vunpack.c.l.b16 %v672
    %v1973 = vunpack.c.h.b16 %v672
    %v1974 = vunpack.c.l.b16 %v673
    %v1975 = vunpack.c.h.b16 %v673
    %v1976 = vunpack.c.l.b16 %v674
    %v1977 = vunpack.c.h.b16 %v674
    %v1978 = vunpack.c.l.b16 %v675
    %v1979 = vunpack.c.h.b16 %v675
    %v1980 = vunpack.c.l.b16 %v676
    %v1981 = vunpack.c.h.b16 %v676
    %v1982 = vunpack.c.l.b16 %v677
    %v1983 = vunpack.c.h.b16 %v677
    %v1984 = vunpack.c.l.b16 %v678
    %v1985 = vunpack.c.h.b16 %v678
    %v1986 = vunpack.c.l.b16 %v679
    %v1987 = vunpack.c.h.b16 %v679
    %v1988 = vunpack.c.l.b16 %v680
    %v1989 = vunpack.c.h.b16 %v680
    %v1990 = vunpack.c.l.b16 %v681
    %v1991 = vunpack.c.h.b16 %v681
    %v1992 = vunpack.c.l.b16 %v682
    %v1993 = vunpack.c.h.b16 %v682
    %v1994 = vunpack.c.l.b16 %v683
    %v1995 = vunpack.c.h.b16 %v683
    %v1996 = vunpack.c.l.b16 %v684
    %v1997 = vunpack.c.h.b16 %v684
    %v1998 = vunpack.c.l.b16 %v685
    %v1999 = vunpack.c.h.b16 %v685
    %v2000 = vunpack.c.l.b16 %v686
    %v2001 = vunpack.c.h.b16 %v686
    %v2002 = vunpack.c.l.b16 %v687
    %v2003 = vunpack.c.h.b16 %v687
    %v2004 = vunpack.c.l.b16 %v688
    %v2005 = vunpack.c.h.b16 %v688
    %v2006 = vunpack.c.l.b16 %v689
    %v2007 = vunpack.c.h.b16 %v689
    %v2008 = vunpack.c.l.b16 %v690
    %v2009 = vunpack.c.h.b16 %v690
    %v2010 = vunpack.c.l.b16 %v691
    %v2011 = vunpack.c.h.b16 %v691
    %v2012 = vunpack.c.l.b16 %v692
    %v2013 = vunpack.c.h.b16 %v692
    %v2014 = vunpack.c.l.b16 %v693
    %v2015 = vunpack.c.h.b16 %v693
    %v2016 = vunpack.c.l.b16 %v694
    %v2017 = vunpack.c.h.b16 %v694
    %v2018 = vunpack.c.l.b16 %v695
    %v2019 = vunpack.c.h.b16 %v695
    %v2020 = vunpack.c.l.b16 %v696
    %v2021 = vunpack.c.h.b16 %v696
    %v2022 = vunpack.c.l.b16 %v697
    %v2023 = vunpack.c.h.b16 %v697
    %v2024 = vunpack.c.l.b16 %v698
    %v2025 = vunpack.c.h.b16 %v698
    %v2026 = vunpack.c.l.b16 %v699
    %v2027 = vunpack.c.h.b16 %v699
    %v2028 = vunpack.c.l.b16 %v700
    %v2029 = vunpack.c.h.b16 %v700
    %v2030 = vunpack.c.l.b16 %v701
    %v2031 = vunpack.c.h.b16 %v701
    %v2032 = vunpack.c.l.b16 %v702
    %v2033 = vunpack.c.h.b16 %v702
    %v2034 = vunpack.c.l.b16 %v703
    %v2035 = vunpack.c.h.b16 %v703
    %v2036 = vunpack.c.l.b16 %v704
    %v2037 = vunpack.c.h.b16 %v704
    %v2038 = vunpack.c.l.b16 %v705
    %v2039 = vunpack.c.h.b16 %v705
    %v2040 = vunpack.c.l.b16 %v706
    %v2041 = vunpack.c.h.b16 %v706
    %v2042 = vunpack.c.l.b16 %v707
    %v2043 = vunpack.c.h.b16 %v707
    %v2044 = vunpack.c.l.b16 %v708
    %v2045 = vunpack.c.h.b16 %v708
    %v2046 = vunpack.c.l.b16 %v709
    %v2047 = vunpack.c.h.b16 %v709
    %v2048 = vunpack.c.l.b16 %v710
    %v2049 = vunpack.c.h.b16 %v710
    %v2050 = vunpack.c.l.b16 %v711
    %v2051 = vunpack.c.h.b16 %v711
    %v2052 = vunpack.c.l.b16 %v712
    %v2053 = vunpack.c.h.b16 %v712
    %v2054 = vunpack.c.l.b16 %v713
    %v2055 = vunpack.c.h.b16 %v713
    %v2056 = vunpack.c.l.b16 %v714
    %v2057 = vunpack.c.h.b16 %v714
    %v2058 = vunpack.c.l.b16 %v715
    %v2059 = vunpack.c.h.b16 %v715
    %v2060 = vunpack.c.l.b16 %v716
    %v2061 = vunpack.c.h.b16 %v716
    %v2062 = vunpack.c.l.b16 %v717
    %v2063 = vunpack.c.h.b16 %v717
    %v2064 = vunpack.c.l.b16 %v718
    %v2065 = vunpack.c.h.b16 %v718
    %v2066 = vunpack.c.l.b16 %v719
    %v2067 = vunpack.c.h.b16 %v719
    %v2068 = vunpack.c.l.b16 %v720
    %v2069 = vunpack.c.h.b16 %v720
    %v2070 = vunpack.c.l.b16 %v721
    %v2071 = vunpack.c.h.b16 %v721
    %v2072 = vunpack.c.l.b16 %v722
    %v2073 = vunpack.c.h.b16 %v722
    %v2074 = vunpack.c.l.b16 %v723
    %v2075 = vunpack.c.h.b16 %v723
    %v2076 = vunpack.c.l.b16 %v724
    %v2077 = vunpack.c.h.b16 %v724
    %v2078 = vunpack.c.l.b16 %v725
    %v2079 = vunpack.c.h.b16 %v725
    %v2080 = vunpack.c.l.b16 %v726
    %v2081 = vunpack.c.h.b16 %v726
    %v2082 = vunpack.c.l.b16 %v727
    %v2083 = vunpack.c.h.b16 %v727
    %v2084 = vunpack.c.l.b16 %v728
    %v2085 = vunpack.c.h.b16 %v728
    %v2086 = vunpack.c.l.b16 %v729
    %v2087 = vunpack.c.h.b16 %v729
    %v2088 = vunpack.c.l.b16 %v730
    %v2089 = vunpack.c.h.b16 %v730
    %v2090 = vunpack.c.l.b16 %v731
    %v2091 = vunpack.c.h.b16 %v731
    %v2092 = vunpack.c.l.b16 %v732
    %v2093 = vunpack.c.h.b16 %v732
    %v2094 = vunpack.c.l.b16 %v733
    %v2095 = vunpack.c.h.b16 %v733
    %v2096 = vunpack.c.l.b16 %v734
    %v2097 = vunpack.c.h.b16 %v734
    %v2098 = vunpack.c.l.b16 %v735
    %v2099 = vunpack.c.h.b16 %v735
    %v2100 = vunpack.c.l.b16 %v736
    %v2101 = vunpack.c.h.b16 %v736
    %v2102 = vunpack.c.l.b16 %v737
    %v2103 = vunpack.c.h.b16 %v737
    %v2104 = vunpack.c.l.b16 %v738
    %v2105 = vunpack.c.h.b16 %v738
    %v2106 = vunpack.c.l.b16 %v739
    %v2107 = vunpack.c.h.b16 %v739
    %v2108 = vunpack.c.l.b16 %v740
    %v2109 = vunpack.c.h.b16 %v740
    %v2110 = vunpack.c.l.b16 %v741
    %v2111 = vunpack.c.h.b16 %v741
    %v2112 = vunpack.c.l.b16 %v742
    %v2113 = vunpack.c.h.b16 %v742
    %v2114 = vunpack.c.l.b16 %v743
    %v2115 = vunpack.c.h.b16 %v743
    %v2116 = vunpack.c.l.b16 %v744
    %v2117 = vunpack.c.h.b16 %v744
    %v2118 = vunpack.c.l.b16 %v745
    %v2119 = vunpack.c.h.b16 %v745
    %v2120 = vunpack.c.l.b16 %v746
    %v2121 = vunpack.c.h.b16 %v746
    %v2122 = vunpack.c.l.b16 %v747
    %v2123 = vunpack.c.h.b16 %v747
    %v2124 = vunpack.c.l.b16 %v748
    %v2125 = vunpack.c.h.b16 %v748
    %v2126 = vunpack.c.l.b16 %v749
    %v2127 = vunpack.c.h.b16 %v749
    %v2128 = vunpack.c.l.b16 %v750
    %v2129 = vunpack.c.h.b16 %v750
    %v2130 = vunpack.c.l.b16 %v751
    %v2131 = vunpack.c.h.b16 %v751
    %v2132 = vunpack.c.l.b16 %v752
    %v2133 = vunpack.c.h.b16 %v752
    %v2134 = vunpack.c.l.b16 %v753
    %v2135 = vunpack.c.h.b16 %v753
    %v2136 = vunpack.c.l.b16 %v754
    %v2137 = vunpack.c.h.b16 %v754
    %v2138 = vunpack.c.l.b16 %v755
    %v2139 = vunpack.c.h.b16 %v755
    %v2140 = vunpack.c.l.b16 %v756
    %v2141 = vunpack.c.h.b16 %v756
    %v2142 = vunpack.c.l.b16 %v757
    %v2143 = vunpack.c.h.b16 %v757
    %v2144 = vunpack.c.l.b16 %v758
    %v2145 = vunpack.c.h.b16 %v758
    %v2146 = vunpack.c.l.b16 %v759
    %v2147 = vunpack.c.h.b16 %v759
    %v2148 = vunpack.c.l.b16 %v760
    %v2149 = vunpack.c.h.b16 %v760
    %v2150 = vunpack.c.l.b16 %v761
    %v2151 = vunpack.c.h.b16 %v761
    %v2152 = vunpack.c.l.b16 %v762
    %v2153 = vunpack.c.h.b16 %v762
    %v2154 = vunpack.c.l.b16 %v763
    %v2155 = vunpack.c.h.b16 %v763
    %v2156 = vunpack.c.l.b16 %v764
    %v2157 = vunpack.c.h.b16 %v764
    %v2158 = vunpack.c.l.b16 %v765
    %v2159 = vunpack.c.h.b16 %v765
    %v2160 = vunpack.c.l.b16 %v766
    %v2161 = vunpack.c.h.b16 %v766
    %v2162 = vunpack.c.l.b16 %v767
    %v2163 = vunpack.c.h.b16 %v767
    %v2164 = vunpack.c.l.b16 %v768
    %v2165 = vunpack.c.h.b16 %v768
    %v2166 = vunpack.c.l.b16 %v769
    %v2167 = vunpack.c.h.b16 %v769
    %v2168 = vunpack.c.l.b16 %v770
    %v2169 = vunpack.c.h.b16 %v770
    %v2170 = vunpack.c.l.b16 %v771
    %v2171 = vunpack.c.h.b16 %v771
    %v2172 = vunpack.c.l.b16 %v772
    %v2173 = vunpack.c.h.b16 %v772
    %v2174 = vunpack.c.l.b16 %v773
    %v2175 = vunpack.c.h.b16 %v773
    %v2176 = vunpack.c.l.b16 %v774
    %v2177 = vunpack.c.h.b16 %v774
    %v2178 = vunpack.c.l.b16 %v775
    %v2179 = vunpack.c.h.b16 %v775
    %v2180 = vunpack.c.l.b16 %v776
    %v2181 = vunpack.c.h.b16 %v776
    %v2182 = vunpack.c.l.b16 %v777
    %v2183 = vunpack.c.h.b16 %v777
    %v2184 = vunpack.c.l.b16 %v778
    %v2185 = vunpack.c.h.b16 %v778
    %v2186 = vunpack.c.l.b16 %v779
    %v2187 = vunpack.c.h.b16 %v779
    %v2188 = vunpack.c.l.b16 %v780
    %v2189 = vunpack.c.h.b16 %v780
    %v2190 = vunpack.c.l.b16 %v781
    %v2191 = vunpack.c.h.b16 %v781
    %v2192 = vunpack.c.l.b16 %v782
    %v2193 = vunpack.c.h.b16 %v782
    %v2194 = vunpack.c.l.b16 %v783
    %v2195 = vunpack.c.h.b16 %v783
    %v2196 = vunpack.c.l.b16 %v784
    %v2197 = vunpack.c.h.b16 %v784
    %v2198 = vunpack.c.l.b16 %v785
    %v2199 = vunpack.c.h.b16 %v785
    %v2200 = vunpack.c.l.b16 %v786
    %v2201 = vunpack.c.h.b16 %v786
    %v2202 = vunpack.c.l.b16 %v787
    %v2203 = vunpack.c.h.b16 %v787
    %v2204 = vunpack.c.l.b16 %v788
    %v2205 = vunpack.c.h.b16 %v788
    %v2206 = vunpack.c.l.b16 %v789
    %v2207 = vunpack.c.h.b16 %v789
    %v2208 = vunpack.c.l.b16 %v790
    %v2209 = vunpack.c.h.b16 %v790
    %v2210 = vunpack.c.l.b16 %v791
    %v2211 = vunpack.c.h.b16 %v791
    %v2212 = vunpack.c.l.b16 %v792
    %v2213 = vunpack.c.h.b16 %v792
    %v2214 = vunpack.c.l.b16 %v793
    %v2215 = vunpack.c.h.b16 %v793
    %v2216 = vunpack.c.l.b16 %v794
    %v2217 = vunpack.c.h.b16 %v794
    %v2218 = vunpack.c.l.b16 %v795
    %v2219 = vunpack.c.h.b16 %v795
    %v2220 = vunpack.c.l.b16 %v796
    %v2221 = vunpack.c.h.b16 %v796
    %v2222 = vunpack.c.l.b16 %v797
    %v2223 = vunpack.c.h.b16 %v797
    %v2224 = vunpack.c.l.b16 %v798
    %v2225 = vunpack.c.h.b16 %v798
    %v2226 = vunpack.c.l.b16 %v799
    %v2227 = vunpack.c.h.b16 %v799
    %v2228 = vunpack.c.l.b16 %v800
    %v2229 = vunpack.c.h.b16 %v800
    %v2230 = vunpack.c.l.b16 %v801
    %v2231 = vunpack.c.h.b16 %v801
    %v2232 = vunpack.c.l.b16 %v802
    %v2233 = vunpack.c.h.b16 %v802
    %v2234 = vunpack.c.l.b16 %v803
    %v2235 = vunpack.c.h.b16 %v803
    %v2236 = vunpack.c.l.b16 %v804
    %v2237 = vunpack.c.h.b16 %v804
    %v2238 = vunpack.c.l.b16 %v805
    %v2239 = vunpack.c.h.b16 %v805
    %v2240 = vunpack.c.l.b16 %v806
    %v2241 = vunpack.c.h.b16 %v806
    %v2242 = vunpack.c.l.b16 %v807
    %v2243 = vunpack.c.h.b16 %v807
    %v2244 = vunpack.c.l.b16 %v808
    %v2245 = vunpack.c.h.b16 %v808
    %v2246 = vunpack.c.l.b16 %v809
    %v2247 = vunpack.c.h.b16 %v809
    %v2248 = vunpack.c.l.b16 %v810
    %v2249 = vunpack.c.h.b16 %v810
    %v2250 = vunpack.c.l.b16 %v811
    %v2251 = vunpack.c.h.b16 %v811
    %v2252 = vunpack.c.l.b16 %v812
    %v2253 = vunpack.c.h.b16 %v812
    %v2254 = vunpack.c.l.b16 %v813
    %v2255 = vunpack.c.h.b16 %v813
    %v2256 = vunpack.c.l.b16 %v814
    %v2257 = vunpack.c.h.b16 %v814
    %v2258 = vunpack.c.l.b16 %v815
    %v2259 = vunpack.c.h.b16 %v815
    %v2260 = vunpack.c.l.b16 %v816
    %v2261 = vunpack.c.h.b16 %v816
    %v2262 = vunpack.c.l.b16 %v817
    %v2263 = vunpack.c.h.b16 %v817
    %v2264 = vunpack.c.l.b16 %v818
    %v2265 = vunpack.c.h.b16 %v818
    %v2266 = vunpack.c.l.b16 %v819
    %v2267 = vunpack.c.h.b16 %v819
    %v2268 = vunpack.c.l.b16 %v820
    %v2269 = vunpack.c.h.b16 %v820
    %v2270 = vunpack.c.l.b16 %v821
    %v2271 = vunpack.c.h.b16 %v821
    %v2272 = vunpack.c.l.b16 %v822
    %v2273 = vunpack.c.h.b16 %v822
    %v2274 = vunpack.c.l.b16 %v823
    %v2275 = vunpack.c.h.b16 %v823
    %v2276 = vunpack.c.l.b16 %v824
    %v2277 = vunpack.c.h.b16 %v824
    %v2278 = vunpack.c.l.b16 %v825
    %v2279 = vunpack.c.h.b16 %v825
    %v2280 = vunpack.c.l.b16 %v826
    %v2281 = vunpack.c.h.b16 %v826
    %v2282 = vunpack.c.l.b16 %v827
    %v2283 = vunpack.c.h.b16 %v827
    %v2284 = vunpack.c.l.b16 %v828
    %v2285 = vunpack.c.h.b16 %v828
    %v2286 = vunpack.c.l.b16 %v829
    %v2287 = vunpack.c.h.b16 %v829
    %v2288 = vunpack.c.l.b16 %v830
    %v2289 = vunpack.c.h.b16 %v830
    %v2290 = vunpack.c.l.b16 %v831
    %v2291 = vunpack.c.h.b16 %v831
    %v2292 = vunpack.c.l.b16 %v832
    %v2293 = vunpack.c.h.b16 %v832
    %v2294 = vunpack.c.l.b16 %v833
    %v2295 = vunpack.c.h.b16 %v833
    %v2296 = vunpack.c.l.b16 %v834
    %v2297 = vunpack.c.h.b16 %v834
    %v2298 = vunpack.c.l.b16 %v835
    %v2299 = vunpack.c.h.b16 %v835
    %v2300 = vunpack.c.l.b16 %v836
    %v2301 = vunpack.c.h.b16 %v836
    %v2302 = vunpack.c.l.b16 %v837
    %v2303 = vunpack.c.h.b16 %v837
    %v2304 = vunpack.c.l.b16 %v838
    %v2305 = vunpack.c.h.b16 %v838
    %v2306 = vunpack.c.l.b16 %v839
    %v2307 = vunpack.c.h.b16 %v839
    %v2308 = vunpack.c.l.b16 %v840
    %v2309 = vunpack.c.h.b16 %v840
    %v2310 = vunpack.c.l.b16 %v841
    %v2311 = vunpack.c.h.b16 %v841
    %v2312 = vunpack.c.l.b16 %v842
    %v2313 = vunpack.c.h.b16 %v842
    %v2314 = vunpack.c.l.b16 %v843
    %v2315 = vunpack.c.h.b16 %v843
    %v2316 = vunpack.c.l.b16 %v844
    %v2317 = vunpack.c.h.b16 %v844
    %v2318 = vunpack.c.l.b16 %v845
    %v2319 = vunpack.c.h.b16 %v845
    %v2320 = vunpack.c.l.b16 %v846
    %v2321 = vunpack.c.h.b16 %v846
    %v2322 = vunpack.c.l.b16 %v847
    %v2323 = vunpack.c.h.b16 %v847
    %v2324 = vunpack.c.l.b16 %v848
    %v2325 = vunpack.c.h.b16 %v848
    %v2326 = vunpack.c.l.b16 %v849
    %v2327 = vunpack.c.h.b16 %v849
    %v2328 = vunpack.c.l.b16 %v850
    %v2329 = vunpack.c.h.b16 %v850
    %v2330 = vunpack.c.l.b16 %v851
    %v2331 = vunpack.c.h.b16 %v851
    %v2332 = vunpack.c.l.b16 %v852
    %v2333 = vunpack.c.h.b16 %v852
    %v2334 = vunpack.c.l.b16 %v853
    %v2335 = vunpack.c.h.b16 %v853
    %v2336 = vunpack.c.l.b16 %v854
    %v2337 = vunpack.c.h.b16 %v854
    %v2338 = vunpack.c.l.b16 %v855
    %v2339 = vunpack.c.h.b16 %v855
    %v2340 = vunpack.c.l.b16 %v856
    %v2341 = vunpack.c.h.b16 %v856
    %v2342 = vunpack.c.l.b16 %v857
    %v2343 = vunpack.c.h.b16 %v857
    %v2344 = vunpack.c.l.b16 %v858
    %v2345 = vunpack.c.h.b16 %v858
    %v2346 = vunpack.c.l.b16 %v859
    %v2347 = vunpack.c.h.b16 %v859
    %v2348 = vunpack.c.l.b16 %v860
    %v2349 = vunpack.c.h.b16 %v860
    %v2350 = vunpack.c.l.b16 %v861
    %v2351 = vunpack.c.h.b16 %v861
    %v2352 = vunpack.c.l.b16 %v862
    %v2353 = vunpack.c.h.b16 %v862
    %v2354 = vunpack.c.l.b16 %v863
    %v2355 = vunpack.c.h.b16 %v863
    %v2356 = vunpack.c.l.b16 %v864
    %v2357 = vunpack.c.h.b16 %v864
    %v2358 = vunpack.c.l.b16 %v865
    %v2359 = vunpack.c.h.b16 %v865
    %v2360 = vunpack.c.l.b16 %v866
    %v2361 = vunpack.c.h.b16 %v866
    %v2362 = vunpack.c.l.b16 %v867
    %v2363 = vunpack.c.h.b16 %v867
    %v2364 = vunpack.c.l.b16 %v868
    %v2365 = vunpack.c.h.b16 %v868
    %v2366 = vunpack.c.l.b16 %v869
    %v2367 = vunpack.c.h.b16 %v869
    %v2368 = vunpack.c.l.b16 %v870
    %v2369 = vunpack.c.h.b16 %v870
    %v2370 = vunpack.c.l.b16 %v871
    %v2371 = vunpack.c.h.b16 %v871
    %v2372 = vunpack.c.l.b16 %v872
    %v2373 = vunpack.c.h.b16 %v872
    %v2374 = vunpack.c.l.b16 %v873
    %v2375 = vunpack.c.h.b16 %v873
    %v2376 = vunpack.c.l.b16 %v874
    %v2377 = vunpack.c.h.b16 %v874
    %v2378 = vunpack.c.l.b16 %v875
    %v2379 = vunpack.c.h.b16 %v875
    %v2380 = vunpack.c.l.b16 %v876
    %v2381 = vunpack.c.h.b16 %v876
    %v2382 = vunpack.c.l.b16 %v877
    %v2383 = vunpack.c.h.b16 %v877
    %v2384 = vunpack.c.l.b16 %v878
    %v2385 = vunpack.c.h.b16 %v878
    %v2386 = vunpack.c.l.b16 %v879
    %v2387 = vunpack.c.h.b16 %v879
    %v2388 = vunpack.c.l.b16 %v880
    %v2389 = vunpack.c.h.b16 %v880
    %v2390 = vunpack.c.l.b16 %v881
    %v2391 = vunpack.c.h.b16 %v881
    %v2392 = vunpack.c.l.b16 %v882
    %v2393 = vunpack.c.h.b16 %v882
    %v2394 = vunpack.c.l.b16 %v883
    %v2395 = vunpack.c.h.b16 %v883
    %v2396 = vunpack.c.l.b16 %v884
    %v2397 = vunpack.c.h.b16 %v884
    %v2398 = vunpack.c.l.b16 %v885
    %v2399 = vunpack.c.h.b16 %v885
    %v2400 = vunpack.c.l.b16 %v886
    %v2401 = vunpack.c.h.b16 %v886
    %v2402 = vunpack.c.l.b16 %v887
    %v2403 = vunpack.c.h.b16 %v887
    %v2404 = vunpack.c.l.b16 %v888
    %v2405 = vunpack.c.h.b16 %v888
    %v2406 = vunpack.c.l.b16 %v889
    %v2407 = vunpack.c.h.b16 %v889
    %v2408 = vunpack.c.l.b16 %v890
    %v2409 = vunpack.c.h.b16 %v890
    %v2410 = vunpack.c.l.b16 %v891
    %v2411 = vunpack.c.h.b16 %v891
    %v2412 = vunpack.c.l.b16 %v892
    %v2413 = vunpack.c.h.b16 %v892
    %v2414 = vunpack.c.l.b16 %v893
    %v2415 = vunpack.c.h.b16 %v893
    %v2416 = vunpack.c.l.b16 %v894
    %v2417 = vunpack.c.h.b16 %v894
    %v2418 = vunpack.c.l.b16 %v895
    %v2419 = vunpack.c.h.b16 %v895
    %v2420 = vunpack.c.l.b16 %v896
    %v2421 = vunpack.c.h.b16 %v896
    %v2422 = vunpack.c.l.b16 %v897
    %v2423 = vunpack.c.h.b16 %v897
    %v2424 = vunpack.c.l.b16 %v898
    %v2425 = vunpack.c.h.b16 %v898
    %v2426 = vunpack.c.l.b16 %v899
    %v2427 = vunpack.c.h.b16 %v899
    %v2428 = vunpack.c.l.b16 %v900
    %v2429 = vunpack.c.h.b16 %v900
    %v2430 = vunpack.c.l.b16 %v901
    %v2431 = vunpack.c.h.b16 %v901
    %v2432 = vunpack.c.l.b16 %v902
    %v2433 = vunpack.c.h.b16 %v902
    %v2434 = vunpack.c.l.b16 %v903
    %v2435 = vunpack.c.h.b16 %v903
    %v2436 = vunpack.c.l.b16 %v904
    %v2437 = vunpack.c.h.b16 %v904
    %v2438 = vunpack.c.l.b16 %v905
    %v2439 = vunpack.c.h.b16 %v905
    %v2440 = vunpack.c.l.b16 %v906
    %v2441 = vunpack.c.h.b16 %v906
    %v2442 = vunpack.c.l.b16 %v907
    %v2443 = vunpack.c.h.b16 %v907
    %v2444 = vunpack.c.l.b16 %v908
    %v2445 = vunpack.c.h.b16 %v908
    %v2446 = vunpack.c.l.b16 %v909
    %v2447 = vunpack.c.h.b16 %v909
    %v2448 = vunpack.c.l.b16 %v910
    %v2449 = vunpack.c.h.b16 %v910
    %v2450 = vunpack.c.l.b16 %v911
    %v2451 = vunpack.c.h.b16 %v911
    %v2452 = vunpack.c.l.b16 %v912
    %v2453 = vunpack.c.h.b16 %v912
    %v2454 = vunpack.c.l.b16 %v913
    %v2455 = vunpack.c.h.b16 %v913
    %v2456 = vunpack.c.l.b16 %v914
    %v2457 = vunpack.c.h.b16 %v914
    %v2458 = vunpack.c.l.b16 %v915
    %v2459 = vunpack.c.h.b16 %v915
    %v2460 = vunpack.c.l.b16 %v916
    %v2461 = vunpack.c.h.b16 %v916
    %v2462 = vunpack.c.l.b16 %v917
    %v2463 = vunpack.c.h.b16 %v917
    %v2464 = vunpack.c.l.b16 %v918
    %v2465 = vunpack.c.h.b16 %v918
    %v2466 = vunpack.c.l.b16 %v919
    %v2467 = vunpack.c.h.b16 %v919
    %v2468 = vunpack.c.l.b16 %v920
    %v2469 = vunpack.c.h.b16 %v920
    %v2470 = vunpack.c.l.b16 %v921
    %v2471 = vunpack.c.h.b16 %v921
    %v2472 = vunpack.c.l.b16 %v922
    %v2473 = vunpack.c.h.b16 %v922
    %v2474 = vunpack.c.l.b16 %v923
    %v2475 = vunpack.c.h.b16 %v923
    %v2476 = vunpack.c.l.b16 %v924
    %v2477 = vunpack.c.h.b16 %v924
    %v2478 = vunpack.c.l.b16 %v925
    %v2479 = vunpack.c.h.b16 %v925
    %v2480 = vunpack.c.l.b16 %v926
    %v2481 = vunpack.c.h.b16 %v926
    %v2482 = vunpack.c.l.b16 %v927
    %v2483 = vunpack.c.h.b16 %v927
    %v2484 = vunpack.c.l.b16 %v928
    %v2485 = vunpack.c.h.b16 %v928
    %v2486 = vunpack.c.l.b16 %v929
    %v2487 = vunpack.c.h.b16 %v929
    %v2488 = vunpack.c.l.b16 %v930
    %v2489 = vunpack.c.h.b16 %v930
    %v2490 = vunpack.c.l.b16 %v931
    %v2491 = vunpack.c.h.b16 %v931
    %v2492 = vunpack.c.l.b16 %v932
    %v2493 = vunpack.c.h.b16 %v932
    %v2494 = vunpack.c.l.b16 %v933
    %v2495 = vunpack.c.h.b16 %v933
    %v2496 = vunpack.c.l.b16 %v934
    %v2497 = vunpack.c.h.b16 %v934
    %v2498 = vunpack.c.l.b16 %v935
    %v2499 = vunpack.c.h.b16 %v935
    %v2500 = vunpack.c.l.b16 %v936
    %v2501 = vunpack.c.h.b16 %v936
    %v2502 = vunpack.c.l.b16 %v937
    %v2503 = vunpack.c.h.b16 %v937
    %v2504 = vunpack.c.l.b16 %v938
    %v2505 = vunpack.c.h.b16 %v938
    %v2506 = vunpack.c.l.b16 %v939
    %v2507 = vunpack.c.h.b16 %v939
    %v2508 = vunpack.c.l.b16 %v940
    %v2509 = vunpack.c.h.b16 %v940
    %v2510 = vunpack.c.l.b16 %v941
    %v2511 = vunpack.c.h.b16 %v941
    %v2512 = vunpack.c.l.b16 %v942
    %v2513 = vunpack.c.h.b16 %v942
    %v2514 = vunpack.c.l.b16 %v943
    %v2515 = vunpack.c.h.b16 %v943
    %v2516 = vunpack.c.l.b16 %v944
    %v2517 = vunpack.c.h.b16 %v944
    %v2518 = vunpack.c.l.b16 %v945
    %v2519 = vunpack.c.h.b16 %v945
    %v2520 = vunpack.c.l.b16 %v946
    %v2521 = vunpack.c.h.b16 %v946
    %v2522 = vunpack.c.l.b16 %v947
    %v2523 = vunpack.c.h.b16 %v947
    %v2524 = vunpack.c.l.b16 %v948
    %v2525 = vunpack.c.h.b16 %v948
    %v2526 = vunpack.c.l.b16 %v949
    %v2527 = vunpack.c.h.b16 %v949
    %v2528 = vpack.c.b16 %v1512, %v1504
    %v2529 = vpack.c.b16 %v1513, %v1505
    %v2530 = vpack.c.b16 %v1514, %v1506
    %v2531 = vpack.c.b16 %v1515, %v1507
    %v2532 = vpack.c.b16 %v1516, %v1508
    %v2533 = vpack.c.b16 %v1517, %v1509
    %v2534 = vpack.c.b16 %v1518, %v1510
    %v2535 = vpack.c.b16 %v1519, %v1511
    %v2536 = vpack.c.b16 %v1528, %v1520
    %v2537 = vpack.c.b16 %v1529, %v1521
    %v2538 = vpack.c.b16 %v1530, %v1522
    %v2539 = vpack.c.b16 %v1531, %v1523
    %v2540 = vpack.c.b16 %v1532, %v1524
    %v2541 = vpack.c.b16 %v1533, %v1525
    %v2542 = vpack.c.b16 %v1534, %v1526
    %v2543 = vpack.c.b16 %v1535, %v1527
    %v2544 = vpack.c.b16 %v1544, %v1536
    %v2545 = vpack.c.b16 %v1545, %v1537
    %v2546 = vpack.c.b16 %v1546, %v1538
    %v2547 = vpack.c.b16 %v1547, %v1539
    %v2548 = vpack.c.b16 %v1548, %v1540
    %v2549 = vpack.c.b16 %v1549, %v1541
    %v2550 = vpack.c.b16 %v1550, %v1542
    %v2551 = vpack.c.b16 %v1551, %v1543
    %v2552 = vpack.c.b16 %v1560, %v1552
    %v2553 = vpack.c.b16 %v1561, %v1553
    %v2554 = vpack.c.b16 %v1562, %v1554
    %v2555 = vpack.c.b16 %v1563, %v1555
    %v2556 = vpack.c.b16 %v1564, %v1556
    %v2557 = vpack.c.b16 %v1565, %v1557
    %v2558 = vpack.c.b16 %v1566, %v1558
    %v2559 = vpack.c.b16 %v1567, %v1559
    %v2560 = vpack.c.b16 %v1576, %v1568
    %v2561 = vpack.c.b16 %v1577, %v1569
    %v2562 = vpack.c.b16 %v1578, %v1570
    %v2563 = vpack.c.b16 %v1579, %v1571
    %v2564 = vpack.c.b16 %v1580, %v1572
    %v2565 = vpack.c.b16 %v1581, %v1573
    %v2566 = vpack.c.b16 %v1582, %v1574
    %v2567 = vpack.c.b16 %v1583, %v1575
    %v2568 = vpack.c.b16 %v1592, %v1584
    %v2569 = vpack.c.b16 %v1593, %v1585
    %v2570 = vpack.c.b16 %v1594, %v1586
    %v2571 = vpack.c.b16 %v1595, %v1587
    %v2572 = vpack.c.b16 %v1596, %v1588
    %v2573 = vpack.c.b16 %v1597, %v1589
    %v2574 = vpack.c.b16 %v1598, %v1590
    %v2575 = vpack.c.b16 %v1599, %v1591
    %v2576 = vpack.c.b16 %v1608, %v1600
    %v2577 = vpack.c.b16 %v1609, %v1601
    %v2578 = vpack.c.b16 %v1610, %v1602
    %v2579 = vpack.c.b16 %v1611, %v1603
    %v2580 = vpack.c.b16 %v1612, %v1604
    %v2581 = vpack.c.b16 %v1613, %v1605
    %v2582 = vpack.c.b16 %v1614, %v1606
    %v2583 = vpack.c.b16 %v1615, %v1607
    %v2584 = vpack.c.b16 %v1624, %v1616
    %v2585 = vpack.c.b16 %v1625, %v1617
    %v2586 = vpack.c.b16 %v1626, %v1618
    %v2587 = vpack.c.b16 %v1627, %v1619
    %v2588 = vpack.c.b16 %v1628, %v1620
    %v2589 = vpack.c.b16 %v1629, %v1621
    %v2590 = vpack.c.b16 %v1630, %v1622
    %v2591 = vpack.c.b16 %v1631, %v1623
    %v2592 = vpack.c.b16 %v1640, %v1632
    %v2593 = vpack.c.b16 %v1641, %v1633
    %v2594 = vpack.c.b16 %v1642, %v1634
    %v2595 = vpack.c.b16 %v1643, %v1635
    %v2596 = vpack.c.b16 %v1644, %v1636
    %v2597 = vpack.c.b16 %v1645, %v1637
    %v2598 = vpack.c.b16 %v1646, %v1638
    %v2599 = vpack.c.b16 %v1647, %v1639
    %v2600 = vpack.c.b16 %v1656, %v1648
    %v2601 = vpack.c.b16 %v1657, %v1649
    %v2602 = vpack.c.b16 %v1658, %v1650
    %v2603 = vpack.c.b16 %v1659, %v1651
    %v2604 = vpack.c.b16 %v1660, %v1652
    %v2605 = vpack.c.b16 %v1661, %v1653
    %v2606 = vpack.c.b16 %v1662, %v1654
    %v2607 = vpack.c.b16 %v1663, %v1655
    %v2608 = vpack.c.b16 %v1672, %v1664
    %v2609 = vpack.c.b16 %v1673, %v1665
    %v2610 = vpack.c.b16 %v1674, %v1666
    %v2611 = vpack.c.b16 %v1675, %v1667
    %v2612 = vpack.c.b16 %v1676, %v1668
    %v2613 = vpack.c.b16 %v1677, %v1669
    %v2614 = vpack.c.b16 %v1678, %v1670
    %v2615 = vpack.c.b16 %v1679, %v1671
    %v2616 = vpack.c.b16 %v1688, %v1680
    %v2617 = vpack.c.b16 %v1689, %v1681
    %v2618 = vpack.c.b16 %v1690, %v1682
    %v2619 = vpack.c.b16 %v1691, %v1683
    %v2620 = vpack.c.b16 %v1692, %v1684
    %v2621 = vpack.c.b16 %v1693, %v1685
    %v2622 = vpack.c.b16 %v1694, %v1686
    %v2623 = vpack.c.b16 %v1695, %v1687
    %v2624 = vpack.c.b16 %v1704, %v1696
    %v2625 = vpack.c.b16 %v1705, %v1697
    %v2626 = vpack.c.b16 %v1706, %v1698
    %v2627 = vpack.c.b16 %v1707, %v1699
    %v2628 = vpack.c.b16 %v1708, %v1700
    %v2629 = vpack.c.b16 %v1709, %v1701
    %v2630 = vpack.c.b16 %v1710, %v1702
    %v2631 = vpack.c.b16 %v1711, %v1703
    %v2632 = vpack.c.b16 %v1720, %v1712
    %v2633 = vpack.c.b16 %v1721, %v1713
    %v2634 = vpack.c.b16 %v1722, %v1714
    %v2635 = vpack.c.b16 %v1723, %v1715
    %v2636 = vpack.c.b16 %v1724, %v1716
    %v2637 = vpack.c.b16 %v1725, %v1717
    %v2638 = vpack.c.b16 %v1726, %v1718
    %v2639 = vpack.c.b16 %v1727, %v1719
    %v2640 = vpack.c.b16 %v1736, %v1728
    %v2641 = vpack.c.b16 %v1737, %v1729
    %v2642 = vpack.c.b16 %v1738, %v1730
    %v2643 = vpack.c.b16 %v1739, %v1731
    %v2644 = vpack.c.b16 %v1740, %v1732
    %v2645 = vpack.c.b16 %v1741, %v1733
    %v2646 = vpack.c.b16 %v1742, %v1734
    %v2647 = vpack.c.b16 %v1743, %v1735
    %v2648 = vpack.c.b16 %v1752, %v1744
    %v2649 = vpack.c.b16 %v1753, %v1745
    %v2650 = vpack.c.b16 %v1754, %v1746
    %v2651 = vpack.c.b16 %v1755, %v1747
    %v2652 = vpack.c.b16 %v1756, %v1748
    %v2653 = vpack.c.b16 %v1757, %v1749
    %v2654 = vpack.c.b16 %v1758, %v1750
    %v2655 = vpack.c.b16 %v1759, %v1751
    %v2656 = vpack.c.b16 %v1768, %v1760
    %v2657 = vpack.c.b16 %v1769, %v1761
    %v2658 = vpack.c.b16 %v1770, %v1762
    %v2659 = vpack.c.b16 %v1771, %v1763
    %v2660 = vpack.c.b16 %v1772, %v1764
    %v2661 = vpack.c.b16 %v1773, %v1765
    %v2662 = vpack.c.b16 %v1774, %v1766
    %v2663 = vpack.c.b16 %v1775, %v1767
    %v2664 = vpack.c.b16 %v1784, %v1776
    %v2665 = vpack.c.b16 %v1785, %v1777
    %v2666 = vpack.c.b16 %v1786, %v1778
    %v2667 = vpack.c.b16 %v1787, %v1779
    %v2668 = vpack.c.b16 %v1788, %v1780
    %v2669 = vpack.c.b16 %v1789, %v1781
    %v2670 = vpack.c.b16 %v1790, %v1782
    %v2671 = vpack.c.b16 %v1791, %v1783
    %v2672 = vpack.c.b16 %v1800, %v1792
    %v2673 = vpack.c.b16 %v1801, %v1793
    %v2674 = vpack.c.b16 %v1802, %v1794
    %v2675 = vpack.c.b16 %v1803, %v1795
    %v2676 = vpack.c.b16 %v1804, %v1796
    %v2677 = vpack.c.b16 %v1805, %v1797
    %v2678 = vpack.c.b16 %v1806, %v1798
    %v2679 = vpack.c.b16 %v1807, %v1799
    %v2680 = vpack.c.b16 %v1816, %v1808
    %v2681 = vpack.c.b16 %v1817, %v1809
    %v2682 = vpack.c.b16 %v1818, %v1810
    %v2683 = vpack.c.b16 %v1819, %v1811
    %v2684 = vpack.c.b16 %v1820, %v1812
    %v2685 = vpack.c.b16 %v1821, %v1813
    %v2686 = vpack.c.b16 %v1822, %v1814
    %v2687 = vpack.c.b16 %v1823, %v1815
    %v2688 = vpack.c.b16 %v1832, %v1824
    %v2689 = vpack.c.b16 %v1833, %v1825
    %v2690 = vpack.c.b16 %v1834, %v1826
    %v2691 = vpack.c.b16 %v1835, %v1827
    %v2692 = vpack.c.b16 %v1836, %v1828
    %v2693 = vpack.c.b16 %v1837, %v1829
    %v2694 = vpack.c.b16 %v1838, %v1830
    %v2695 = vpack.c.b16 %v1839, %v1831
    %v2696 = vpack.c.b16 %v1848, %v1840
    %v2697 = vpack.c.b16 %v1849, %v1841
    %v2698 = vpack.c.b16 %v1850, %v1842
    %v2699 = vpack.c.b16 %v1851, %v1843
    %v2700 = vpack.c.b16 %v1852, %v1844
    %v2701 = vpack.c.b16 %v1853, %v1845
    %v2702 = vpack.c.b16 %v1854, %v1846
    %v2703 = vpack.c.b16 %v1855, %v1847
    %v2704 = vpack.c.b16 %v1864, %v1856
    %v2705 = vpack.c.b16 %v1865, %v1857
    %v2706 = vpack.c.b16 %v1866, %v1858
    %v2707 = vpack.c.b16 %v1867, %v1859
    %v2708 = vpack.c.b16 %v1868, %v1860
    %v2709 = vpack.c.b16 %v1869, %v1861
    %v2710 = vpack.c.b16 %v1870, %v1862
    %v2711 = vpack.c.b16 %v1871, %v1863
    %v2712 = vpack.c.b16 %v1880, %v1872
    %v2713 = vpack.c.b16 %v1881, %v1873
    %v2714 = vpack.c.b16 %v1882, %v1874
    %v2715 = vpack.c.b16 %v1883, %v1875
    %v2716 = vpack.c.b16 %v1884, %v1876
    %v2717 = vpack.c.b16 %v1885, %v1877
    %v2718 = vpack.c.b16 %v1886, %v1878
    %v2719 = vpack.c.b16 %v1887, %v1879
    %v2720 = vpack.c.b16 %v1896, %v1888
    %v2721 = vpack.c.b16 %v1897, %v1889
    %v2722 = vpack.c.b16 %v1898, %v1890
    %v2723 = vpack.c.b16 %v1899, %v1891
    %v2724 = vpack.c.b16 %v1900, %v1892
    %v2725 = vpack.c.b16 %v1901, %v1893
    %v2726 = vpack.c.b16 %v1902, %v1894
    %v2727 = vpack.c.b16 %v1903, %v1895
    %v2728 = vpack.c.b16 %v1912, %v1904
    %v2729 = vpack.c.b16 %v1913, %v1905
    %v2730 = vpack.c.b16 %v1914, %v1906
    %v2731 = vpack.c.b16 %v1915, %v1907
    %v2732 = vpack.c.b16 %v1916, %v1908
    %v2733 = vpack.c.b16 %v1917, %v1909
    %v2734 = vpack.c.b16 %v1918, %v1910
    %v2735 = vpack.c.b16 %v1919, %v1911
    %v2736 = vpack.c.b16 %v1928, %v1920
    %v2737 = vpack.c.b16 %v1929, %v1921
    %v2738 = vpack.c.b16 %v1930, %v1922
    %v2739 = vpack.c.b16 %v1931, %v1923
    %v2740 = vpack.c.b16 %v1932, %v1924
    %v2741 = vpack.c.b16 %v1933, %v1925
    %v2742 = vpack.c.b16 %v1934, %v1926
    %v2743 = vpack.c.b16 %v1935, %v1927
    %v2744 = vpack.c.b16 %v1944, %v1936
    %v2745 = vpack.c.b16 %v1945, %v1937
    %v2746 = vpack.c.b16 %v1946, %v1938
    %v2747 = vpack.c.b16 %v1947, %v1939
    %v2748 = vpack.c.b16 %v1948, %v1940
    %v2749 = vpack.c.b16 %v1949, %v1941
    %v2750 = vpack.c.b16 %v1950, %v1942
    %v2751 = vpack.c.b16 %v1951, %v1943
    %v2752 = vpack.c.b16 %v1960, %v1952
    %v2753 = vpack.c.b16 %v1961, %v1953
    %v2754 = vpack.c.b16 %v1962, %v1954
    %v2755 = vpack.c.b16 %v1963, %v1955
    %v2756 = vpack.c.b16 %v1964, %v1956
    %v2757 = vpack.c.b16 %v1965, %v1957
    %v2758 = vpack.c.b16 %v1966, %v1958
    %v2759 = vpack.c.b16 %v1967, %v1959
    %v2760 = vpack.c.b16 %v1976, %v1968
    %v2761 = vpack.c.b16 %v1977, %v1969
    %v2762 = vpack.c.b16 %v1978, %v1970
    %v2763 = vpack.c.b16 %v1979, %v1971
    %v2764 = vpack.c.b16 %v1980, %v1972
    %v2765 = vpack.c.b16 %v1981, %v1973
    %v2766 = vpack.c.b16 %v1982, %v1974
    %v2767 = vpack.c.b16 %v1983, %v1975
    %v2768 = vpack.c.b16 %v1992, %v1984
    %v2769 = vpack.c.b16 %v1993, %v1985
    %v2770 = vpack.c.b16 %v1994, %v1986
    %v2771 = vpack.c.b16 %v1995, %v1987
    %v2772 = vpack.c.b16 %v1996, %v1988
    %v2773 = vpack.c.b16 %v1997, %v1989
    %v2774 = vpack.c.b16 %v1998, %v1990
    %v2775 = vpack.c.b16 %v1999, %v1991
    %v2776 = vpack.c.b16 %v2008, %v2000
    %v2777 = vpack.c.b16 %v2009, %v2001
    %v2778 = vpack.c.b16 %v2010, %v2002
    %v2779 = vpack.c.b16 %v2011, %v2003
    %v2780 = vpack.c.b16 %v2012, %v2004
    %v2781 = vpack.c.b16 %v2013, %v2005
    %v2782 = vpack.c.b16 %v2014, %v2006
    %v2783 = vpack.c.b16 %v2015, %v2007
    %v2784 = vpack.c.b16 %v2024, %v2016
    %v2785 = vpack.c.b16 %v2025, %v2017
    %v2786 = vpack.c.b16 %v2026, %v2018
    %v2787 = vpack.c.b16 %v2027, %v2019
    %v2788 = vpack.c.b16 %v2028, %v2020
    %v2789 = vpack.c.b16 %v2029, %v2021
    %v2790 = vpack.c.b16 %v2030, %v2022
    %v2791 = vpack.c.b16 %v2031, %v2023
    %v2792 = vpack.c.b16 %v2040, %v2032
    %v2793 = vpack.c.b16 %v2041, %v2033
    %v2794 = vpack.c.b16 %v2042, %v2034
    %v2795 = vpack.c.b16 %v2043, %v2035
    %v2796 = vpack.c.b16 %v2044, %v2036
    %v2797 = vpack.c.b16 %v2045, %v2037
    %v2798 = vpack.c.b16 %v2046, %v2038
    %v2799 = vpack.c.b16 %v2047, %v2039
    %v2800 = vpack.c.b16 %v2056, %v2048
    %v2801 = vpack.c.b16 %v2057, %v2049
    %v2802 = vpack.c.b16 %v2058, %v2050
    %v2803 = vpack.c.b16 %v2059, %v2051
    %v2804 = vpack.c.b16 %v2060, %v2052
    %v2805 = vpack.c.b16 %v2061, %v2053
    %v2806 = vpack.c.b16 %v2062, %v2054
    %v2807 = vpack.c.b16 %v2063, %v2055
    %v2808 = vpack.c.b16 %v2072, %v2064
    %v2809 = vpack.c.b16 %v2073, %v2065
    %v2810 = vpack.c.b16 %v2074, %v2066
    %v2811 = vpack.c.b16 %v2075, %v2067
    %v2812 = vpack.c.b16 %v2076, %v2068
    %v2813 = vpack.c.b16 %v2077, %v2069
    %v2814 = vpack.c.b16 %v2078, %v2070
    %v2815 = vpack.c.b16 %v2079, %v2071
    %v2816 = vpack.c.b16 %v2088, %v2080
    %v2817 = vpack.c.b16 %v2089, %v2081
    %v2818 = vpack.c.b16 %v2090, %v2082
    %v2819 = vpack.c.b16 %v2091, %v2083
    %v2820 = vpack.c.b16 %v2092, %v2084
    %v2821 = vpack.c.b16 %v2093, %v2085
    %v2822 = vpack.c.b16 %v2094, %v2086
    %v2823 = vpack.c.b16 %v2095, %v2087
    %v2824 = vpack.c.b16 %v2104, %v2096
    %v2825 = vpack.c.b16 %v2105, %v2097
    %v2826 = vpack.c.b16 %v2106, %v2098
    %v2827 = vpack.c.b16 %v2107, %v2099
    %v2828 = vpack.c.b16 %v2108, %v2100
    %v2829 = vpack.c.b16 %v2109, %v2101
    %v2830 = vpack.c.b16 %v2110, %v2102
    %v2831 = vpack.c.b16 %v2111, %v2103
    %v2832 = vpack.c.b16 %v2120, %v2112
    %v2833 = vpack.c.b16 %v2121, %v2113
    %v2834 = vpack.c.b16 %v2122, %v2114
    %v2835 = vpack.c.b16 %v2123, %v2115
    %v2836 = vpack.c.b16 %v2124, %v2116
    %v2837 = vpack.c.b16 %v2125, %v2117
    %v2838 = vpack.c.b16 %v2126, %v2118
    %v2839 = vpack.c.b16 %v2127, %v2119
    %v2840 = vpack.c.b16 %v2136, %v2128
    %v2841 = vpack.c.b16 %v2137, %v2129
    %v2842 = vpack.c.b16 %v2138, %v2130
    %v2843 = vpack.c.b16 %v2139, %v2131
    %v2844 = vpack.c.b16 %v2140, %v2132
    %v2845 = vpack.c.b16 %v2141, %v2133
    %v2846 = vpack.c.b16 %v2142, %v2134
    %v2847 = vpack.c.b16 %v2143, %v2135
    %v2848 = vpack.c.b16 %v2152, %v2144
    %v2849 = vpack.c.b16 %v2153, %v2145
    %v2850 = vpack.c.b16 %v2154, %v2146
    %v2851 = vpack.c.b16 %v2155, %v2147
    %v2852 = vpack.c.b16 %v2156, %v2148
    %v2853 = vpack.c.b16 %v2157, %v2149
    %v2854 = vpack.c.b16 %v2158, %v2150
    %v2855 = vpack.c.b16 %v2159, %v2151
    %v2856 = vpack.c.b16 %v2168, %v2160
    %v2857 = vpack.c.b16 %v2169, %v2161
    %v2858 = vpack.c.b16 %v2170, %v2162
    %v2859 = vpack.c.b16 %v2171, %v2163
    %v2860 = vpack.c.b16 %v2172, %v2164
    %v2861 = vpack.c.b16 %v2173, %v2165
    %v2862 = vpack.c.b16 %v2174, %v2166
    %v2863 = vpack.c.b16 %v2175, %v2167
    %v2864 = vpack.c.b16 %v2184, %v2176
    %v2865 = vpack.c.b16 %v2185, %v2177
    %v2866 = vpack.c.b16 %v2186, %v2178
    %v2867 = vpack.c.b16 %v2187, %v2179
    %v2868 = vpack.c.b16 %v2188, %v2180
    %v2869 = vpack.c.b16 %v2189, %v2181
    %v2870 = vpack.c.b16 %v2190, %v2182
    %v2871 = vpack.c.b16 %v2191, %v2183
    %v2872 = vpack.c.b16 %v2200, %v2192
    %v2873 = vpack.c.b16 %v2201, %v2193
    %v2874 = vpack.c.b16 %v2202, %v2194
    %v2875 = vpack.c.b16 %v2203, %v2195
    %v2876 = vpack.c.b16 %v2204, %v2196
    %v2877 = vpack.c.b16 %v2205, %v2197
    %v2878 = vpack.c.b16 %v2206, %v2198
    %v2879 = vpack.c.b16 %v2207, %v2199
    %v2880 = vpack.c.b16 %v2216, %v2208
    %v2881 = vpack.c.b16 %v2217, %v2209
    %v2882 = vpack.c.b16 %v2218, %v2210
    %v2883 = vpack.c.b16 %v2219, %v2211
    %v2884 = vpack.c.b16 %v2220, %v2212
    %v2885 = vpack.c.b16 %v2221, %v2213
    %v2886 = vpack.c.b16 %v2222, %v2214
    %v2887 = vpack.c.b16 %v2223, %v2215
    %v2888 = vpack.c.b16 %v2232, %v2224
    %v2889 = vpack.c.b16 %v2233, %v2225
    %v2890 = vpack.c.b16 %v2234, %v2226
    %v2891 = vpack.c.b16 %v2235, %v2227
    %v2892 = vpack.c.b16 %v2236, %v2228
    %v2893 = vpack.c.b16 %v2237, %v2229
    %v2894 = vpack.c.b16 %v2238, %v2230
    %v2895 = vpack.c.b16 %v2239, %v2231
    %v2896 = vpack.c.b16 %v2248, %v2240
    %v2897 = vpack.c.b16 %v2249, %v2241
    %v2898 = vpack.c.b16 %v2250, %v2242
    %v2899 = vpack.c.b16 %v2251, %v2243
    %v2900 = vpack.c.b16 %v2252, %v2244
    %v2901 = vpack.c.b16 %v2253, %v2245
    %v2902 = vpack.c.b16 %v2254, %v2246
    %v2903 = vpack.c.b16 %v2255, %v2247
    %v2904 = vpack.c.b16 %v2264, %v2256
    %v2905 = vpack.c.b16 %v2265, %v2257
    %v2906 = vpack.c.b16 %v2266, %v2258
    %v2907 = vpack.c.b16 %v2267, %v2259
    %v2908 = vpack.c.b16 %v2268, %v2260
    %v2909 = vpack.c.b16 %v2269, %v2261
    %v2910 = vpack.c.b16 %v2270, %v2262
    %v2911 = vpack.c.b16 %v2271, %v2263
    %v2912 = vpack.c.b16 %v2280, %v2272
    %v2913 = vpack.c.b16 %v2281, %v2273
    %v2914 = vpack.c.b16 %v2282, %v2274
    %v2915 = vpack.c.b16 %v2283, %v2275
    %v2916 = vpack.c.b16 %v2284, %v2276
    %v2917 = vpack.c.b16 %v2285, %v2277
    %v2918 = vpack.c.b16 %v2286, %v2278
    %v2919 = vpack.c.b16 %v2287, %v2279
    %v2920 = vpack.c.b16 %v2296, %v2288
    %v2921 = vpack.c.b16 %v2297, %v2289
    %v2922 = vpack.c.b16 %v2298, %v2290
    %v2923 = vpack.c.b16 %v2299, %v2291
    %v2924 = vpack.c.b16 %v2300, %v2292
    %v2925 = vpack.c.b16 %v2301, %v2293
    %v2926 = vpack.c.b16 %v2302, %v2294
    %v2927 = vpack.c.b16 %v2303, %v2295
    %v2928 = vpack.c.b16 %v2312, %v2304
    %v2929 = vpack.c.b16 %v2313, %v2305
    %v2930 = vpack.c.b16 %v2314, %v2306
    %v2931 = vpack.c.b16 %v2315, %v2307
    %v2932 = vpack.c.b16 %v2316, %v2308
    %v2933 = vpack.c.b16 %v2317, %v2309
    %v2934 = vpack.c.b16 %v2318, %v2310
    %v2935 = vpack.c.b16 %v2319, %v2311
    %v2936 = vpack.c.b16 %v2328, %v2320
    %v2937 = vpack.c.b16 %v2329, %v2321
    %v2938 = vpack.c.b16 %v2330, %v2322
    %v2939 = vpack.c.b16 %v2331, %v2323
    %v2940 = vpack.c.b16 %v2332, %v2324
    %v2941 = vpack.c.b16 %v2333, %v2325
    %v2942 = vpack.c.b16 %v2334, %v2326
    %v2943 = vpack.c.b16 %v2335, %v2327
    %v2944 = vpack.c.b16 %v2344, %v2336
    %v2945 = vpack.c.b16 %v2345, %v2337
    %v2946 = vpack.c.b16 %v2346, %v2338
    %v2947 = vpack.c.b16 %v2347, %v2339
    %v2948 = vpack.c.b16 %v2348, %v2340
    %v2949 = vpack.c.b16 %v2349, %v2341
    %v2950 = vpack.c.b16 %v2350, %v2342
    %v2951 = vpack.c.b16 %v2351, %v2343
    %v2952 = vpack.c.b16 %v2360, %v2352
    %v2953 = vpack.c.b16 %v2361, %v2353
    %v2954 = vpack.c.b16 %v2362, %v2354
    %v2955 = vpack.c.b16 %v2363, %v2355
    %v2956 = vpack.c.b16 %v2364, %v2356
    %v2957 = vpack.c.b16 %v2365, %v2357
    %v2958 = vpack.c.b16 %v2366, %v2358
    %v2959 = vpack.c.b16 %v2367, %v2359
    %v2960 = vpack.c.b16 %v2376, %v2368
    %v2961 = vpack.c.b16 %v2377, %v2369
    %v2962 = vpack.c.b16 %v2378, %v2370
    %v2963 = vpack.c.b16 %v2379, %v2371
    %v2964 = vpack.c.b16 %v2380, %v2372
    %v2965 = vpack.c.b16 %v2381, %v2373
    %v2966 = vpack.c.b16 %v2382, %v2374
    %v2967 = vpack.c.b16 %v2383, %v2375
    %v2968 = vpack.c.b16 %v2392, %v2384
    %v2969 = vpack.c.b16 %v2393, %v2385
    %v2970 = vpack.c.b16 %v2394, %v2386
    %v2971 = vpack.c.b16 %v2395, %v2387
    %v2972 = vpack.c.b16 %v2396, %v2388
    %v2973 = vpack.c.b16 %v2397, %v2389
    %v2974 = vpack.c.b16 %v2398, %v2390
    %v2975 = vpack.c.b16 %v2399, %v2391
    %v2976 = vpack.c.b16 %v2408, %v2400
    %v2977 = vpack.c.b16 %v2409, %v2401
    %v2978 = vpack.c.b16 %v2410, %v2402
    %v2979 = vpack.c.b16 %v2411, %v2403
    %v2980 = vpack.c.b16 %v2412, %v2404
    %v2981 = vpack.c.b16 %v2413, %v2405
    %v2982 = vpack.c.b16 %v2414, %v2406
    %v2983 = vpack.c.b16 %v2415, %v2407
    %v2984 = vpack.c.b16 %v2424, %v2416
    %v2985 = vpack.c.b16 %v2425, %v2417
    %v2986 = vpack.c.b16 %v2426, %v2418
    %v2987 = vpack.c.b16 %v2427, %v2419
    %v2988 = vpack.c.b16 %v2428, %v2420
    %v2989 = vpack.c.b16 %v2429, %v2421
    %v2990 = vpack.c.b16 %v2430, %v2422
    %v2991 = vpack.c.b16 %v2431, %v2423
    %v2992 = vpack.c.b16 %v2440, %v2432
    %v2993 = vpack.c.b16 %v2441, %v2433
    %v2994 = vpack.c.b16 %v2442, %v2434
    %v2995 = vpack.c.b16 %v2443, %v2435
    %v2996 = vpack.c.b16 %v2444, %v2436
    %v2997 = vpack.c.b16 %v2445, %v2437
    %v2998 = vpack.c.b16 %v2446, %v2438
    %v2999 = vpack.c.b16 %v2447, %v2439
    %v3000 = vpack.c.b16 %v2456, %v2448
    %v3001 = vpack.c.b16 %v2457, %v2449
    %v3002 = vpack.c.b16 %v2458, %v2450
    %v3003 = vpack.c.b16 %v2459, %v2451
    %v3004 = vpack.c.b16 %v2460, %v2452
    %v3005 = vpack.c.b16 %v2461, %v2453
    %v3006 = vpack.c.b16 %v2462, %v2454
    %v3007 = vpack.c.b16 %v2463, %v2455
    %v3008 = vpack.c.b16 %v2472, %v2464
    %v3009 = vpack.c.b16 %v2473, %v2465
    %v3010 = vpack.c.b16 %v2474, %v2466
    %v3011 = vpack.c.b16 %v2475, %v2467
    %v3012 = vpack.c.b16 %v2476, %v2468
    %v3013 = vpack.c.b16 %v2477, %v2469
    %v3014 = vpack.c.b16 %v2478, %v2470
    %v3015 = vpack.c.b16 %v2479, %v2471
    %v3016 = vpack.c.b16 %v2488, %v2480
    %v3017 = vpack.c.b16 %v2489, %v2481
    %v3018 = vpack.c.b16 %v2490, %v2482
    %v3019 = vpack.c.b16 %v2491, %v2483
    %v3020 = vpack.c.b16 %v2492, %v2484
    %v3021 = vpack.c.b16 %v2493, %v2485
    %v3022 = vpack.c.b16 %v2494, %v2486
    %v3023 = vpack.c.b16 %v2495, %v2487
    %v3024 = vpack.c.b16 %v2504, %v2496
    %v3025 = vpack.c.b16 %v2505, %v2497
    %v3026 = vpack.c.b16 %v2506, %v2498
    %v3027 = vpack.c.b16 %v2507, %v2499
    %v3028 = vpack.c.b16 %v2508, %v2500
    %v3029 = vpack.c.b16 %v2509, %v2501
    %v3030 = vpack.c.b16 %v2510, %v2502
    %v3031 = vpack.c.b16 %v2511, %v2503
    %v3032 = vpack.c.b16 %v2520, %v2512
    %v3033 = vpack.c.b16 %v2521, %v2513
    %v3034 = vpack.c.b16 %v2522, %v2514
    %v3035 = vpack.c.b16 %v2523, %v2515
    %v3036 = vpack.c.b16 %v2524, %v2516
    %v3037 = vpack.c.b16 %v2525, %v2517
    %v3038 = vpack.c.b16 %v2526, %v2518
    %v3039 = vpack.c.b16 %v2527, %v2519
    %3552 = vmatprep.subr.bf16.mxu0 %v2529
    %3553 = vmatpush1.bf16.msra.mxu0 %v2528
    %3554 = vmatprep.subr.bf16.mxu0 %v2537
    %3555 = vmatpush1.bf16.msra.mxu0 %v2536
    %3556 = vmatprep.subr.bf16.mxu0 %v2545
    %3557 = vmatpush1.bf16.msra.mxu0 %v2544
    %3558 = vmatprep.subr.bf16.mxu0 %v2553
    %3559 = vmatpush1.bf16.msra.mxu0 %v2552
    %3560 = vmatprep.subr.bf16.mxu0 %v2561
    %3561 = vmatpush1.bf16.msra.mxu0 %v2560
    %3562 = vmatprep.subr.bf16.mxu0 %v2569
    %3563 = vmatpush1.bf16.msra.mxu0 %v2568
    %3564 = vmatprep.subr.bf16.mxu0 %v2577
    %3565 = vmatpush1.bf16.msra.mxu0 %v2576
    %3566 = vmatprep.subr.bf16.mxu0 %v2585
    %3567 = vmatpush1.bf16.msra.mxu0 %v2584
    %3568 = vmatprep.subr.bf16.mxu0 %v2593
    %3569 = vmatpush1.bf16.msra.mxu0 %v2592
    %3570 = vmatprep.subr.bf16.mxu0 %v2601
    %3571 = vmatpush1.bf16.msra.mxu0 %v2600
    %3572 = vmatprep.subr.bf16.mxu0 %v2609
    %3573 = vmatpush1.bf16.msra.mxu0 %v2608
    %3574 = vmatprep.subr.bf16.mxu0 %v2617
    %3575 = vmatpush1.bf16.msra.mxu0 %v2616
    %3576 = vmatprep.subr.bf16.mxu0 %v2625
    %3577 = vmatpush1.bf16.msra.mxu0 %v2624
    %3578 = vmatprep.subr.bf16.mxu0 %v2633
    %3579 = vmatpush1.bf16.msra.mxu0 %v2632
    %3580 = vmatprep.subr.bf16.mxu0 %v2641
    %3581 = vmatpush1.bf16.msra.mxu0 %v2640
    %3582 = vmatprep.subr.bf16.mxu0 %v2649
    %3583 = vmatpush1.bf16.msra.mxu0 %v2648
    %3584 = vmatprep.mubr.bf16.mxu0 %v431
    %3585 = vmatmul.mubr.bf16.gmra.mrb[0].mxu0 %v430
    %v3586 = vpop.f32.mrb[0].mxu0
    %v3587 = vadd.f32 %v955, %v3586
    %v3588 = vpop.f32.mrb[0].mxu0
    %v3589 = vadd.f32 %v959, %v3588
    %v3590 = vpop.f32.mrb[0].mxu0
    %v3591 = vpop.f32.mrb[0].mxu0
    %3592 = vdwg.mxu0
    %3593 = vmatprep.subr.bf16.mxu0 %v2657
    %3594 = vmatpush1.bf16.msra.mxu0 %v2656
    %3595 = vmatprep.subr.bf16.mxu0 %v2665
    %3596 = vmatpush1.bf16.msra.mxu0 %v2664
    %3597 = vmatprep.subr.bf16.mxu0 %v2673
    %3598 = vmatpush1.bf16.msra.mxu0 %v2672
    %3599 = vmatprep.subr.bf16.mxu0 %v2681
    %3600 = vmatpush1.bf16.msra.mxu0 %v2680
    %3601 = vmatprep.subr.bf16.mxu0 %v2689
    %3602 = vmatpush1.bf16.msra.mxu0 %v2688
    %3603 = vmatprep.subr.bf16.mxu0 %v2697
    %3604 = vmatpush1.bf16.msra.mxu0 %v2696
    %3605 = vmatprep.subr.bf16.mxu0 %v2705
    %3606 = vmatpush1.bf16.msra.mxu0 %v2704
    %3607 = vmatprep.subr.bf16.mxu0 %v2713
    %3608 = vmatpush1.bf16.msra.mxu0 %v2712
    %3609 = vmatprep.subr.bf16.mxu0 %v2721
    %3610 = vmatpush1.bf16.msra.mxu0 %v2720
    %3611 = vmatprep.subr.bf16.mxu0 %v2729
    %3612 = vmatpush1.bf16.msra.mxu0 %v2728
    %3613 = vmatprep.subr.bf16.mxu0 %v2737
    %3614 = vmatpush1.bf16.msra.mxu0 %v2736
    %3615 = vmatprep.subr.bf16.mxu0 %v2745
    %3616 = vmatpush1.bf16.msra.mxu0 %v2744
    %3617 = vmatprep.subr.bf16.mxu0 %v2753
    %3618 = vmatpush1.bf16.msra.mxu0 %v2752
    %3619 = vmatprep.subr.bf16.mxu0 %v2761
    %3620 = vmatpush1.bf16.msra.mxu0 %v2760
    %3621 = vmatprep.subr.bf16.mxu0 %v2769
    %3622 = vmatpush1.bf16.msra.mxu0 %v2768
    %3623 = vmatprep.subr.bf16.mxu0 %v2777
    %3624 = vmatpush1.bf16.msra.mxu0 %v2776
    %3625 = vmatprep.mubr.bf16.mxu0 %v433
    %3626 = vmatmul.mubr.bf16.gmra.mrb[0].mxu0 %v432
    %v3627 = vpop.f32.mrb[0].mxu0
    %v3628 = vadd.f32 %v3587, %v3627
    %v3629 = vpop.f32.mrb[0].mxu0
    %v3630 = vadd.f32 %v3589, %v3629
    %v3631 = vpop.f32.mrb[0].mxu0
    %v3632 = vpop.f32.mrb[0].mxu0
    %3633 = vdwg.mxu0
    %3634 = vmatprep.subr.bf16.mxu0 %v2785
    %3635 = vmatpush1.bf16.msra.mxu0 %v2784
    %3636 = vmatprep.subr.bf16.mxu0 %v2793
    %3637 = vmatpush1.bf16.msra.mxu0 %v2792
    %3638 = vmatprep.subr.bf16.mxu0 %v2801
    %3639 = vmatpush1.bf16.msra.mxu0 %v2800
    %3640 = vmatprep.subr.bf16.mxu0 %v2809
    %3641 = vmatpush1.bf16.msra.mxu0 %v2808
    %3642 = vmatprep.subr.bf16.mxu0 %v2817
    %3643 = vmatpush1.bf16.msra.mxu0 %v2816
    %3644 = vmatprep.subr.bf16.mxu0 %v2825
    %3645 = vmatpush1.bf16.msra.mxu0 %v2824
    %3646 = vmatprep.subr.bf16.mxu0 %v2833
    %3647 = vmatpush1.bf16.msra.mxu0 %v2832
    %3648 = vmatprep.subr.bf16.mxu0 %v2841
    %3649 = vmatpush1.bf16.msra.mxu0 %v2840
    %3650 = vmatprep.subr.bf16.mxu0 %v2849
    %3651 = vmatpush1.bf16.msra.mxu0 %v2848
    %3652 = vmatprep.subr.bf16.mxu0 %v2857
    %3653 = vmatpush1.bf16.msra.mxu0 %v2856
    %3654 = vmatprep.subr.bf16.mxu0 %v2865
    %3655 = vmatpush1.bf16.msra.mxu0 %v2864
    %3656 = vmatprep.subr.bf16.mxu0 %v2873
    %3657 = vmatpush1.bf16.msra.mxu0 %v2872
    %3658 = vmatprep.subr.bf16.mxu0 %v2881
    %3659 = vmatpush1.bf16.msra.mxu0 %v2880
    %3660 = vmatprep.subr.bf16.mxu0 %v2889
    %3661 = vmatpush1.bf16.msra.mxu0 %v2888
    %3662 = vmatprep.subr.bf16.mxu0 %v2897
    %3663 = vmatpush1.bf16.msra.mxu0 %v2896
    %3664 = vmatprep.subr.bf16.mxu0 %v2905
    %3665 = vmatpush1.bf16.msra.mxu0 %v2904
    %3666 = vmatprep.mubr.bf16.mxu0 %v435
    %3667 = vmatmul.mubr.bf16.gmra.mrb[0].mxu0 %v434
    %v3668 = vpop.f32.mrb[0].mxu0
    %v3669 = vadd.f32 %v3628, %v3668
    %v3670 = vpop.f32.mrb[0].mxu0
    %v3671 = vadd.f32 %v3630, %v3670
    %v3672 = vpop.f32.mrb[0].mxu0
    %v3673 = vpop.f32.mrb[0].mxu0
    %3674 = vdwg.mxu0
    %3675 = vmatprep.subr.bf16.mxu0 %v2913
    %3676 = vmatpush1.bf16.msra.mxu0 %v2912
    %3677 = vmatprep.subr.bf16.mxu0 %v2921
    %3678 = vmatpush1.bf16.msra.mxu0 %v2920
    %3679 = vmatprep.subr.bf16.mxu0 %v2929
    %3680 = vmatpush1.bf16.msra.mxu0 %v2928
    %3681 = vmatprep.subr.bf16.mxu0 %v2937
    %3682 = vmatpush1.bf16.msra.mxu0 %v2936
    %3683 = vmatprep.subr.bf16.mxu0 %v2945
    %3684 = vmatpush1.bf16.msra.mxu0 %v2944
    %3685 = vmatprep.subr.bf16.mxu0 %v2953
    %3686 = vmatpush1.bf16.msra.mxu0 %v2952
    %3687 = vmatprep.subr.bf16.mxu0 %v2961
    %3688 = vmatpush1.bf16.msra.mxu0 %v2960
    %3689 = vmatprep.subr.bf16.mxu0 %v2969
    %3690 = vmatpush1.bf16.msra.mxu0 %v2968
    %3691 = vmatprep.subr.bf16.mxu0 %v2977
    %3692 = vmatpush1.bf16.msra.mxu0 %v2976
    %3693 = vmatprep.subr.bf16.mxu0 %v2985
    %3694 = vmatpush1.bf16.msra.mxu0 %v2984
    %3695 = vmatprep.subr.bf16.mxu0 %v2993
    %3696 = vmatpush1.bf16.msra.mxu0 %v2992
    %3697 = vmatprep.subr.bf16.mxu0 %v3001
    %3698 = vmatpush1.bf16.msra.mxu0 %v3000
    %3699 = vmatprep.subr.bf16.mxu0 %v3009
    %3700 = vmatpush1.bf16.msra.mxu0 %v3008
    %3701 = vmatprep.subr.bf16.mxu0 %v3017
    %3702 = vmatpush1.bf16.msra.mxu0 %v3016
    %3703 = vmatprep.subr.bf16.mxu0 %v3025
    %3704 = vmatpush1.bf16.msra.mxu0 %v3024
    %3705 = vmatprep.subr.bf16.mxu0 %v3033
    %3706 = vmatpush1.bf16.msra.mxu0 %v3032
    %3707 = vmatprep.mubr.bf16.mxu0 %v437
    %3708 = vmatmul.mubr.bf16.gmra.mrb[0].mxu0 %v436
    %v3709 = vpop.f32.mrb[0].mxu0
    %v3710 = vadd.f32 %v3669, %v3709
    %v3711 = vpop.f32.mrb[0].mxu0
    %v3712 = vadd.f32 %v3671, %v3711
    %v3713 = vpop.f32.mrb[0].mxu0
    %v3714 = vpop.f32.mrb[0].mxu0
    %3715 = vdwg.mxu0
    %3716 = vmatprep.subr.bf16.mxu0 %v2531
    %3717 = vmatpush1.bf16.msra.mxu0 %v2530
    %3718 = vmatprep.subr.bf16.mxu0 %v2539
    %3719 = vmatpush1.bf16.msra.mxu0 %v2538
    %3720 = vmatprep.subr.bf16.mxu0 %v2547
    %3721 = vmatpush1.bf16.msra.mxu0 %v2546
    %3722 = vmatprep.subr.bf16.mxu0 %v2555
    %3723 = vmatpush1.bf16.msra.mxu0 %v2554
    %3724 = vmatprep.subr.bf16.mxu0 %v2563
    %3725 = vmatpush1.bf16.msra.mxu0 %v2562
    %3726 = vmatprep.subr.bf16.mxu0 %v2571
    %3727 = vmatpush1.bf16.msra.mxu0 %v2570
    %3728 = vmatprep.subr.bf16.mxu0 %v2579
    %3729 = vmatpush1.bf16.msra.mxu0 %v2578
    %3730 = vmatprep.subr.bf16.mxu0 %v2587
    %3731 = vmatpush1.bf16.msra.mxu0 %v2586
    %3732 = vmatprep.subr.bf16.mxu0 %v2595
    %3733 = vmatpush1.bf16.msra.mxu0 %v2594
    %3734 = vmatprep.subr.bf16.mxu0 %v2603
    %3735 = vmatpush1.bf16.msra.mxu0 %v2602
    %3736 = vmatprep.subr.bf16.mxu0 %v2611
    %3737 = vmatpush1.bf16.msra.mxu0 %v2610
    %3738 = vmatprep.subr.bf16.mxu0 %v2619
    %3739 = vmatpush1.bf16.msra.mxu0 %v2618
    %3740 = vmatprep.subr.bf16.mxu0 %v2627
    %3741 = vmatpush1.bf16.msra.mxu0 %v2626
    %3742 = vmatprep.subr.bf16.mxu0 %v2635
    %3743 = vmatpush1.bf16.msra.mxu0 %v2634
    %3744 = vmatprep.subr.bf16.mxu0 %v2643
    %3745 = vmatpush1.bf16.msra.mxu0 %v2642
    %3746 = vmatprep.subr.bf16.mxu0 %v2651
    %3747 = vmatpush1.bf16.msra.mxu0 %v2650
    %3748 = vmatprep.mubr.bf16.mxu0 %v431
    %3749 = vmatmul.mubr.bf16.gmra.mrb[0].mxu0 %v430
    %v3750 = vpop.f32.mrb[0].mxu0
    %v3751 = vadd.f32 %v963, %v3750
    %v3752 = vpop.f32.mrb[0].mxu0
    %v3753 = vadd.f32 %v967, %v3752
    %v3754 = vpop.f32.mrb[0].mxu0
    %v3755 = vpop.f32.mrb[0].mxu0
    %3756 = vdwg.mxu0
    %3757 = vmatprep.subr.bf16.mxu0 %v2659
    %3758 = vmatpush1.bf16.msra.mxu0 %v2658
    %3759 = vmatprep.subr.bf16.mxu0 %v2667
    %3760 = vmatpush1.bf16.msra.mxu0 %v2666
    %3761 = vmatprep.subr.bf16.mxu0 %v2675
    %3762 = vmatpush1.bf16.msra.mxu0 %v2674
    %3763 = vmatprep.subr.bf16.mxu0 %v2683
    %3764 = vmatpush1.bf16.msra.mxu0 %v2682
    %3765 = vmatprep.subr.bf16.mxu0 %v2691
    %3766 = vmatpush1.bf16.msra.mxu0 %v2690
    %3767 = vmatprep.subr.bf16.mxu0 %v2699
    %3768 = vmatpush1.bf16.msra.mxu0 %v2698
    %3769 = vmatprep.subr.bf16.mxu0 %v2707
    %3770 = vmatpush1.bf16.msra.mxu0 %v2706
    %3771 = vmatprep.subr.bf16.mxu0 %v2715
    %3772 = vmatpush1.bf16.msra.mxu0 %v2714
    %3773 = vmatprep.subr.bf16.mxu0 %v2723
    %3774 = vmatpush1.bf16.msra.mxu0 %v2722
    %3775 = vmatprep.subr.bf16.mxu0 %v2731
    %3776 = vmatpush1.bf16.msra.mxu0 %v2730
    %3777 = vmatprep.subr.bf16.mxu0 %v2739
    %3778 = vmatpush1.bf16.msra.mxu0 %v2738
    %3779 = vmatprep.subr.bf16.mxu0 %v2747
    %3780 = vmatpush1.bf16.msra.mxu0 %v2746
    %3781 = vmatprep.subr.bf16.mxu0 %v2755
    %3782 = vmatpush1.bf16.msra.mxu0 %v2754
    %3783 = vmatprep.subr.bf16.mxu0 %v2763
    %3784 = vmatpush1.bf16.msra.mxu0 %v2762
    %3785 = vmatprep.subr.bf16.mxu0 %v2771
    %3786 = vmatpush1.bf16.msra.mxu0 %v2770
    %3787 = vmatprep.subr.bf16.mxu0 %v2779
    %3788 = vmatpush1.bf16.msra.mxu0 %v2778
    %3789 = vmatprep.mubr.bf16.mxu0 %v433
    %3790 = vmatmul.mubr.bf16.gmra.mrb[0].mxu0 %v432
    %v3791 = vpop.f32.mrb[0].mxu0
    %v3792 = vadd.f32 %v3751, %v3791
    %v3793 = vpop.f32.mrb[0].mxu0
    %v3794 = vadd.f32 %v3753, %v3793
    %v3795 = vpop.f32.mrb[0].mxu0
    %v3796 = vpop.f32.mrb[0].mxu0
    %3797 = vdwg.mxu0
    %3798 = vmatprep.subr.bf16.mxu0 %v2787
    %3799 = vmatpush1.bf16.msra.mxu0 %v2786
    %3800 = vmatprep.subr.bf16.mxu0 %v2795
    %3801 = vmatpush1.bf16.msra.mxu0 %v2794
    %3802 = vmatprep.subr.bf16.mxu0 %v2803
    %3803 = vmatpush1.bf16.msra.mxu0 %v2802
    %3804 = vmatprep.subr.bf16.mxu0 %v2811
    %3805 = vmatpush1.bf16.msra.mxu0 %v2810
    %3806 = vmatprep.subr.bf16.mxu0 %v2819
    %3807 = vmatpush1.bf16.msra.mxu0 %v2818
    %3808 = vmatprep.subr.bf16.mxu0 %v2827
    %3809 = vmatpush1.bf16.msra.mxu0 %v2826
    %3810 = vmatprep.subr.bf16.mxu0 %v2835
    %3811 = vmatpush1.bf16.msra.mxu0 %v2834
    %3812 = vmatprep.subr.bf16.mxu0 %v2843
    %3813 = vmatpush1.bf16.msra.mxu0 %v2842
    %3814 = vmatprep.subr.bf16.mxu0 %v2851
    %3815 = vmatpush1.bf16.msra.mxu0 %v2850
    %3816 = vmatprep.subr.bf16.mxu0 %v2859
    %3817 = vmatpush1.bf16.msra.mxu0 %v2858
    %3818 = vmatprep.subr.bf16.mxu0 %v2867
    %3819 = vmatpush1.bf16.msra.mxu0 %v2866
    %3820 = vmatprep.subr.bf16.mxu0 %v2875
    %3821 = vmatpush1.bf16.msra.mxu0 %v2874
    %3822 = vmatprep.subr.bf16.mxu0 %v2883
    %3823 = vmatpush1.bf16.msra.mxu0 %v2882
    %3824 = vmatprep.subr.bf16.mxu0 %v2891
    %3825 = vmatpush1.bf16.msra.mxu0 %v2890
    %3826 = vmatprep.subr.bf16.mxu0 %v2899
    %3827 = vmatpush1.bf16.msra.mxu0 %v2898
    %3828 = vmatprep.subr.bf16.mxu0 %v2907
    %3829 = vmatpush1.bf16.msra.mxu0 %v2906
    %3830 = vmatprep.mubr.bf16.mxu0 %v435
    %3831 = vmatmul.mubr.bf16.gmra.mrb[0].mxu0 %v434
    %v3832 = vpop.f32.mrb[0].mxu0
    %v3833 = vadd.f32 %v3792, %v3832
    %v3834 = vpop.f32.mrb[0].mxu0
    %v3835 = vadd.f32 %v3794, %v3834
    %v3836 = vpop.f32.mrb[0].mxu0
    %v3837 = vpop.f32.mrb[0].mxu0
    %3838 = vdwg.mxu0
    %3839 = vmatprep.subr.bf16.mxu0 %v2915
    %3840 = vmatpush1.bf16.msra.mxu0 %v2914
    %3841 = vmatprep.subr.bf16.mxu0 %v2923
    %3842 = vmatpush1.bf16.msra.mxu0 %v2922
    %3843 = vmatprep.subr.bf16.mxu0 %v2931
    %3844 = vmatpush1.bf16.msra.mxu0 %v2930
    %3845 = vmatprep.subr.bf16.mxu0 %v2939
    %3846 = vmatpush1.bf16.msra.mxu0 %v2938
    %3847 = vmatprep.subr.bf16.mxu0 %v2947
    %3848 = vmatpush1.bf16.msra.mxu0 %v2946
    %3849 = vmatprep.subr.bf16.mxu0 %v2955
    %3850 = vmatpush1.bf16.msra.mxu0 %v2954
    %3851 = vmatprep.subr.bf16.mxu0 %v2963
    %3852 = vmatpush1.bf16.msra.mxu0 %v2962
    %3853 = vmatprep.subr.bf16.mxu0 %v2971
    %3854 = vmatpush1.bf16.msra.mxu0 %v2970
    %3855 = vmatprep.subr.bf16.mxu0 %v2979
    %3856 = vmatpush1.bf16.msra.mxu0 %v2978
    %3857 = vmatprep.subr.bf16.mxu0 %v2987
    %3858 = vmatpush1.bf16.msra.mxu0 %v2986
    %3859 = vmatprep.subr.bf16.mxu0 %v2995
    %3860 = vmatpush1.bf16.msra.mxu0 %v2994
    %3861 = vmatprep.subr.bf16.mxu0 %v3003
    %3862 = vmatpush1.bf16.msra.mxu0 %v3002
    %3863 = vmatprep.subr.bf16.mxu0 %v3011
    %3864 = vmatpush1.bf16.msra.mxu0 %v3010
    %3865 = vmatprep.subr.bf16.mxu0 %v3019
    %3866 = vmatpush1.bf16.msra.mxu0 %v3018
    %3867 = vmatprep.subr.bf16.mxu0 %v3027
    %3868 = vmatpush1.bf16.msra.mxu0 %v3026
    %3869 = vmatprep.subr.bf16.mxu0 %v3035
    %3870 = vmatpush1.bf16.msra.mxu0 %v3034
    %3871 = vmatprep.mubr.bf16.mxu0 %v437
    %3872 = vmatmul.mubr.bf16.gmra.mrb[0].mxu0 %v436
    %v3873 = vpop.f32.mrb[0].mxu0
    %v3874 = vadd.f32 %v3833, %v3873
    %v3875 = vpop.f32.mrb[0].mxu0
    %v3876 = vadd.f32 %v3835, %v3875
    %v3877 = vpop.f32.mrb[0].mxu0
    %v3878 = vpop.f32.mrb[0].mxu0
    %3879 = vdwg.mxu0
    %3880 = vmatprep.subr.bf16.mxu0 %v2533
    %3881 = vmatpush1.bf16.msra.mxu0 %v2532
    %3882 = vmatprep.subr.bf16.mxu0 %v2541
    %3883 = vmatpush1.bf16.msra.mxu0 %v2540
    %3884 = vmatprep.subr.bf16.mxu0 %v2549
    %3885 = vmatpush1.bf16.msra.mxu0 %v2548
    %3886 = vmatprep.subr.bf16.mxu0 %v2557
    %3887 = vmatpush1.bf16.msra.mxu0 %v2556
    %3888 = vmatprep.subr.bf16.mxu0 %v2565
    %3889 = vmatpush1.bf16.msra.mxu0 %v2564
    %3890 = vmatprep.subr.bf16.mxu0 %v2573
    %3891 = vmatpush1.bf16.msra.mxu0 %v2572
    %3892 = vmatprep.subr.bf16.mxu0 %v2581
    %3893 = vmatpush1.bf16.msra.mxu0 %v2580
    %3894 = vmatprep.subr.bf16.mxu0 %v2589
    %3895 = vmatpush1.bf16.msra.mxu0 %v2588
    %3896 = vmatprep.subr.bf16.mxu0 %v2597
    %3897 = vmatpush1.bf16.msra.mxu0 %v2596
    %3898 = vmatprep.subr.bf16.mxu0 %v2605
    %3899 = vmatpush1.bf16.msra.mxu0 %v2604
    %3900 = vmatprep.subr.bf16.mxu0 %v2613
    %3901 = vmatpush1.bf16.msra.mxu0 %v2612
    %3902 = vmatprep.subr.bf16.mxu0 %v2621
    %3903 = vmatpush1.bf16.msra.mxu0 %v2620
    %3904 = vmatprep.subr.bf16.mxu0 %v2629
    %3905 = vmatpush1.bf16.msra.mxu0 %v2628
    %3906 = vmatprep.subr.bf16.mxu0 %v2637
    %3907 = vmatpush1.bf16.msra.mxu0 %v2636
    %3908 = vmatprep.subr.bf16.mxu0 %v2645
    %3909 = vmatpush1.bf16.msra.mxu0 %v2644
    %3910 = vmatprep.subr.bf16.mxu0 %v2653
    %3911 = vmatpush1.bf16.msra.mxu0 %v2652
    %3912 = vmatprep.mubr.bf16.mxu0 %v431
    %3913 = vmatmul.mubr.bf16.gmra.mrb[0].mxu0 %v430
    %v3914 = vpop.f32.mrb[0].mxu0
    %v3915 = vadd.f32 %v971, %v3914
    %v3916 = vpop.f32.mrb[0].mxu0
    %v3917 = vadd.f32 %v975, %v3916
    %v3918 = vpop.f32.mrb[0].mxu0
    %v3919 = vpop.f32.mrb[0].mxu0
    %3920 = vdwg.mxu0
    %3921 = vmatprep.subr.bf16.mxu0 %v2661
    %3922 = vmatpush1.bf16.msra.mxu0 %v2660
    %3923 = vmatprep.subr.bf16.mxu0 %v2669
    %3924 = vmatpush1.bf16.msra.mxu0 %v2668
    %3925 = vmatprep.subr.bf16.mxu0 %v2677
    %3926 = vmatpush1.bf16.msra.mxu0 %v2676
    %3927 = vmatprep.subr.bf16.mxu0 %v2685
    %3928 = vmatpush1.bf16.msra.mxu0 %v2684
    %3929 = vmatprep.subr.bf16.mxu0 %v2693
    %3930 = vmatpush1.bf16.msra.mxu0 %v2692
    %3931 = vmatprep.subr.bf16.mxu0 %v2701
    %3932 = vmatpush1.bf16.msra.mxu0 %v2700
    %3933 = vmatprep.subr.bf16.mxu0 %v2709
    %3934 = vmatpush1.bf16.msra.mxu0 %v2708
    %3935 = vmatprep.subr.bf16.mxu0 %v2717
    %3936 = vmatpush1.bf16.msra.mxu0 %v2716
    %3937 = vmatprep.subr.bf16.mxu0 %v2725
    %3938 = vmatpush1.bf16.msra.mxu0 %v2724
    %3939 = vmatprep.subr.bf16.mxu0 %v2733
    %3940 = vmatpush1.bf16.msra.mxu0 %v2732
    %3941 = vmatprep.subr.bf16.mxu0 %v2741
    %3942 = vmatpush1.bf16.msra.mxu0 %v2740
    %3943 = vmatprep.subr.bf16.mxu0 %v2749
    %3944 = vmatpush1.bf16.msra.mxu0 %v2748
    %3945 = vmatprep.subr.bf16.mxu0 %v2757
    %3946 = vmatpush1.bf16.msra.mxu0 %v2756
    %3947 = vmatprep.subr.bf16.mxu0 %v2765
    %3948 = vmatpush1.bf16.msra.mxu0 %v2764
    %3949 = vmatprep.subr.bf16.mxu0 %v2773
    %3950 = vmatpush1.bf16.msra.mxu0 %v2772
    %3951 = vmatprep.subr.bf16.mxu0 %v2781
    %3952 = vmatpush1.bf16.msra.mxu0 %v2780
    %3953 = vmatprep.mubr.bf16.mxu0 %v433
    %3954 = vmatmul.mubr.bf16.gmra.mrb[0].mxu0 %v432
    %v3955 = vpop.f32.mrb[0].mxu0
    %v3956 = vadd.f32 %v3915, %v3955
    %v3957 = vpop.f32.mrb[0].mxu0
    %v3958 = vadd.f32 %v3917, %v3957
    %v3959 = vpop.f32.mrb[0].mxu0
    %v3960 = vpop.f32.mrb[0].mxu0
    %3961 = vdwg.mxu0
    %3962 = vmatprep.subr.bf16.mxu0 %v2789
    %3963 = vmatpush1.bf16.msra.mxu0 %v2788
    %3964 = vmatprep.subr.bf16.mxu0 %v2797
    %3965 = vmatpush1.bf16.msra.mxu0 %v2796
    %3966 = vmatprep.subr.bf16.mxu0 %v2805
    %3967 = vmatpush1.bf16.msra.mxu0 %v2804
    %3968 = vmatprep.subr.bf16.mxu0 %v2813
    %3969 = vmatpush1.bf16.msra.mxu0 %v2812
    %3970 = vmatprep.subr.bf16.mxu0 %v2821
    %3971 = vmatpush1.bf16.msra.mxu0 %v2820
    %3972 = vmatprep.subr.bf16.mxu0 %v2829
    %3973 = vmatpush1.bf16.msra.mxu0 %v2828
    %3974 = vmatprep.subr.bf16.mxu0 %v2837
    %3975 = vmatpush1.bf16.msra.mxu0 %v2836
    %3976 = vmatprep.subr.bf16.mxu0 %v2845
    %3977 = vmatpush1.bf16.msra.mxu0 %v2844
    %3978 = vmatprep.subr.bf16.mxu0 %v2853
    %3979 = vmatpush1.bf16.msra.mxu0 %v2852
    %3980 = vmatprep.subr.bf16.mxu0 %v2861
    %3981 = vmatpush1.bf16.msra.mxu0 %v2860
    %3982 = vmatprep.subr.bf16.mxu0 %v2869
    %3983 = vmatpush1.bf16.msra.mxu0 %v2868
    %3984 = vmatprep.subr.bf16.mxu0 %v2877
    %3985 = vmatpush1.bf16.msra.mxu0 %v2876
    %3986 = vmatprep.subr.bf16.mxu0 %v2885
    %3987 = vmatpush1.bf16.msra.mxu0 %v2884
    %3988 = vmatprep.subr.bf16.mxu0 %v2893
    %3989 = vmatpush1.bf16.msra.mxu0 %v2892
    %3990 = vmatprep.subr.bf16.mxu0 %v2901
    %3991 = vmatpush1.bf16.msra.mxu0 %v2900
    %3992 = vmatprep.subr.bf16.mxu0 %v2909
    %3993 = vmatpush1.bf16.msra.mxu0 %v2908
    %3994 = vmatprep.mubr.bf16.mxu0 %v435
    %3995 = vmatmul.mubr.bf16.gmra.mrb[0].mxu0 %v434
    %v3996 = vpop.f32.mrb[0].mxu0
    %v3997 = vadd.f32 %v3956, %v3996
    %v3998 = vpop.f32.mrb[0].mxu0
    %v3999 = vadd.f32 %v3958, %v3998
    %v4000 = vpop.f32.mrb[0].mxu0
    %v4001 = vpop.f32.mrb[0].mxu0
    %4002 = vdwg.mxu0
    %4003 = vmatprep.subr.bf16.mxu0 %v2917
    %4004 = vmatpush1.bf16.msra.mxu0 %v2916
    %4005 = vmatprep.subr.bf16.mxu0 %v2925
    %4006 = vmatpush1.bf16.msra.mxu0 %v2924
    %4007 = vmatprep.subr.bf16.mxu0 %v2933
    %4008 = vmatpush1.bf16.msra.mxu0 %v2932
    %4009 = vmatprep.subr.bf16.mxu0 %v2941
    %4010 = vmatpush1.bf16.msra.mxu0 %v2940
    %4011 = vmatprep.subr.bf16.mxu0 %v2949
    %4012 = vmatpush1.bf16.msra.mxu0 %v2948
    %4013 = vmatprep.subr.bf16.mxu0 %v2957
    %4014 = vmatpush1.bf16.msra.mxu0 %v2956
    %4015 = vmatprep.subr.bf16.mxu0 %v2965
    %4016 = vmatpush1.bf16.msra.mxu0 %v2964
    %4017 = vmatprep.subr.bf16.mxu0 %v2973
    %4018 = vmatpush1.bf16.msra.mxu0 %v2972
    %4019 = vmatprep.subr.bf16.mxu0 %v2981
    %4020 = vmatpush1.bf16.msra.mxu0 %v2980
    %4021 = vmatprep.subr.bf16.mxu0 %v2989
    %4022 = vmatpush1.bf16.msra.mxu0 %v2988
    %4023 = vmatprep.subr.bf16.mxu0 %v2997
    %4024 = vmatpush1.bf16.msra.mxu0 %v2996
    %4025 = vmatprep.subr.bf16.mxu0 %v3005
    %4026 = vmatpush1.bf16.msra.mxu0 %v3004
    %4027 = vmatprep.subr.bf16.mxu0 %v3013
    %4028 = vmatpush1.bf16.msra.mxu0 %v3012
    %4029 = vmatprep.subr.bf16.mxu0 %v3021
    %4030 = vmatpush1.bf16.msra.mxu0 %v3020
    %4031 = vmatprep.subr.bf16.mxu0 %v3029
    %4032 = vmatpush1.bf16.msra.mxu0 %v3028
    %4033 = vmatprep.subr.bf16.mxu0 %v3037
    %4034 = vmatpush1.bf16.msra.mxu0 %v3036
    %4035 = vmatprep.mubr.bf16.mxu0 %v437
    %4036 = vmatmul.mubr.bf16.gmra.mrb[0].mxu0 %v436
    %v4037 = vpop.f32.mrb[0].mxu0
    %v4038 = vadd.f32 %v3997, %v4037
    %v4039 = vpop.f32.mrb[0].mxu0
    %v4040 = vadd.f32 %v3999, %v4039
    %v4041 = vpop.f32.mrb[0].mxu0
    %v4042 = vpop.f32.mrb[0].mxu0
    %4043 = vdwg.mxu0
    %4044 = vmatprep.subr.bf16.mxu0 %v2535
    %4045 = vmatpush1.bf16.msra.mxu0 %v2534
    %4046 = vmatprep.subr.bf16.mxu0 %v2543
    %4047 = vmatpush1.bf16.msra.mxu0 %v2542
    %4048 = vmatprep.subr.bf16.mxu0 %v2551
    %4049 = vmatpush1.bf16.msra.mxu0 %v2550
    %4050 = vmatprep.subr.bf16.mxu0 %v2559
    %4051 = vmatpush1.bf16.msra.mxu0 %v2558
    %4052 = vmatprep.subr.bf16.mxu0 %v2567
    %4053 = vmatpush1.bf16.msra.mxu0 %v2566
    %4054 = vmatprep.subr.bf16.mxu0 %v2575
    %4055 = vmatpush1.bf16.msra.mxu0 %v2574
    %4056 = vmatprep.subr.bf16.mxu0 %v2583
    %4057 = vmatpush1.bf16.msra.mxu0 %v2582
    %4058 = vmatprep.subr.bf16.mxu0 %v2591
    %4059 = vmatpush1.bf16.msra.mxu0 %v2590
    %4060 = vmatprep.subr.bf16.mxu0 %v2599
    %4061 = vmatpush1.bf16.msra.mxu0 %v2598
    %4062 = vmatprep.subr.bf16.mxu0 %v2607
    %4063 = vmatpush1.bf16.msra.mxu0 %v2606
    %4064 = vmatprep.subr.bf16.mxu0 %v2615
    %4065 = vmatpush1.bf16.msra.mxu0 %v2614
    %4066 = vmatprep.subr.bf16.mxu0 %v2623
    %4067 = vmatpush1.bf16.msra.mxu0 %v2622
    %4068 = vmatprep.subr.bf16.mxu0 %v2631
    %4069 = vmatpush1.bf16.msra.mxu0 %v2630
    %4070 = vmatprep.subr.bf16.mxu0 %v2639
    %4071 = vmatpush1.bf16.msra.mxu0 %v2638
    %4072 = vmatprep.subr.bf16.mxu0 %v2647
    %4073 = vmatpush1.bf16.msra.mxu0 %v2646
    %4074 = vmatprep.subr.bf16.mxu0 %v2655
    %4075 = vmatpush1.bf16.msra.mxu0 %v2654
    %4076 = vmatprep.mubr.bf16.mxu0 %v431
    %4077 = vmatmul.mubr.bf16.gmra.mrb[0].mxu0 %v430
    %v4078 = vpop.f32.mrb[0].mxu0
    %v4079 = vadd.f32 %v979, %v4078
    %v4080 = vpop.f32.mrb[0].mxu0
    %v4081 = vadd.f32 %v983, %v4080
    %v4082 = vpop.f32.mrb[0].mxu0
    %v4083 = vpop.f32.mrb[0].mxu0
    %4084 = vdwg.mxu0
    %4085 = vmatprep.subr.bf16.mxu0 %v2663
    %4086 = vmatpush1.bf16.msra.mxu0 %v2662
    %4087 = vmatprep.subr.bf16.mxu0 %v2671
    %4088 = vmatpush1.bf16.msra.mxu0 %v2670
    %4089 = vmatprep.subr.bf16.mxu0 %v2679
    %4090 = vmatpush1.bf16.msra.mxu0 %v2678
    %4091 = vmatprep.subr.bf16.mxu0 %v2687
    %4092 = vmatpush1.bf16.msra.mxu0 %v2686
    %4093 = vmatprep.subr.bf16.mxu0 %v2695
    %4094 = vmatpush1.bf16.msra.mxu0 %v2694
    %4095 = vmatprep.subr.bf16.mxu0 %v2703
    %4096 = vmatpush1.bf16.msra.mxu0 %v2702
    %4097 = vmatprep.subr.bf16.mxu0 %v2711
    %4098 = vmatpush1.bf16.msra.mxu0 %v2710
    %4099 = vmatprep.subr.bf16.mxu0 %v2719
    %4100 = vmatpush1.bf16.msra.mxu0 %v2718
    %4101 = vmatprep.subr.bf16.mxu0 %v2727
    %4102 = vmatpush1.bf16.msra.mxu0 %v2726
    %4103 = vmatprep.subr.bf16.mxu0 %v2735
    %4104 = vmatpush1.bf16.msra.mxu0 %v2734
    %4105 = vmatprep.subr.bf16.mxu0 %v2743
    %4106 = vmatpush1.bf16.msra.mxu0 %v2742
    %4107 = vmatprep.subr.bf16.mxu0 %v2751
    %4108 = vmatpush1.bf16.msra.mxu0 %v2750
    %4109 = vmatprep.subr.bf16.mxu0 %v2759
    %4110 = vmatpush1.bf16.msra.mxu0 %v2758
    %4111 = vmatprep.subr.bf16.mxu0 %v2767
    %4112 = vmatpush1.bf16.msra.mxu0 %v2766
    %4113 = vmatprep.subr.bf16.mxu0 %v2775
    %4114 = vmatpush1.bf16.msra.mxu0 %v2774
    %4115 = vmatprep.subr.bf16.mxu0 %v2783
    %4116 = vmatpush1.bf16.msra.mxu0 %v2782
    %4117 = vmatprep.mubr.bf16.mxu0 %v433
    %4118 = vmatmul.mubr.bf16.gmra.mrb[0].mxu0 %v432
    %v4119 = vpop.f32.mrb[0].mxu0
    %v4120 = vadd.f32 %v4079, %v4119
    %v4121 = vpop.f32.mrb[0].mxu0
    %v4122 = vadd.f32 %v4081, %v4121
    %v4123 = vpop.f32.mrb[0].mxu0
    %v4124 = vpop.f32.mrb[0].mxu0
    %4125 = vdwg.mxu0
    %4126 = vmatprep.subr.bf16.mxu0 %v2791
    %4127 = vmatpush1.bf16.msra.mxu0 %v2790
    %4128 = vmatprep.subr.bf16.mxu0 %v2799
    %4129 = vmatpush1.bf16.msra.mxu0 %v2798
    %4130 = vmatprep.subr.bf16.mxu0 %v2807
    %4131 = vmatpush1.bf16.msra.mxu0 %v2806
    %4132 = vmatprep.subr.bf16.mxu0 %v2815
    %4133 = vmatpush1.bf16.msra.mxu0 %v2814
    %4134 = vmatprep.subr.bf16.mxu0 %v2823
    %4135 = vmatpush1.bf16.msra.mxu0 %v2822
    %4136 = vmatprep.subr.bf16.mxu0 %v2831
    %4137 = vmatpush1.bf16.msra.mxu0 %v2830
    %4138 = vmatprep.subr.bf16.mxu0 %v2839
    %4139 = vmatpush1.bf16.msra.mxu0 %v2838
    %4140 = vmatprep.subr.bf16.mxu0 %v2847
    %4141 = vmatpush1.bf16.msra.mxu0 %v2846
    %4142 = vmatprep.subr.bf16.mxu0 %v2855
    %4143 = vmatpush1.bf16.msra.mxu0 %v2854
    %4144 = vmatprep.subr.bf16.mxu0 %v2863
    %4145 = vmatpush1.bf16.msra.mxu0 %v2862
    %4146 = vmatprep.subr.bf16.mxu0 %v2871
    %4147 = vmatpush1.bf16.msra.mxu0 %v2870
    %4148 = vmatprep.subr.bf16.mxu0 %v2879
    %4149 = vmatpush1.bf16.msra.mxu0 %v2878
    %4150 = vmatprep.subr.bf16.mxu0 %v2887
    %4151 = vmatpush1.bf16.msra.mxu0 %v2886
    %4152 = vmatprep.subr.bf16.mxu0 %v2895
    %4153 = vmatpush1.bf16.msra.mxu0 %v2894
    %4154 = vmatprep.subr.bf16.mxu0 %v2903
    %4155 = vmatpush1.bf16.msra.mxu0 %v2902
    %4156 = vmatprep.subr.bf16.mxu0 %v2911
    %4157 = vmatpush1.bf16.msra.mxu0 %v2910
    %4158 = vmatprep.mubr.bf16.mxu0 %v435
    %4159 = vmatmul.mubr.bf16.gmra.mrb[0].mxu0 %v434
    %v4160 = vpop.f32.mrb[0].mxu0
    %v4161 = vadd.f32 %v4120, %v4160
    %v4162 = vpop.f32.mrb[0].mxu0
    %v4163 = vadd.f32 %v4122, %v4162
    %v4164 = vpop.f32.mrb[0].mxu0
    %v4165 = vpop.f32.mrb[0].mxu0
    %4166 = vdwg.mxu0
    %4167 = vmatprep.subr.bf16.mxu0 %v2919
    %4168 = vmatpush1.bf16.msra.mxu0 %v2918
    %4169 = vmatprep.subr.bf16.mxu0 %v2927
    %4170 = vmatpush1.bf16.msra.mxu0 %v2926
    %4171 = vmatprep.subr.bf16.mxu0 %v2935
    %4172 = vmatpush1.bf16.msra.mxu0 %v2934
    %4173 = vmatprep.subr.bf16.mxu0 %v2943
    %4174 = vmatpush1.bf16.msra.mxu0 %v2942
    %4175 = vmatprep.subr.bf16.mxu0 %v2951
    %4176 = vmatpush1.bf16.msra.mxu0 %v2950
    %4177 = vmatprep.subr.bf16.mxu0 %v2959
    %4178 = vmatpush1.bf16.msra.mxu0 %v2958
    %4179 = vmatprep.subr.bf16.mxu0 %v2967
    %4180 = vmatpush1.bf16.msra.mxu0 %v2966
    %4181 = vmatprep.subr.bf16.mxu0 %v2975
    %4182 = vmatpush1.bf16.msra.mxu0 %v2974
    %4183 = vmatprep.subr.bf16.mxu0 %v2983
    %4184 = vmatpush1.bf16.msra.mxu0 %v2982
    %4185 = vmatprep.subr.bf16.mxu0 %v2991
    %4186 = vmatpush1.bf16.msra.mxu0 %v2990
    %4187 = vmatprep.subr.bf16.mxu0 %v2999
    %4188 = vmatpush1.bf16.msra.mxu0 %v2998
    %4189 = vmatprep.subr.bf16.mxu0 %v3007
    %4190 = vmatpush1.bf16.msra.mxu0 %v3006
    %4191 = vmatprep.subr.bf16.mxu0 %v3015
    %4192 = vmatpush1.bf16.msra.mxu0 %v3014
    %4193 = vmatprep.subr.bf16.mxu0 %v3023
    %4194 = vmatpush1.bf16.msra.mxu0 %v3022
    %4195 = vmatprep.subr.bf16.mxu0 %v3031
    %4196 = vmatpush1.bf16.msra.mxu0 %v3030
    %4197 = vmatprep.subr.bf16.mxu0 %v3039
    %4198 = vmatpush1.bf16.msra.mxu0 %v3038
    %4199 = vmatprep.mubr.bf16.mxu0 %v437
    %4200 = vmatmul.mubr.bf16.gmra.mrb[0].mxu0 %v436
    %v4201 = vpop.f32.mrb[0].mxu0
    %v4202 = vadd.f32 %v4161, %v4201
    %v4203 = vpop.f32.mrb[0].mxu0
    %v4204 = vadd.f32 %v4163, %v4203
    %v4205 = vpop.f32.mrb[0].mxu0
    %v4206 = vpop.f32.mrb[0].mxu0
    %4207 = vdwg.mxu0
    %v4208 = vmax.f32 %v3710, 0.0
    %v4209 = vmax.f32 %v3712, 0.0
    %v4210 = vmax.f32 %v3874, 0.0
    %v4211 = vmax.f32 %v3876, 0.0
    %v4212 = vmax.f32 %v4038, 0.0
    %v4213 = vmax.f32 %v4040, 0.0
    %v4214 = vmax.f32 %v4202, 0.0
    %v4215 = vmax.f32 %v4204, 0.0
    %v4216 = vpack.c.bf16 %v4208, %v4208
    %v4217 = vpack.c.bf16 %v4209, %v4209
    %v4218 = vpack.c.bf16 %v4210, %v4210
    %v4219 = vpack.c.bf16 %v4211, %v4211
    %v4220 = vpack.c.bf16 %v4212, %v4212
    %v4221 = vpack.c.bf16 %v4213, %v4213
    %v4222 = vpack.c.bf16 %v4214, %v4214
    %v4223 = vpack.c.bf16 %v4215, %v4215
    %v4224 = vld [vmem:[#allocation11] sm:$0xf]
    %v4225 = vld [vmem:[#allocation11 + $0x4] sm:$0xf]
    %v4226 = vld [vmem:[#allocation11 + $0x8] sm:$0xf]
    %v4227 = vld [vmem:[#allocation11 + $0xc] sm:$0xf]
    %v4228 = vld [vmem:[#allocation11 + $0x10] sm:$0xf]
    %v4229 = vld [vmem:[#allocation11 + $0x14] sm:$0xf]
    %v4230 = vld [vmem:[#allocation11 + $0x18] sm:$0xf]
    %v4231 = vld [vmem:[#allocation11 + $0x1c] sm:$0xf]
    %v4232 = vld [vmem:[#allocation11 + $0x20] sm:$0xf]
    %v4233 = vld [vmem:[#allocation11 + $0x24] sm:$0xf]
    %v4234 = vld [vmem:[#allocation11 + $0x28] sm:$0xf]
    %v4235 = vld [vmem:[#allocation11 + $0x2c] sm:$0xf]
    %v4236 = vld [vmem:[#allocation11 + $0x30] sm:$0xf]
    %v4237 = vld [vmem:[#allocation11 + $0x34] sm:$0xf]
    %v4238 = vld [vmem:[#allocation11 + $0x38] sm:$0xf]
    %v4239 = vld [vmem:[#allocation11 + $0x3c] sm:$0xf]
    %v4240 = vld [vmem:[#allocation11 + $0x40] sm:$0xf]
    %v4241 = vld [vmem:[#allocation11 + $0x44] sm:$0xf]
    %v4242 = vld [vmem:[#allocation11 + $0x48] sm:$0xf]
    %v4243 = vld [vmem:[#allocation11 + $0x4c] sm:$0xf]
    %v4244 = vld [vmem:[#allocation11 + $0x50] sm:$0xf]
    %v4245 = vld [vmem:[#allocation11 + $0x54] sm:$0xf]
    %v4246 = vld [vmem:[#allocation11 + $0x58] sm:$0xf]
    %v4247 = vld [vmem:[#allocation11 + $0x5c] sm:$0xf]
    %v4248 = vld [vmem:[#allocation11 + $0x60] sm:$0xf]
    %v4249 = vld [vmem:[#allocation11 + $0x64] sm:$0xf]
    %v4250 = vld [vmem:[#allocation11 + $0x68] sm:$0xf]
    %v4251 = vld [vmem:[#allocation11 + $0x6c] sm:$0xf]
    %v4252 = vld [vmem:[#allocation11 + $0x70] sm:$0xf]
    %v4253 = vld [vmem:[#allocation11 + $0x74] sm:$0xf]
    %v4254 = vld [vmem:[#allocation11 + $0x78] sm:$0xf]
    %v4255 = vld [vmem:[#allocation11 + $0x7c] sm:$0xf]
    %v4256 = vld [vmem:[#allocation11 + $0x80] sm:$0xf]
    %v4257 = vld [vmem:[#allocation11 + $0x84] sm:$0xf]
    %v4258 = vld [vmem:[#allocation11 + $0x88] sm:$0xf]
    %v4259 = vld [vmem:[#allocation11 + $0x8c] sm:$0xf]
    %v4260 = vld [vmem:[#allocation11 + $0x90] sm:$0xf]
    %v4261 = vld [vmem:[#allocation11 + $0x94] sm:$0xf]
    %v4262 = vld [vmem:[#allocation11 + $0x98] sm:$0xf]
    %v4263 = vld [vmem:[#allocation11 + $0x9c] sm:$0xf]
    %v4264 = vld [vmem:[#allocation11 + $0xa0] sm:$0xf]
    %v4265 = vld [vmem:[#allocation11 + $0xa4] sm:$0xf]
    %v4266 = vld [vmem:[#allocation11 + $0xa8] sm:$0xf]
    %v4267 = vld [vmem:[#allocation11 + $0xac] sm:$0xf]
    %v4268 = vld [vmem:[#allocation11 + $0xb0] sm:$0xf]
    %v4269 = vld [vmem:[#allocation11 + $0xb4] sm:$0xf]
    %v4270 = vld [vmem:[#allocation11 + $0xb8] sm:$0xf]
    %v4271 = vld [vmem:[#allocation11 + $0xbc] sm:$0xf]
    %v4272 = vld [vmem:[#allocation11 + $0xc0] sm:$0xf]
    %v4273 = vld [vmem:[#allocation11 + $0xc4] sm:$0xf]
    %v4274 = vld [vmem:[#allocation11 + $0xc8] sm:$0xf]
    %v4275 = vld [vmem:[#allocation11 + $0xcc] sm:$0xf]
    %v4276 = vld [vmem:[#allocation11 + $0xd0] sm:$0xf]
    %v4277 = vld [vmem:[#allocation11 + $0xd4] sm:$0xf]
    %v4278 = vld [vmem:[#allocation11 + $0xd8] sm:$0xf]
    %v4279 = vld [vmem:[#allocation11 + $0xdc] sm:$0xf]
    %v4280 = vld [vmem:[#allocation11 + $0xe0] sm:$0xf]
    %v4281 = vld [vmem:[#allocation11 + $0xe4] sm:$0xf]
    %v4282 = vld [vmem:[#allocation11 + $0xe8] sm:$0xf]
    %v4283 = vld [vmem:[#allocation11 + $0xec] sm:$0xf]
    %v4284 = vld [vmem:[#allocation11 + $0xf0] sm:$0xf]
    %v4285 = vld [vmem:[#allocation11 + $0xf4] sm:$0xf]
    %v4286 = vld [vmem:[#allocation11 + $0xf8] sm:$0xf]
    %v4287 = vld [vmem:[#allocation11 + $0xfc] sm:$0xf]
    %v4288 = vld [vmem:[#allocation11 + $0x100] sm:$0xf]
    %v4289 = vld [vmem:[#allocation11 + $0x104] sm:$0xf]
    %v4290 = vld [vmem:[#allocation11 + $0x108] sm:$0xf]
    %v4291 = vld [vmem:[#allocation11 + $0x10c] sm:$0xf]
    %v4292 = vld [vmem:[#allocation11 + $0x110] sm:$0xf]
    %v4293 = vld [vmem:[#allocation11 + $0x114] sm:$0xf]
    %v4294 = vld [vmem:[#allocation11 + $0x118] sm:$0xf]
    %v4295 = vld [vmem:[#allocation11 + $0x11c] sm:$0xf]
    %v4296 = vld [vmem:[#allocation11 + $0x120] sm:$0xf]
    %v4297 = vld [vmem:[#allocation11 + $0x124] sm:$0xf]
    %v4298 = vld [vmem:[#allocation11 + $0x128] sm:$0xf]
    %v4299 = vld [vmem:[#allocation11 + $0x12c] sm:$0xf]
    %v4300 = vld [vmem:[#allocation11 + $0x130] sm:$0xf]
    %v4301 = vld [vmem:[#allocation11 + $0x134] sm:$0xf]
    %v4302 = vld [vmem:[#allocation11 + $0x138] sm:$0xf]
    %v4303 = vld [vmem:[#allocation11 + $0x13c] sm:$0xf]
    %v4304 = vld [vmem:[#allocation11 + $0x140] sm:$0xf]
    %v4305 = vld [vmem:[#allocation11 + $0x144] sm:$0xf]
    %v4306 = vld [vmem:[#allocation11 + $0x148] sm:$0xf]
    %v4307 = vld [vmem:[#allocation11 + $0x14c] sm:$0xf]
    %v4308 = vld [vmem:[#allocation11 + $0x150] sm:$0xf]
    %v4309 = vld [vmem:[#allocation11 + $0x154] sm:$0xf]
    %v4310 = vld [vmem:[#allocation11 + $0x158] sm:$0xf]
    %v4311 = vld [vmem:[#allocation11 + $0x15c] sm:$0xf]
    %v4312 = vld [vmem:[#allocation11 + $0x160] sm:$0xf]
    %v4313 = vld [vmem:[#allocation11 + $0x164] sm:$0xf]
    %v4314 = vld [vmem:[#allocation11 + $0x168] sm:$0xf]
    %v4315 = vld [vmem:[#allocation11 + $0x16c] sm:$0xf]
    %v4316 = vld [vmem:[#allocation11 + $0x170] sm:$0xf]
    %v4317 = vld [vmem:[#allocation11 + $0x174] sm:$0xf]
    %v4318 = vld [vmem:[#allocation11 + $0x178] sm:$0xf]
    %v4319 = vld [vmem:[#allocation11 + $0x17c] sm:$0xf]
    %v4320 = vld [vmem:[#allocation11 + $0x180] sm:$0xf]
    %v4321 = vld [vmem:[#allocation11 + $0x184] sm:$0xf]
    %v4322 = vld [vmem:[#allocation11 + $0x188] sm:$0xf]
    %v4323 = vld [vmem:[#allocation11 + $0x18c] sm:$0xf]
    %v4324 = vld [vmem:[#allocation11 + $0x190] sm:$0xf]
    %v4325 = vld [vmem:[#allocation11 + $0x194] sm:$0xf]
    %v4326 = vld [vmem:[#allocation11 + $0x198] sm:$0xf]
    %v4327 = vld [vmem:[#allocation11 + $0x19c] sm:$0xf]
    %v4328 = vld [vmem:[#allocation11 + $0x1a0] sm:$0xf]
    %v4329 = vld [vmem:[#allocation11 + $0x1a4] sm:$0xf]
    %v4330 = vld [vmem:[#allocation11 + $0x1a8] sm:$0xf]
    %v4331 = vld [vmem:[#allocation11 + $0x1ac] sm:$0xf]
    %v4332 = vld [vmem:[#allocation11 + $0x1b0] sm:$0xf]
    %v4333 = vld [vmem:[#allocation11 + $0x1b4] sm:$0xf]
    %v4334 = vld [vmem:[#allocation11 + $0x1b8] sm:$0xf]
    %v4335 = vld [vmem:[#allocation11 + $0x1bc] sm:$0xf]
    %v4336 = vld [vmem:[#allocation11 + $0x1c0] sm:$0xf]
    %v4337 = vld [vmem:[#allocation11 + $0x1c4] sm:$0xf]
    %v4338 = vld [vmem:[#allocation11 + $0x1c8] sm:$0xf]
    %v4339 = vld [vmem:[#allocation11 + $0x1cc] sm:$0xf]
    %v4340 = vld [vmem:[#allocation11 + $0x1d0] sm:$0xf]
    %v4341 = vld [vmem:[#allocation11 + $0x1d4] sm:$0xf]
    %v4342 = vld [vmem:[#allocation11 + $0x1d8] sm:$0xf]
    %v4343 = vld [vmem:[#allocation11 + $0x1dc] sm:$0xf]
    %v4344 = vld [vmem:[#allocation11 + $0x1e0] sm:$0xf]
    %v4345 = vld [vmem:[#allocation11 + $0x1e4] sm:$0xf]
    %v4346 = vld [vmem:[#allocation11 + $0x1e8] sm:$0xf]
    %v4347 = vld [vmem:[#allocation11 + $0x1ec] sm:$0xf]
    %v4348 = vld [vmem:[#allocation11 + $0x1f0] sm:$0xf]
    %v4349 = vld [vmem:[#allocation11 + $0x1f4] sm:$0xf]
    %v4350 = vld [vmem:[#allocation11 + $0x1f8] sm:$0xf]
    %v4351 = vld [vmem:[#allocation11 + $0x1fc] sm:$0xf]
    %v4352 = vld [vmem:[#allocation13] sm:$0x1]
    %v4354 = vlaneseq
    %v4355 = vshrl.u32 %v4354, 7
    %v4356 = vsub.s32 0, %v4355
    %v4357 = vrot.slane %v4352, %v4356
    %v4487 = vunpack.c.l.b16 %v4224
    %v4488 = vunpack.c.l.b16 %v4225
    %v4489 = vunpack.c.l.b16 %v4226
    %v4490 = vunpack.c.l.b16 %v4227
    %v4491 = vunpack.c.l.b16 %v4228
    %v4492 = vunpack.c.l.b16 %v4229
    %v4493 = vunpack.c.l.b16 %v4230
    %v4494 = vunpack.c.l.b16 %v4231
    %v4495 = vunpack.c.l.b16 %v4232
    %v4496 = vunpack.c.l.b16 %v4233
    %v4497 = vunpack.c.l.b16 %v4234
    %v4498 = vunpack.c.l.b16 %v4235
    %v4499 = vunpack.c.l.b16 %v4236
    %v4500 = vunpack.c.l.b16 %v4237
    %v4501 = vunpack.c.l.b16 %v4238
    %v4502 = vunpack.c.l.b16 %v4239
    %v4503 = vunpack.c.l.b16 %v4240
    %v4504 = vunpack.c.l.b16 %v4241
    %v4505 = vunpack.c.l.b16 %v4242
    %v4506 = vunpack.c.l.b16 %v4243
    %v4507 = vunpack.c.l.b16 %v4244
    %v4508 = vunpack.c.l.b16 %v4245
    %v4509 = vunpack.c.l.b16 %v4246
    %v4510 = vunpack.c.l.b16 %v4247
    %v4511 = vunpack.c.l.b16 %v4248
    %v4512 = vunpack.c.l.b16 %v4249
    %v4513 = vunpack.c.l.b16 %v4250
    %v4514 = vunpack.c.l.b16 %v4251
    %v4515 = vunpack.c.l.b16 %v4252
    %v4516 = vunpack.c.l.b16 %v4253
    %v4517 = vunpack.c.l.b16 %v4254
    %v4518 = vunpack.c.l.b16 %v4255
    %v4519 = vunpack.c.l.b16 %v4256
    %v4520 = vunpack.c.l.b16 %v4257
    %v4521 = vunpack.c.l.b16 %v4258
    %v4522 = vunpack.c.l.b16 %v4259
    %v4523 = vunpack.c.l.b16 %v4260
    %v4524 = vunpack.c.l.b16 %v4261
    %v4525 = vunpack.c.l.b16 %v4262
    %v4526 = vunpack.c.l.b16 %v4263
    %v4527 = vunpack.c.l.b16 %v4264
    %v4528 = vunpack.c.l.b16 %v4265
    %v4529 = vunpack.c.l.b16 %v4266
    %v4530 = vunpack.c.l.b16 %v4267
    %v4531 = vunpack.c.l.b16 %v4268
    %v4532 = vunpack.c.l.b16 %v4269
    %v4533 = vunpack.c.l.b16 %v4270
    %v4534 = vunpack.c.l.b16 %v4271
    %v4535 = vunpack.c.l.b16 %v4272
    %v4536 = vunpack.c.l.b16 %v4273
    %v4537 = vunpack.c.l.b16 %v4274
    %v4538 = vunpack.c.l.b16 %v4275
    %v4539 = vunpack.c.l.b16 %v4276
    %v4540 = vunpack.c.l.b16 %v4277
    %v4541 = vunpack.c.l.b16 %v4278
    %v4542 = vunpack.c.l.b16 %v4279
    %v4543 = vunpack.c.l.b16 %v4280
    %v4544 = vunpack.c.l.b16 %v4281
    %v4545 = vunpack.c.l.b16 %v4282
    %v4546 = vunpack.c.l.b16 %v4283
    %v4547 = vunpack.c.l.b16 %v4284
    %v4548 = vunpack.c.l.b16 %v4285
    %v4549 = vunpack.c.l.b16 %v4286
    %v4550 = vunpack.c.l.b16 %v4287
    %v4551 = vunpack.c.l.b16 %v4288
    %v4552 = vunpack.c.l.b16 %v4289
    %v4553 = vunpack.c.l.b16 %v4290
    %v4554 = vunpack.c.l.b16 %v4291
    %v4555 = vunpack.c.l.b16 %v4292
    %v4556 = vunpack.c.l.b16 %v4293
    %v4557 = vunpack.c.l.b16 %v4294
    %v4558 = vunpack.c.l.b16 %v4295
    %v4559 = vunpack.c.l.b16 %v4296
    %v4560 = vunpack.c.l.b16 %v4297
    %v4561 = vunpack.c.l.b16 %v4298
    %v4562 = vunpack.c.l.b16 %v4299
    %v4563 = vunpack.c.l.b16 %v4300
    %v4564 = vunpack.c.l.b16 %v4301
    %v4565 = vunpack.c.l.b16 %v4302
    %v4566 = vunpack.c.l.b16 %v4303
    %v4567 = vunpack.c.l.b16 %v4304
    %v4568 = vunpack.c.l.b16 %v4305
    %v4569 = vunpack.c.l.b16 %v4306
    %v4570 = vunpack.c.l.b16 %v4307
    %v4571 = vunpack.c.l.b16 %v4308
    %v4572 = vunpack.c.l.b16 %v4309
    %v4573 = vunpack.c.l.b16 %v4310
    %v4574 = vunpack.c.l.b16 %v4311
    %v4575 = vunpack.c.l.b16 %v4312
    %v4576 = vunpack.c.l.b16 %v4313
    %v4577 = vunpack.c.l.b16 %v4314
    %v4578 = vunpack.c.l.b16 %v4315
    %v4579 = vunpack.c.l.b16 %v4316
    %v4580 = vunpack.c.l.b16 %v4317
    %v4581 = vunpack.c.l.b16 %v4318
    %v4582 = vunpack.c.l.b16 %v4319
    %v4583 = vunpack.c.l.b16 %v4320
    %v4584 = vunpack.c.l.b16 %v4321
    %v4585 = vunpack.c.l.b16 %v4322
    %v4586 = vunpack.c.l.b16 %v4323
    %v4587 = vunpack.c.l.b16 %v4324
    %v4588 = vunpack.c.l.b16 %v4325
    %v4589 = vunpack.c.l.b16 %v4326
    %v4590 = vunpack.c.l.b16 %v4327
    %v4591 = vunpack.c.l.b16 %v4328
    %v4592 = vunpack.c.l.b16 %v4329
    %v4593 = vunpack.c.l.b16 %v4330
    %v4594 = vunpack.c.l.b16 %v4331
    %v4595 = vunpack.c.l.b16 %v4332
    %v4596 = vunpack.c.l.b16 %v4333
    %v4597 = vunpack.c.l.b16 %v4334
    %v4598 = vunpack.c.l.b16 %v4335
    %v4599 = vunpack.c.l.b16 %v4336
    %v4600 = vunpack.c.l.b16 %v4337
    %v4601 = vunpack.c.l.b16 %v4338
    %v4602 = vunpack.c.l.b16 %v4339
    %v4603 = vunpack.c.l.b16 %v4340
    %v4604 = vunpack.c.l.b16 %v4341
    %v4605 = vunpack.c.l.b16 %v4342
    %v4606 = vunpack.c.l.b16 %v4343
    %v4607 = vunpack.c.l.b16 %v4344
    %v4608 = vunpack.c.l.b16 %v4345
    %v4609 = vunpack.c.l.b16 %v4346
    %v4610 = vunpack.c.l.b16 %v4347
    %v4611 = vunpack.c.l.b16 %v4348
    %v4612 = vunpack.c.l.b16 %v4349
    %v4613 = vunpack.c.l.b16 %v4350
    %v4614 = vunpack.c.l.b16 %v4351
    %v4615 = vpack.c.b16 %v4488, %v4487
    %v4616 = vpack.c.b16 %v4490, %v4489
    %v4617 = vpack.c.b16 %v4492, %v4491
    %v4618 = vpack.c.b16 %v4494, %v4493
    %v4619 = vpack.c.b16 %v4496, %v4495
    %v4620 = vpack.c.b16 %v4498, %v4497
    %v4621 = vpack.c.b16 %v4500, %v4499
    %v4622 = vpack.c.b16 %v4502, %v4501
    %v4623 = vpack.c.b16 %v4504, %v4503
    %v4624 = vpack.c.b16 %v4506, %v4505
    %v4625 = vpack.c.b16 %v4508, %v4507
    %v4626 = vpack.c.b16 %v4510, %v4509
    %v4627 = vpack.c.b16 %v4512, %v4511
    %v4628 = vpack.c.b16 %v4514, %v4513
    %v4629 = vpack.c.b16 %v4516, %v4515
    %v4630 = vpack.c.b16 %v4518, %v4517
    %v4631 = vpack.c.b16 %v4520, %v4519
    %v4632 = vpack.c.b16 %v4522, %v4521
    %v4633 = vpack.c.b16 %v4524, %v4523
    %v4634 = vpack.c.b16 %v4526, %v4525
    %v4635 = vpack.c.b16 %v4528, %v4527
    %v4636 = vpack.c.b16 %v4530, %v4529
    %v4637 = vpack.c.b16 %v4532, %v4531
    %v4638 = vpack.c.b16 %v4534, %v4533
    %v4639 = vpack.c.b16 %v4536, %v4535
    %v4640 = vpack.c.b16 %v4538, %v4537
    %v4641 = vpack.c.b16 %v4540, %v4539
    %v4642 = vpack.c.b16 %v4542, %v4541
    %v4643 = vpack.c.b16 %v4544, %v4543
    %v4644 = vpack.c.b16 %v4546, %v4545
    %v4645 = vpack.c.b16 %v4548, %v4547
    %v4646 = vpack.c.b16 %v4550, %v4549
    %v4647 = vpack.c.b16 %v4552, %v4551
    %v4648 = vpack.c.b16 %v4554, %v4553
    %v4649 = vpack.c.b16 %v4556, %v4555
    %v4650 = vpack.c.b16 %v4558, %v4557
    %v4651 = vpack.c.b16 %v4560, %v4559
    %v4652 = vpack.c.b16 %v4562, %v4561
    %v4653 = vpack.c.b16 %v4564, %v4563
    %v4654 = vpack.c.b16 %v4566, %v4565
    %v4655 = vpack.c.b16 %v4568, %v4567
    %v4656 = vpack.c.b16 %v4570, %v4569
    %v4657 = vpack.c.b16 %v4572, %v4571
    %v4658 = vpack.c.b16 %v4574, %v4573
    %v4659 = vpack.c.b16 %v4576, %v4575
    %v4660 = vpack.c.b16 %v4578, %v4577
    %v4661 = vpack.c.b16 %v4580, %v4579
    %v4662 = vpack.c.b16 %v4582, %v4581
    %v4663 = vpack.c.b16 %v4584, %v4583
    %v4664 = vpack.c.b16 %v4586, %v4585
    %v4665 = vpack.c.b16 %v4588, %v4587
    %v4666 = vpack.c.b16 %v4590, %v4589
    %v4667 = vpack.c.b16 %v4592, %v4591
    %v4668 = vpack.c.b16 %v4594, %v4593
    %v4669 = vpack.c.b16 %v4596, %v4595
    %v4670 = vpack.c.b16 %v4598, %v4597
    %v4671 = vpack.c.b16 %v4600, %v4599
    %v4672 = vpack.c.b16 %v4602, %v4601
    %v4673 = vpack.c.b16 %v4604, %v4603
    %v4674 = vpack.c.b16 %v4606, %v4605
    %v4675 = vpack.c.b16 %v4608, %v4607
    %v4676 = vpack.c.b16 %v4610, %v4609
    %v4677 = vpack.c.b16 %v4612, %v4611
    %v4678 = vpack.c.b16 %v4614, %v4613
    %4743 = vmatprep.subr.bf16.mxu0 0
    %4744 = vmatpush1.bf16.msra.mxu0 %v4615
    %4745 = vmatprep.subr.bf16.mxu0 0
    %4746 = vmatpush1.bf16.msra.mxu0 %v4616
    %4747 = vmatprep.subr.bf16.mxu0 0
    %4748 = vmatpush1.bf16.msra.mxu0 %v4617
    %4749 = vmatprep.subr.bf16.mxu0 0
    %4750 = vmatpush1.bf16.msra.mxu0 %v4618
    %4751 = vmatprep.subr.bf16.mxu0 0
    %4752 = vmatpush1.bf16.msra.mxu0 %v4619
    %4753 = vmatprep.subr.bf16.mxu0 0
    %4754 = vmatpush1.bf16.msra.mxu0 %v4620
    %4755 = vmatprep.subr.bf16.mxu0 0
    %4756 = vmatpush1.bf16.msra.mxu0 %v4621
    %4757 = vmatprep.subr.bf16.mxu0 0
    %4758 = vmatpush1.bf16.msra.mxu0 %v4622
    %4759 = vmatprep.subr.bf16.mxu0 0
    %4760 = vmatpush1.bf16.msra.mxu0 %v4623
    %4761 = vmatprep.subr.bf16.mxu0 0
    %4762 = vmatpush1.bf16.msra.mxu0 %v4624
    %4763 = vmatprep.subr.bf16.mxu0 0
    %4764 = vmatpush1.bf16.msra.mxu0 %v4625
    %4765 = vmatprep.subr.bf16.mxu0 0
    %4766 = vmatpush1.bf16.msra.mxu0 %v4626
    %4767 = vmatprep.subr.bf16.mxu0 0
    %4768 = vmatpush1.bf16.msra.mxu0 %v4627
    %4769 = vmatprep.subr.bf16.mxu0 0
    %4770 = vmatpush1.bf16.msra.mxu0 %v4628
    %4771 = vmatprep.subr.bf16.mxu0 0
    %4772 = vmatpush1.bf16.msra.mxu0 %v4629
    %4773 = vmatprep.subr.bf16.mxu0 0
    %4774 = vmatpush1.bf16.msra.mxu0 %v4630
    %4775 = vmatprep.mubr.bf16.mxu0 %v4217
    %4776 = vmatmul.mubr.bf16.gmra.mrb[0].mxu0 %v4216
    %v4777 = vpop.f32.mrb[0].mxu0
    %v4778 = vadd.f32 %v4357, %v4777
    %v4779 = vpop.f32.mrb[0].mxu0
    %v4780 = vpop.f32.mrb[0].mxu0
    %v4781 = vpop.f32.mrb[0].mxu0
    %4782 = vdwg.mxu0
    %4783 = vmatprep.subr.bf16.mxu0 0
    %4784 = vmatpush1.bf16.msra.mxu0 %v4631
    %4785 = vmatprep.subr.bf16.mxu0 0
    %4786 = vmatpush1.bf16.msra.mxu0 %v4632
    %4787 = vmatprep.subr.bf16.mxu0 0
    %4788 = vmatpush1.bf16.msra.mxu0 %v4633
    %4789 = vmatprep.subr.bf16.mxu0 0
    %4790 = vmatpush1.bf16.msra.mxu0 %v4634
    %4791 = vmatprep.subr.bf16.mxu0 0
    %4792 = vmatpush1.bf16.msra.mxu0 %v4635
    %4793 = vmatprep.subr.bf16.mxu0 0
    %4794 = vmatpush1.bf16.msra.mxu0 %v4636
    %4795 = vmatprep.subr.bf16.mxu0 0
    %4796 = vmatpush1.bf16.msra.mxu0 %v4637
    %4797 = vmatprep.subr.bf16.mxu0 0
    %4798 = vmatpush1.bf16.msra.mxu0 %v4638
    %4799 = vmatprep.subr.bf16.mxu0 0
    %4800 = vmatpush1.bf16.msra.mxu0 %v4639
    %4801 = vmatprep.subr.bf16.mxu0 0
    %4802 = vmatpush1.bf16.msra.mxu0 %v4640
    %4803 = vmatprep.subr.bf16.mxu0 0
    %4804 = vmatpush1.bf16.msra.mxu0 %v4641
    %4805 = vmatprep.subr.bf16.mxu0 0
    %4806 = vmatpush1.bf16.msra.mxu0 %v4642
    %4807 = vmatprep.subr.bf16.mxu0 0
    %4808 = vmatpush1.bf16.msra.mxu0 %v4643
    %4809 = vmatprep.subr.bf16.mxu0 0
    %4810 = vmatpush1.bf16.msra.mxu0 %v4644
    %4811 = vmatprep.subr.bf16.mxu0 0
    %4812 = vmatpush1.bf16.msra.mxu0 %v4645
    %4813 = vmatprep.subr.bf16.mxu0 0
    %4814 = vmatpush1.bf16.msra.mxu0 %v4646
    %4815 = vmatprep.mubr.bf16.mxu0 %v4219
    %4816 = vmatmul.mubr.bf16.gmra.mrb[0].mxu0 %v4218
    %v4817 = vpop.f32.mrb[0].mxu0
    %v4818 = vadd.f32 %v4778, %v4817
    %v4819 = vpop.f32.mrb[0].mxu0
    %v4820 = vpop.f32.mrb[0].mxu0
    %v4821 = vpop.f32.mrb[0].mxu0
    %4822 = vdwg.mxu0
    %4823 = vmatprep.subr.bf16.mxu0 0
    %4824 = vmatpush1.bf16.msra.mxu0 %v4647
    %4825 = vmatprep.subr.bf16.mxu0 0
    %4826 = vmatpush1.bf16.msra.mxu0 %v4648
    %4827 = vmatprep.subr.bf16.mxu0 0
    %4828 = vmatpush1.bf16.msra.mxu0 %v4649
    %4829 = vmatprep.subr.bf16.mxu0 0
    %4830 = vmatpush1.bf16.msra.mxu0 %v4650
    %4831 = vmatprep.subr.bf16.mxu0 0
    %4832 = vmatpush1.bf16.msra.mxu0 %v4651
    %4833 = vmatprep.subr.bf16.mxu0 0
    %4834 = vmatpush1.bf16.msra.mxu0 %v4652
    %4835 = vmatprep.subr.bf16.mxu0 0
    %4836 = vmatpush1.bf16.msra.mxu0 %v4653
    %4837 = vmatprep.subr.bf16.mxu0 0
    %4838 = vmatpush1.bf16.msra.mxu0 %v4654
    %4839 = vmatprep.subr.bf16.mxu0 0
    %4840 = vmatpush1.bf16.msra.mxu0 %v4655
    %4841 = vmatprep.subr.bf16.mxu0 0
    %4842 = vmatpush1.bf16.msra.mxu0 %v4656
    %4843 = vmatprep.subr.bf16.mxu0 0
    %4844 = vmatpush1.bf16.msra.mxu0 %v4657
    %4845 = vmatprep.subr.bf16.mxu0 0
    %4846 = vmatpush1.bf16.msra.mxu0 %v4658
    %4847 = vmatprep.subr.bf16.mxu0 0
    %4848 = vmatpush1.bf16.msra.mxu0 %v4659
    %4849 = vmatprep.subr.bf16.mxu0 0
    %4850 = vmatpush1.bf16.msra.mxu0 %v4660
    %4851 = vmatprep.subr.bf16.mxu0 0
    %4852 = vmatpush1.bf16.msra.mxu0 %v4661
    %4853 = vmatprep.subr.bf16.mxu0 0
    %4854 = vmatpush1.bf16.msra.mxu0 %v4662
    %4855 = vmatprep.mubr.bf16.mxu0 %v4221
    %4856 = vmatmul.mubr.bf16.gmra.mrb[0].mxu0 %v4220
    %v4857 = vpop.f32.mrb[0].mxu0
    %v4858 = vadd.f32 %v4818, %v4857
    %v4859 = vpop.f32.mrb[0].mxu0
    %v4860 = vpop.f32.mrb[0].mxu0
    %v4861 = vpop.f32.mrb[0].mxu0
    %4862 = vdwg.mxu0
    %4863 = vmatprep.subr.bf16.mxu0 0
    %4864 = vmatpush1.bf16.msra.mxu0 %v4663
    %4865 = vmatprep.subr.bf16.mxu0 0
    %4866 = vmatpush1.bf16.msra.mxu0 %v4664
    %4867 = vmatprep.subr.bf16.mxu0 0
    %4868 = vmatpush1.bf16.msra.mxu0 %v4665
    %4869 = vmatprep.subr.bf16.mxu0 0
    %4870 = vmatpush1.bf16.msra.mxu0 %v4666
    %4871 = vmatprep.subr.bf16.mxu0 0
    %4872 = vmatpush1.bf16.msra.mxu0 %v4667
    %4873 = vmatprep.subr.bf16.mxu0 0
    %4874 = vmatpush1.bf16.msra.mxu0 %v4668
    %4875 = vmatprep.subr.bf16.mxu0 0
    %4876 = vmatpush1.bf16.msra.mxu0 %v4669
    %4877 = vmatprep.subr.bf16.mxu0 0
    %4878 = vmatpush1.bf16.msra.mxu0 %v4670
    %4879 = vmatprep.subr.bf16.mxu0 0
    %4880 = vmatpush1.bf16.msra.mxu0 %v4671
    %4881 = vmatprep.subr.bf16.mxu0 0
    %4882 = vmatpush1.bf16.msra.mxu0 %v4672
    %4883 = vmatprep.subr.bf16.mxu0 0
    %4884 = vmatpush1.bf16.msra.mxu0 %v4673
    %4885 = vmatprep.subr.bf16.mxu0 0
    %4886 = vmatpush1.bf16.msra.mxu0 %v4674
    %4887 = vmatprep.subr.bf16.mxu0 0
    %4888 = vmatpush1.bf16.msra.mxu0 %v4675
    %4889 = vmatprep.subr.bf16.mxu0 0
    %4890 = vmatpush1.bf16.msra.mxu0 %v4676
    %4891 = vmatprep.subr.bf16.mxu0 0
    %4892 = vmatpush1.bf16.msra.mxu0 %v4677
    %4893 = vmatprep.subr.bf16.mxu0 0
    %4894 = vmatpush1.bf16.msra.mxu0 %v4678
    %4895 = vmatprep.mubr.bf16.mxu0 %v4223
    %4896 = vmatmul.mubr.bf16.gmra.mrb[0].mxu0 %v4222
    %v4897 = vpop.f32.mrb[0].mxu0
    %v4898 = vadd.f32 %v4858, %v4897
    %v4899 = vpop.f32.mrb[0].mxu0
    %v4900 = vpop.f32.mrb[0].mxu0
    %v4901 = vpop.f32.mrb[0].mxu0
    %4902 = vdwg.mxu0
    %v4903 = vpack.c.bf16 %v4898, %v4898
    %4904 = vst [vmem:[#allocation14] sm:$0xf] %v4903
    // Predicated region
    $region58: #{tpu_custom_call.1} parent=1 // pred_check
      _
    $region59: #{tpu_custom_call.1} parent=1 // pred_check_branch
      %4906 = sbr.rel (0) target = $region61
    $region60: #{tpu_custom_call.1} parent=1 // pred_region
      %s4908 = ssub.s32 64, 64
      %4909 = vsyncadd [#allocation4], %s4908
      %s4911 = sshll.u32 [#allocation14], 4
      %s4912 = int_to_ptr.vmem [resolvable:$true] %s4911
      %4914 = dma.vmem_to_hbm [thread:$0]  %s4912, 64, %s7, [#allocation4]
    $region61: #{tpu_custom_call.1} parent=1 // pred_fallthru
      _
    // Predicated region
    $region62: #{tpu_custom_call.1} parent=1 // pred_check
      _
    $region63: #{tpu_custom_call.1} parent=1 // pred_check_branch
      %4916 = sbr.rel (0) target = $region65
    $region64: #{tpu_custom_call.1} parent=1 // pred_region
      %4917 = dma.done [#allocation4], 64
    $region65: #{tpu_custom_call.1} parent=1 // pred_fallthru
      _
    %4918 = vsyncpa [#allocation3], 1
    %4919 = vsyncpa [#allocation6], 1
    %4920 = vsyncpa [#allocation9], 1
    %4921 = vsyncpa [#allocation12], 1
    %4922 = vsyncpa [#allocation4], 1

</llo_original>
